<compile_context>
chip_gen: v5e
topology: v5e:2x2
jax: 0.10.0
libtpu: 0.0.40
codegen_flags: <defaults>
</compile_context>

<pallas_src>
import jax
import jax.numpy as jnp
from jax.experimental import pallas as pl
from jax.experimental.pallas import tpu as pltpu

SEQ = 8
BATCH = 2
INPUT = 25
HIDDEN = 64
OUTPUT = 1

# Padded dims used inside the kernel (lane-/sublane-aligned).
HP = 128          # hidden padded so each gate is one full 128-lane block
INP = 32          # input feature dim padded to a sublane-friendly size


def lstm_fc_kernel(xf_ref,       # (SEQ*BATCH, INP)        flattened/padded input
                   wih0_ref,     # (INP, 4*HP)             layer-0 input weights (gate-blocked)
                   whh0_ref,     # (HP, 4*HP)              layer-0 recurrent weights
                   b0_ref,       # (1, 4*HP)               layer-0 bias (b_ih + b_hh)
                   w1_ref,       # (2*HP, 4*HP)            layer-1 stacked [W_ih1; W_hh1]
                   b1_ref,       # (1, 4*HP)               layer-1 bias (b_ih + b_hh)
                   fcv_ref,      # (1, HP)                 fc weight row (OUTPUT == 1)
                   fcb_ref,      # (1, OUTPUT)             fc bias
                   out_ref):     # (BATCH, OUTPUT)
    # ---- Hoisted layer-0 input projection for ALL timesteps: one MXU op. ----
    xproj = (jnp.dot(xf_ref[...], wih0_ref[...],
                     preferred_element_type=jnp.float32)
             + b0_ref[...])                              # (SEQ*BATCH, 4*HP)

    whh0 = whh0_ref[...]
    w1 = w1_ref[...]
    b1 = b1_ref[...]

    def gates_to_hc(gates, c):
        # Lane-aligned 128-wide gate blocks -> pure vreg selects.
        i = jax.nn.sigmoid(gates[:, 0 * HP:1 * HP])
        f = jax.nn.sigmoid(gates[:, 1 * HP:2 * HP])
        g = jnp.tanh(gates[:, 2 * HP:3 * HP])
        o = jax.nn.sigmoid(gates[:, 3 * HP:4 * HP])
        c_new = f * c + i * g
        h_new = o * jnp.tanh(c_new)
        # Padded lanes: gates==0 -> i=f=o=0.5, g=0 -> c,h stay exactly 0.
        return h_new, c_new

    zeros = jnp.zeros((BATCH, HP), jnp.float32)
    h0, c0, h1, c1 = zeros, zeros, zeros, zeros

    # Fully static (unrolled) recurrence; state lives in vregs, no VMEM round-trips.
    for t in range(SEQ):
        x_t = xproj[t * BATCH:(t + 1) * BATCH, :]        # (BATCH, 4*HP), static slice
        gates0 = x_t + jnp.dot(h0, whh0,
                               preferred_element_type=jnp.float32)
        h0, c0 = gates_to_hc(gates0, c0)

        # Layer 1: single fused matmul, K = 2*HP = 256.
        inp1 = jnp.concatenate([h0, h1], axis=1)         # (BATCH, 2*HP)
        gates1 = jnp.dot(inp1, w1,
                         preferred_element_type=jnp.float32) + b1
        h1, c1 = gates_to_hc(gates1, c1)

    # fc(lstm_out[-1]) on VPU+XLU (OUTPUT == 1): multiply + lane reduction.
    out_ref[...] = (jnp.sum(h1 * fcv_ref[...], axis=-1, keepdims=True)
                    + fcb_ref[...]).astype(out_ref.dtype)


# -------------------- host-side packing helpers (free vs. kernel) -------------

def _pad_gate_cols(w, in_pad):
    """(in_dim, 4*HIDDEN) -> (in_pad, 4*HP); gate k placed at cols [k*HP, k*HP+HIDDEN)."""
    in_dim = w.shape[0]
    out = jnp.zeros((in_pad, 4 * HP), w.dtype)
    for k in range(4):
        out = out.at[:in_dim, k * HP:k * HP + HIDDEN].set(
            w[:, k * HIDDEN:(k + 1) * HIDDEN])
    return out


def _pad_gate_bias(b):
    out = jnp.zeros((1, 4 * HP), b.dtype)
    for k in range(4):
        out = out.at[:, k * HP:k * HP + HIDDEN].set(
            b[:, k * HIDDEN:(k + 1) * HIDDEN])
    return out


def flu_forecaster(x, params):
    """x: (SEQ, BATCH, INPUT). params: PyTorch-layout (pre-transposed) weights."""
    wih0, whh0, b0, wih1, whh1, b1, fcw, fcb = params

    # Gate-blocked zero padding (HIDDEN->HP, INPUT->INP) and layer-1 weight stack.
    wih0_p = _pad_gate_cols(wih0, INP)                   # (INP, 4*HP)
    whh0_p = _pad_gate_cols(whh0, HP)                    # (HP, 4*HP)
    b0_p = _pad_gate_bias(b0)                            # (1, 4*HP)
    wih1_p = _pad_gate_cols(wih1, HP)                    # (HP, 4*HP)
    whh1_p = _pad_gate_cols(whh1, HP)                    # (HP, 4*HP)
    w1_p = jnp.concatenate([wih1_p, whh1_p], axis=0)     # (2*HP, 4*HP)
    b1_p = _pad_gate_bias(b1)                            # (1, 4*HP)
    fcv = jnp.zeros((1, HP), fcw.dtype).at[0, :HIDDEN].set(fcw[:, 0])  # (1, HP)

    # Flatten time*batch and zero-pad features so the hoisted input projection
    # is a single well-shaped matmul.
    xf = jnp.zeros((SEQ * BATCH, INP), x.dtype)
    xf = xf.at[:, :INPUT].set(x.reshape(SEQ * BATCH, INPUT))

    vmem = pl.BlockSpec(memory_space=pltpu.MemorySpace.VMEM)
    # TODO(synk): if many independent sequences are forecast at once, add a
    # leading grid axis over sequence groups with dimension_semantics=("parallel",)
    # to use both TensorCores on v7x; a single tiny sequence stays grid-less.
    return pl.pallas_call(
        lstm_fc_kernel,
        out_shape=jax.ShapeDtypeStruct((BATCH, OUTPUT), jnp.float32),
        in_specs=[vmem] * 8,
        out_specs=vmem,
    )(xf, wih0_p, whh0_p, b0_p, w1_p, b1_p, fcv, fcb)


# ------------------------------ pure-JAX reference ----------------------------

def reference(x, params):
    """Pure-JAX reference mirroring nn.LSTM(num_layers=2) + nn.Linear."""
    wih0, whh0, b0, wih1, whh1, b1, fcw, fcb = params
    H = HIDDEN

    def run_layer(inp, wih, whh, b):
        B = inp.shape[1]
        h = jnp.zeros((B, H), jnp.float32)
        c = jnp.zeros((B, H), jnp.float32)
        hs = []
        for t in range(inp.shape[0]):
            gates = inp[t] @ wih + h @ whh + b
            i = jax.nn.sigmoid(gates[:, 0 * H:1 * H])
            f = jax.nn.sigmoid(gates[:, 1 * H:2 * H])
            g = jnp.tanh(gates[:, 2 * H:3 * H])
            o = jax.nn.sigmoid(gates[:, 3 * H:4 * H])
            c = f * c + i * g
            h = o * jnp.tanh(c)
            hs.append(h)
        return jnp.stack(hs)

    h0_seq = run_layer(x, wih0, whh0, b0)
    h1_seq = run_layer(h0_seq, wih1, whh1, b1)
    return h1_seq[-1] @ fcw + fcb


def init_params(key):
    """Deterministic init, PyTorch-style U(-1/sqrt(H), 1/sqrt(H))."""
    k = 1.0 / jnp.sqrt(jnp.float32(HIDDEN))
    ks = jax.random.split(key, 14)

    def u(kk, shape):
        return jax.random.uniform(kk, shape, jnp.float32, minval=-k, maxval=k)

    # Layer 0: weight_ih (4H, INPUT), weight_hh (4H, H), biases (4H,)
    wih0 = u(ks[0], (4 * HIDDEN, INPUT)).T            # -> (INPUT, 4H)
    whh0 = u(ks[1], (4 * HIDDEN, HIDDEN)).T           # -> (H, 4H)
    b0 = (u(ks[2], (4 * HIDDEN,)) + u(ks[3], (4 * HIDDEN,))).reshape(1, -1)
    # Layer 1: weight_ih (4H, H), weight_hh (4H, H)
    wih1 = u(ks[4], (4 * HIDDEN, HIDDEN)).T           # -> (H, 4H)
    whh1 = u(ks[5], (4 * HIDDEN, HIDDEN)).T           # -> (H, 4H)
    b1 = (u(ks[6], (4 * HIDDEN,)) + u(ks[7], (4 * HIDDEN,))).reshape(1, -1)
    # fc: weight (OUTPUT, H), bias (OUTPUT,)
    fcw = u(ks[8], (OUTPUT, HIDDEN)).T                # -> (H, OUTPUT)
    fcb = u(ks[9], (OUTPUT,)).reshape(1, OUTPUT)
    return (wih0, whh0, b0, wih1, whh1, b1, fcw, fcb)


if __name__ == "__main__":
    key = jax.random.PRNGKey(0)
    pkey, xkey = jax.random.split(key)
    params = init_params(pkey)

    # input: (seq_len, batch, input_size) = (8, 2, 25)
    x = jax.random.normal(xkey, (SEQ, BATCH, INPUT), jnp.float32)

    out = flu_forecaster(x, params)
    out = jax.block_until_ready(out)

    ref = reference(x, params)
    assert out.shape == (BATCH, OUTPUT)
    assert jnp.allclose(out, ref, atol=1e-4, rtol=1e-4), (out, ref)

    print("KERNEL_OK")
</pallas_src>

<mosaic_0001>
module attributes {stable_mosaic.version = 11 : i64} {
  func.func @lstm_fc_kernel(%arg0: memref<16x32xf32, #tpu.memory_space<vmem>>, %arg1: memref<32x512xf32, #tpu.memory_space<vmem>>, %arg2: memref<128x512xf32, #tpu.memory_space<vmem>>, %arg3: memref<1x512xf32, #tpu.memory_space<vmem>>, %arg4: memref<256x512xf32, #tpu.memory_space<vmem>>, %arg5: memref<1x512xf32, #tpu.memory_space<vmem>>, %arg6: memref<1x128xf32, #tpu.memory_space<vmem>>, %arg7: memref<1x1xf32, #tpu.memory_space<vmem>>, %arg8: memref<2x1xf32, #tpu.memory_space<vmem>>) attributes {dimension_semantics = [], scalar_prefetch = 0 : i64, scratch_operands = 0 : i64, tpu.core_type = #tpu.core_type<tc>} {
    %c0 = arith.constant 0 : index
    %c0_0 = arith.constant 0 : index
    %0 = vector.load %arg0[%c0, %c0_0] : memref<16x32xf32, #tpu.memory_space<vmem>>, vector<16x32xf32>
    %c0_1 = arith.constant 0 : index
    %c0_2 = arith.constant 0 : index
    %1 = vector.load %arg1[%c0_1, %c0_2] : memref<32x512xf32, #tpu.memory_space<vmem>>, vector<32x512xf32>
    %cst = arith.constant dense<0.000000e+00> : vector<16x512xf32>
    %2 = tpu.matmul %0, %1, %cst {dimension_numbers = #tpu.dot_dimension_numbers<[1], [0], [0], [1], [0, 0, 1, 1], [], []>} : vector<16x32xf32>, vector<32x512xf32>, vector<16x512xf32> -> vector<16x512xf32>
    %c0_3 = arith.constant 0 : index
    %c0_4 = arith.constant 0 : index
    %3 = vector.load %arg3[%c0_3, %c0_4] : memref<1x512xf32, #tpu.memory_space<vmem>>, vector<1x512xf32>
    %4 = vector.broadcast %3 : vector<1x512xf32> to vector<16x512xf32>
    %5 = arith.addf %2, %4 : vector<16x512xf32>
    %c0_5 = arith.constant 0 : index
    %c0_6 = arith.constant 0 : index
    %6 = vector.load %arg2[%c0_5, %c0_6] : memref<128x512xf32, #tpu.memory_space<vmem>>, vector<128x512xf32>
    %c0_7 = arith.constant 0 : index
    %c0_8 = arith.constant 0 : index
    %7 = vector.load %arg4[%c0_7, %c0_8] : memref<256x512xf32, #tpu.memory_space<vmem>>, vector<256x512xf32>
    %c0_9 = arith.constant 0 : index
    %c0_10 = arith.constant 0 : index
    %8 = vector.load %arg5[%c0_9, %c0_10] : memref<1x512xf32, #tpu.memory_space<vmem>>, vector<1x512xf32>
    %cst_11 = arith.constant 0.000000e+00 : f32
    %9 = vector.broadcast %cst_11 : f32 to vector<2x128xf32>
    %10 = vector.extract_strided_slice %5 {offsets = [0, 0], sizes = [2, 512], strides = [1, 1]} : vector<16x512xf32> to vector<2x512xf32>
    %cst_12 = arith.constant dense<0.000000e+00> : vector<2x512xf32>
    %11 = tpu.matmul %9, %6, %cst_12 {dimension_numbers = #tpu.dot_dimension_numbers<[1], [0], [0], [1], [0, 0, 1, 1], [], []>} : vector<2x128xf32>, vector<128x512xf32>, vector<2x512xf32> -> vector<2x512xf32>
    %12 = arith.addf %10, %11 : vector<2x512xf32>
    %13 = vector.extract_strided_slice %12 {offsets = [0, 0], sizes = [2, 128], strides = [1, 1]} : vector<2x512xf32> to vector<2x128xf32>
    %14 = arith.negf %13 : vector<2x128xf32>
    %15 = math.exp %14 : vector<2x128xf32>
    %cst_13 = arith.constant 1.000000e+00 : f32
    %16 = vector.broadcast %cst_13 : f32 to vector<2x128xf32>
    %17 = arith.addf %16, %15 : vector<2x128xf32>
    %18 = arith.divf %16, %17 : vector<2x128xf32>
    %19 = vector.extract_strided_slice %12 {offsets = [0, 128], sizes = [2, 128], strides = [1, 1]} : vector<2x512xf32> to vector<2x128xf32>
    %20 = arith.negf %19 : vector<2x128xf32>
    %21 = math.exp %20 : vector<2x128xf32>
    %cst_14 = arith.constant 1.000000e+00 : f32
    %22 = vector.broadcast %cst_14 : f32 to vector<2x128xf32>
    %23 = arith.addf %22, %21 : vector<2x128xf32>
    %24 = arith.divf %22, %23 : vector<2x128xf32>
    %25 = vector.extract_strided_slice %12 {offsets = [0, 256], sizes = [2, 128], strides = [1, 1]} : vector<2x512xf32> to vector<2x128xf32>
    %26 = math.tanh %25 : vector<2x128xf32>
    %27 = vector.extract_strided_slice %12 {offsets = [0, 384], sizes = [2, 128], strides = [1, 1]} : vector<2x512xf32> to vector<2x128xf32>
    %28 = arith.negf %27 : vector<2x128xf32>
    %29 = math.exp %28 : vector<2x128xf32>
    %cst_15 = arith.constant 1.000000e+00 : f32
    %30 = vector.broadcast %cst_15 : f32 to vector<2x128xf32>
    %31 = arith.addf %30, %29 : vector<2x128xf32>
    %32 = arith.divf %30, %31 : vector<2x128xf32>
    %33 = arith.mulf %24, %9 : vector<2x128xf32>
    %34 = arith.mulf %18, %26 : vector<2x128xf32>
    %35 = arith.addf %33, %34 : vector<2x128xf32>
    %36 = math.tanh %35 : vector<2x128xf32>
    %37 = arith.mulf %32, %36 : vector<2x128xf32>
    %38 = tpu.concatenate %37, %9 in 1 : vector<2x128xf32>, vector<2x128xf32> -> vector<2x256xf32>
    %cst_16 = arith.constant dense<0.000000e+00> : vector<2x512xf32>
    %39 = tpu.matmul %38, %7, %cst_16 {dimension_numbers = #tpu.dot_dimension_numbers<[1], [0], [0], [1], [0, 0, 1, 1], [], []>} : vector<2x256xf32>, vector<256x512xf32>, vector<2x512xf32> -> vector<2x512xf32>
    %40 = vector.broadcast %8 : vector<1x512xf32> to vector<2x512xf32>
    %41 = arith.addf %39, %40 : vector<2x512xf32>
    %42 = vector.extract_strided_slice %41 {offsets = [0, 0], sizes = [2, 128], strides = [1, 1]} : vector<2x512xf32> to vector<2x128xf32>
    %43 = arith.negf %42 : vector<2x128xf32>
    %44 = math.exp %43 : vector<2x128xf32>
    %cst_17 = arith.constant 1.000000e+00 : f32
    %45 = vector.broadcast %cst_17 : f32 to vector<2x128xf32>
    %46 = arith.addf %45, %44 : vector<2x128xf32>
    %47 = arith.divf %45, %46 : vector<2x128xf32>
    %48 = vector.extract_strided_slice %41 {offsets = [0, 128], sizes = [2, 128], strides = [1, 1]} : vector<2x512xf32> to vector<2x128xf32>
    %49 = arith.negf %48 : vector<2x128xf32>
    %50 = math.exp %49 : vector<2x128xf32>
    %cst_18 = arith.constant 1.000000e+00 : f32
    %51 = vector.broadcast %cst_18 : f32 to vector<2x128xf32>
    %52 = arith.addf %51, %50 : vector<2x128xf32>
    %53 = arith.divf %51, %52 : vector<2x128xf32>
    %54 = vector.extract_strided_slice %41 {offsets = [0, 256], sizes = [2, 128], strides = [1, 1]} : vector<2x512xf32> to vector<2x128xf32>
    %55 = math.tanh %54 : vector<2x128xf32>
    %56 = vector.extract_strided_slice %41 {offsets = [0, 384], sizes = [2, 128], strides = [1, 1]} : vector<2x512xf32> to vector<2x128xf32>
    %57 = arith.negf %56 : vector<2x128xf32>
    %58 = math.exp %57 : vector<2x128xf32>
    %cst_19 = arith.constant 1.000000e+00 : f32
    %59 = vector.broadcast %cst_19 : f32 to vector<2x128xf32>
    %60 = arith.addf %59, %58 : vector<2x128xf32>
    %61 = arith.divf %59, %60 : vector<2x128xf32>
    %62 = arith.mulf %53, %9 : vector<2x128xf32>
    %63 = arith.mulf %47, %55 : vector<2x128xf32>
    %64 = arith.addf %62, %63 : vector<2x128xf32>
    %65 = math.tanh %64 : vector<2x128xf32>
    %66 = arith.mulf %61, %65 : vector<2x128xf32>
    %67 = vector.extract_strided_slice %5 {offsets = [2, 0], sizes = [2, 512], strides = [1, 1]} : vector<16x512xf32> to vector<2x512xf32>
    %cst_20 = arith.constant dense<0.000000e+00> : vector<2x512xf32>
    %68 = tpu.matmul %37, %6, %cst_20 {dimension_numbers = #tpu.dot_dimension_numbers<[1], [0], [0], [1], [0, 0, 1, 1], [], []>} : vector<2x128xf32>, vector<128x512xf32>, vector<2x512xf32> -> vector<2x512xf32>
    %69 = arith.addf %67, %68 : vector<2x512xf32>
    %70 = vector.extract_strided_slice %69 {offsets = [0, 0], sizes = [2, 128], strides = [1, 1]} : vector<2x512xf32> to vector<2x128xf32>
    %71 = arith.negf %70 : vector<2x128xf32>
    %72 = math.exp %71 : vector<2x128xf32>
    %cst_21 = arith.constant 1.000000e+00 : f32
    %73 = vector.broadcast %cst_21 : f32 to vector<2x128xf32>
    %74 = arith.addf %73, %72 : vector<2x128xf32>
    %75 = arith.divf %73, %74 : vector<2x128xf32>
    %76 = vector.extract_strided_slice %69 {offsets = [0, 128], sizes = [2, 128], strides = [1, 1]} : vector<2x512xf32> to vector<2x128xf32>
    %77 = arith.negf %76 : vector<2x128xf32>
    %78 = math.exp %77 : vector<2x128xf32>
    %cst_22 = arith.constant 1.000000e+00 : f32
    %79 = vector.broadcast %cst_22 : f32 to vector<2x128xf32>
    %80 = arith.addf %79, %78 : vector<2x128xf32>
    %81 = arith.divf %79, %80 : vector<2x128xf32>
    %82 = vector.extract_strided_slice %69 {offsets = [0, 256], sizes = [2, 128], strides = [1, 1]} : vector<2x512xf32> to vector<2x128xf32>
    %83 = math.tanh %82 : vector<2x128xf32>
    %84 = vector.extract_strided_slice %69 {offsets = [0, 384], sizes = [2, 128], strides = [1, 1]} : vector<2x512xf32> to vector<2x128xf32>
    %85 = arith.negf %84 : vector<2x128xf32>
    %86 = math.exp %85 : vector<2x128xf32>
    %cst_23 = arith.constant 1.000000e+00 : f32
    %87 = vector.broadcast %cst_23 : f32 to vector<2x128xf32>
    %88 = arith.addf %87, %86 : vector<2x128xf32>
    %89 = arith.divf %87, %88 : vector<2x128xf32>
    %90 = arith.mulf %81, %35 : vector<2x128xf32>
    %91 = arith.mulf %75, %83 : vector<2x128xf32>
    %92 = arith.addf %90, %91 : vector<2x128xf32>
    %93 = math.tanh %92 : vector<2x128xf32>
    %94 = arith.mulf %89, %93 : vector<2x128xf32>
    %95 = tpu.concatenate %94, %66 in 1 : vector<2x128xf32>, vector<2x128xf32> -> vector<2x256xf32>
    %cst_24 = arith.constant dense<0.000000e+00> : vector<2x512xf32>
    %96 = tpu.matmul %95, %7, %cst_24 {dimension_numbers = #tpu.dot_dimension_numbers<[1], [0], [0], [1], [0, 0, 1, 1], [], []>} : vector<2x256xf32>, vector<256x512xf32>, vector<2x512xf32> -> vector<2x512xf32>
    %97 = vector.broadcast %8 : vector<1x512xf32> to vector<2x512xf32>
    %98 = arith.addf %96, %97 : vector<2x512xf32>
    %99 = vector.extract_strided_slice %98 {offsets = [0, 0], sizes = [2, 128], strides = [1, 1]} : vector<2x512xf32> to vector<2x128xf32>
    %100 = arith.negf %99 : vector<2x128xf32>
    %101 = math.exp %100 : vector<2x128xf32>
    %cst_25 = arith.constant 1.000000e+00 : f32
    %102 = vector.broadcast %cst_25 : f32 to vector<2x128xf32>
    %103 = arith.addf %102, %101 : vector<2x128xf32>
    %104 = arith.divf %102, %103 : vector<2x128xf32>
    %105 = vector.extract_strided_slice %98 {offsets = [0, 128], sizes = [2, 128], strides = [1, 1]} : vector<2x512xf32> to vector<2x128xf32>
    %106 = arith.negf %105 : vector<2x128xf32>
    %107 = math.exp %106 : vector<2x128xf32>
    %cst_26 = arith.constant 1.000000e+00 : f32
    %108 = vector.broadcast %cst_26 : f32 to vector<2x128xf32>
    %109 = arith.addf %108, %107 : vector<2x128xf32>
    %110 = arith.divf %108, %109 : vector<2x128xf32>
    %111 = vector.extract_strided_slice %98 {offsets = [0, 256], sizes = [2, 128], strides = [1, 1]} : vector<2x512xf32> to vector<2x128xf32>
    %112 = math.tanh %111 : vector<2x128xf32>
    %113 = vector.extract_strided_slice %98 {offsets = [0, 384], sizes = [2, 128], strides = [1, 1]} : vector<2x512xf32> to vector<2x128xf32>
    %114 = arith.negf %113 : vector<2x128xf32>
    %115 = math.exp %114 : vector<2x128xf32>
    %cst_27 = arith.constant 1.000000e+00 : f32
    %116 = vector.broadcast %cst_27 : f32 to vector<2x128xf32>
    %117 = arith.addf %116, %115 : vector<2x128xf32>
    %118 = arith.divf %116, %117 : vector<2x128xf32>
    %119 = arith.mulf %110, %64 : vector<2x128xf32>
    %120 = arith.mulf %104, %112 : vector<2x128xf32>
    %121 = arith.addf %119, %120 : vector<2x128xf32>
    %122 = math.tanh %121 : vector<2x128xf32>
    %123 = arith.mulf %118, %122 : vector<2x128xf32>
    %124 = vector.extract_strided_slice %5 {offsets = [4, 0], sizes = [2, 512], strides = [1, 1]} : vector<16x512xf32> to vector<2x512xf32>
    %cst_28 = arith.constant dense<0.000000e+00> : vector<2x512xf32>
    %125 = tpu.matmul %94, %6, %cst_28 {dimension_numbers = #tpu.dot_dimension_numbers<[1], [0], [0], [1], [0, 0, 1, 1], [], []>} : vector<2x128xf32>, vector<128x512xf32>, vector<2x512xf32> -> vector<2x512xf32>
    %126 = arith.addf %124, %125 : vector<2x512xf32>
    %127 = vector.extract_strided_slice %126 {offsets = [0, 0], sizes = [2, 128], strides = [1, 1]} : vector<2x512xf32> to vector<2x128xf32>
    %128 = arith.negf %127 : vector<2x128xf32>
    %129 = math.exp %128 : vector<2x128xf32>
    %cst_29 = arith.constant 1.000000e+00 : f32
    %130 = vector.broadcast %cst_29 : f32 to vector<2x128xf32>
    %131 = arith.addf %130, %129 : vector<2x128xf32>
    %132 = arith.divf %130, %131 : vector<2x128xf32>
    %133 = vector.extract_strided_slice %126 {offsets = [0, 128], sizes = [2, 128], strides = [1, 1]} : vector<2x512xf32> to vector<2x128xf32>
    %134 = arith.negf %133 : vector<2x128xf32>
    %135 = math.exp %134 : vector<2x128xf32>
    %cst_30 = arith.constant 1.000000e+00 : f32
    %136 = vector.broadcast %cst_30 : f32 to vector<2x128xf32>
    %137 = arith.addf %136, %135 : vector<2x128xf32>
    %138 = arith.divf %136, %137 : vector<2x128xf32>
    %139 = vector.extract_strided_slice %126 {offsets = [0, 256], sizes = [2, 128], strides = [1, 1]} : vector<2x512xf32> to vector<2x128xf32>
    %140 = math.tanh %139 : vector<2x128xf32>
    %141 = vector.extract_strided_slice %126 {offsets = [0, 384], sizes = [2, 128], strides = [1, 1]} : vector<2x512xf32> to vector<2x128xf32>
    %142 = arith.negf %141 : vector<2x128xf32>
    %143 = math.exp %142 : vector<2x128xf32>
    %cst_31 = arith.constant 1.000000e+00 : f32
    %144 = vector.broadcast %cst_31 : f32 to vector<2x128xf32>
    %145 = arith.addf %144, %143 : vector<2x128xf32>
    %146 = arith.divf %144, %145 : vector<2x128xf32>
    %147 = arith.mulf %138, %92 : vector<2x128xf32>
    %148 = arith.mulf %132, %140 : vector<2x128xf32>
    %149 = arith.addf %147, %148 : vector<2x128xf32>
    %150 = math.tanh %149 : vector<2x128xf32>
    %151 = arith.mulf %146, %150 : vector<2x128xf32>
    %152 = tpu.concatenate %151, %123 in 1 : vector<2x128xf32>, vector<2x128xf32> -> vector<2x256xf32>
    %cst_32 = arith.constant dense<0.000000e+00> : vector<2x512xf32>
    %153 = tpu.matmul %152, %7, %cst_32 {dimension_numbers = #tpu.dot_dimension_numbers<[1], [0], [0], [1], [0, 0, 1, 1], [], []>} : vector<2x256xf32>, vector<256x512xf32>, vector<2x512xf32> -> vector<2x512xf32>
    %154 = vector.broadcast %8 : vector<1x512xf32> to vector<2x512xf32>
    %155 = arith.addf %153, %154 : vector<2x512xf32>
    %156 = vector.extract_strided_slice %155 {offsets = [0, 0], sizes = [2, 128], strides = [1, 1]} : vector<2x512xf32> to vector<2x128xf32>
    %157 = arith.negf %156 : vector<2x128xf32>
    %158 = math.exp %157 : vector<2x128xf32>
    %cst_33 = arith.constant 1.000000e+00 : f32
    %159 = vector.broadcast %cst_33 : f32 to vector<2x128xf32>
    %160 = arith.addf %159, %158 : vector<2x128xf32>
    %161 = arith.divf %159, %160 : vector<2x128xf32>
    %162 = vector.extract_strided_slice %155 {offsets = [0, 128], sizes = [2, 128], strides = [1, 1]} : vector<2x512xf32> to vector<2x128xf32>
    %163 = arith.negf %162 : vector<2x128xf32>
    %164 = math.exp %163 : vector<2x128xf32>
    %cst_34 = arith.constant 1.000000e+00 : f32
    %165 = vector.broadcast %cst_34 : f32 to vector<2x128xf32>
    %166 = arith.addf %165, %164 : vector<2x128xf32>
    %167 = arith.divf %165, %166 : vector<2x128xf32>
    %168 = vector.extract_strided_slice %155 {offsets = [0, 256], sizes = [2, 128], strides = [1, 1]} : vector<2x512xf32> to vector<2x128xf32>
    %169 = math.tanh %168 : vector<2x128xf32>
    %170 = vector.extract_strided_slice %155 {offsets = [0, 384], sizes = [2, 128], strides = [1, 1]} : vector<2x512xf32> to vector<2x128xf32>
    %171 = arith.negf %170 : vector<2x128xf32>
    %172 = math.exp %171 : vector<2x128xf32>
    %cst_35 = arith.constant 1.000000e+00 : f32
    %173 = vector.broadcast %cst_35 : f32 to vector<2x128xf32>
    %174 = arith.addf %173, %172 : vector<2x128xf32>
    %175 = arith.divf %173, %174 : vector<2x128xf32>
    %176 = arith.mulf %167, %121 : vector<2x128xf32>
    %177 = arith.mulf %161, %169 : vector<2x128xf32>
    %178 = arith.addf %176, %177 : vector<2x128xf32>
    %179 = math.tanh %178 : vector<2x128xf32>
    %180 = arith.mulf %175, %179 : vector<2x128xf32>
    %181 = vector.extract_strided_slice %5 {offsets = [6, 0], sizes = [2, 512], strides = [1, 1]} : vector<16x512xf32> to vector<2x512xf32>
    %cst_36 = arith.constant dense<0.000000e+00> : vector<2x512xf32>
    %182 = tpu.matmul %151, %6, %cst_36 {dimension_numbers = #tpu.dot_dimension_numbers<[1], [0], [0], [1], [0, 0, 1, 1], [], []>} : vector<2x128xf32>, vector<128x512xf32>, vector<2x512xf32> -> vector<2x512xf32>
    %183 = arith.addf %181, %182 : vector<2x512xf32>
    %184 = vector.extract_strided_slice %183 {offsets = [0, 0], sizes = [2, 128], strides = [1, 1]} : vector<2x512xf32> to vector<2x128xf32>
    %185 = arith.negf %184 : vector<2x128xf32>
    %186 = math.exp %185 : vector<2x128xf32>
    %cst_37 = arith.constant 1.000000e+00 : f32
    %187 = vector.broadcast %cst_37 : f32 to vector<2x128xf32>
    %188 = arith.addf %187, %186 : vector<2x128xf32>
    %189 = arith.divf %187, %188 : vector<2x128xf32>
    %190 = vector.extract_strided_slice %183 {offsets = [0, 128], sizes = [2, 128], strides = [1, 1]} : vector<2x512xf32> to vector<2x128xf32>
    %191 = arith.negf %190 : vector<2x128xf32>
    %192 = math.exp %191 : vector<2x128xf32>
    %cst_38 = arith.constant 1.000000e+00 : f32
    %193 = vector.broadcast %cst_38 : f32 to vector<2x128xf32>
    %194 = arith.addf %193, %192 : vector<2x128xf32>
    %195 = arith.divf %193, %194 : vector<2x128xf32>
    %196 = vector.extract_strided_slice %183 {offsets = [0, 256], sizes = [2, 128], strides = [1, 1]} : vector<2x512xf32> to vector<2x128xf32>
    %197 = math.tanh %196 : vector<2x128xf32>
    %198 = vector.extract_strided_slice %183 {offsets = [0, 384], sizes = [2, 128], strides = [1, 1]} : vector<2x512xf32> to vector<2x128xf32>
    %199 = arith.negf %198 : vector<2x128xf32>
    %200 = math.exp %199 : vector<2x128xf32>
    %cst_39 = arith.constant 1.000000e+00 : f32
    %201 = vector.broadcast %cst_39 : f32 to vector<2x128xf32>
    %202 = arith.addf %201, %200 : vector<2x128xf32>
    %203 = arith.divf %201, %202 : vector<2x128xf32>
    %204 = arith.mulf %195, %149 : vector<2x128xf32>
    %205 = arith.mulf %189, %197 : vector<2x128xf32>
    %206 = arith.addf %204, %205 : vector<2x128xf32>
    %207 = math.tanh %206 : vector<2x128xf32>
    %208 = arith.mulf %203, %207 : vector<2x128xf32>
    %209 = tpu.concatenate %208, %180 in 1 : vector<2x128xf32>, vector<2x128xf32> -> vector<2x256xf32>
    %cst_40 = arith.constant dense<0.000000e+00> : vector<2x512xf32>
    %210 = tpu.matmul %209, %7, %cst_40 {dimension_numbers = #tpu.dot_dimension_numbers<[1], [0], [0], [1], [0, 0, 1, 1], [], []>} : vector<2x256xf32>, vector<256x512xf32>, vector<2x512xf32> -> vector<2x512xf32>
    %211 = vector.broadcast %8 : vector<1x512xf32> to vector<2x512xf32>
    %212 = arith.addf %210, %211 : vector<2x512xf32>
    %213 = vector.extract_strided_slice %212 {offsets = [0, 0], sizes = [2, 128], strides = [1, 1]} : vector<2x512xf32> to vector<2x128xf32>
    %214 = arith.negf %213 : vector<2x128xf32>
    %215 = math.exp %214 : vector<2x128xf32>
    %cst_41 = arith.constant 1.000000e+00 : f32
    %216 = vector.broadcast %cst_41 : f32 to vector<2x128xf32>
    %217 = arith.addf %216, %215 : vector<2x128xf32>
    %218 = arith.divf %216, %217 : vector<2x128xf32>
    %219 = vector.extract_strided_slice %212 {offsets = [0, 128], sizes = [2, 128], strides = [1, 1]} : vector<2x512xf32> to vector<2x128xf32>
    %220 = arith.negf %219 : vector<2x128xf32>
    %221 = math.exp %220 : vector<2x128xf32>
    %cst_42 = arith.constant 1.000000e+00 : f32
    %222 = vector.broadcast %cst_42 : f32 to vector<2x128xf32>
    %223 = arith.addf %222, %221 : vector<2x128xf32>
    %224 = arith.divf %222, %223 : vector<2x128xf32>
    %225 = vector.extract_strided_slice %212 {offsets = [0, 256], sizes = [2, 128], strides = [1, 1]} : vector<2x512xf32> to vector<2x128xf32>
    %226 = math.tanh %225 : vector<2x128xf32>
    %227 = vector.extract_strided_slice %212 {offsets = [0, 384], sizes = [2, 128], strides = [1, 1]} : vector<2x512xf32> to vector<2x128xf32>
    %228 = arith.negf %227 : vector<2x128xf32>
    %229 = math.exp %228 : vector<2x128xf32>
    %cst_43 = arith.constant 1.000000e+00 : f32
    %230 = vector.broadcast %cst_43 : f32 to vector<2x128xf32>
    %231 = arith.addf %230, %229 : vector<2x128xf32>
    %232 = arith.divf %230, %231 : vector<2x128xf32>
    %233 = arith.mulf %224, %178 : vector<2x128xf32>
    %234 = arith.mulf %218, %226 : vector<2x128xf32>
    %235 = arith.addf %233, %234 : vector<2x128xf32>
    %236 = math.tanh %235 : vector<2x128xf32>
    %237 = arith.mulf %232, %236 : vector<2x128xf32>
    %238 = vector.extract_strided_slice %5 {offsets = [8, 0], sizes = [2, 512], strides = [1, 1]} : vector<16x512xf32> to vector<2x512xf32>
    %cst_44 = arith.constant dense<0.000000e+00> : vector<2x512xf32>
    %239 = tpu.matmul %208, %6, %cst_44 {dimension_numbers = #tpu.dot_dimension_numbers<[1], [0], [0], [1], [0, 0, 1, 1], [], []>} : vector<2x128xf32>, vector<128x512xf32>, vector<2x512xf32> -> vector<2x512xf32>
    %240 = arith.addf %238, %239 : vector<2x512xf32>
    %241 = vector.extract_strided_slice %240 {offsets = [0, 0], sizes = [2, 128], strides = [1, 1]} : vector<2x512xf32> to vector<2x128xf32>
    %242 = arith.negf %241 : vector<2x128xf32>
    %243 = math.exp %242 : vector<2x128xf32>
    %cst_45 = arith.constant 1.000000e+00 : f32
    %244 = vector.broadcast %cst_45 : f32 to vector<2x128xf32>
    %245 = arith.addf %244, %243 : vector<2x128xf32>
    %246 = arith.divf %244, %245 : vector<2x128xf32>
    %247 = vector.extract_strided_slice %240 {offsets = [0, 128], sizes = [2, 128], strides = [1, 1]} : vector<2x512xf32> to vector<2x128xf32>
    %248 = arith.negf %247 : vector<2x128xf32>
    %249 = math.exp %248 : vector<2x128xf32>
    %cst_46 = arith.constant 1.000000e+00 : f32
    %250 = vector.broadcast %cst_46 : f32 to vector<2x128xf32>
    %251 = arith.addf %250, %249 : vector<2x128xf32>
    %252 = arith.divf %250, %251 : vector<2x128xf32>
    %253 = vector.extract_strided_slice %240 {offsets = [0, 256], sizes = [2, 128], strides = [1, 1]} : vector<2x512xf32> to vector<2x128xf32>
    %254 = math.tanh %253 : vector<2x128xf32>
    %255 = vector.extract_strided_slice %240 {offsets = [0, 384], sizes = [2, 128], strides = [1, 1]} : vector<2x512xf32> to vector<2x128xf32>
    %256 = arith.negf %255 : vector<2x128xf32>
    %257 = math.exp %256 : vector<2x128xf32>
    %cst_47 = arith.constant 1.000000e+00 : f32
    %258 = vector.broadcast %cst_47 : f32 to vector<2x128xf32>
    %259 = arith.addf %258, %257 : vector<2x128xf32>
    %260 = arith.divf %258, %259 : vector<2x128xf32>
    %261 = arith.mulf %252, %206 : vector<2x128xf32>
    %262 = arith.mulf %246, %254 : vector<2x128xf32>
    %263 = arith.addf %261, %262 : vector<2x128xf32>
    %264 = math.tanh %263 : vector<2x128xf32>
    %265 = arith.mulf %260, %264 : vector<2x128xf32>
    %266 = tpu.concatenate %265, %237 in 1 : vector<2x128xf32>, vector<2x128xf32> -> vector<2x256xf32>
    %cst_48 = arith.constant dense<0.000000e+00> : vector<2x512xf32>
    %267 = tpu.matmul %266, %7, %cst_48 {dimension_numbers = #tpu.dot_dimension_numbers<[1], [0], [0], [1], [0, 0, 1, 1], [], []>} : vector<2x256xf32>, vector<256x512xf32>, vector<2x512xf32> -> vector<2x512xf32>
    %268 = vector.broadcast %8 : vector<1x512xf32> to vector<2x512xf32>
    %269 = arith.addf %267, %268 : vector<2x512xf32>
    %270 = vector.extract_strided_slice %269 {offsets = [0, 0], sizes = [2, 128], strides = [1, 1]} : vector<2x512xf32> to vector<2x128xf32>
    %271 = arith.negf %270 : vector<2x128xf32>
    %272 = math.exp %271 : vector<2x128xf32>
    %cst_49 = arith.constant 1.000000e+00 : f32
    %273 = vector.broadcast %cst_49 : f32 to vector<2x128xf32>
    %274 = arith.addf %273, %272 : vector<2x128xf32>
    %275 = arith.divf %273, %274 : vector<2x128xf32>
    %276 = vector.extract_strided_slice %269 {offsets = [0, 128], sizes = [2, 128], strides = [1, 1]} : vector<2x512xf32> to vector<2x128xf32>
    %277 = arith.negf %276 : vector<2x128xf32>
    %278 = math.exp %277 : vector<2x128xf32>
    %cst_50 = arith.constant 1.000000e+00 : f32
    %279 = vector.broadcast %cst_50 : f32 to vector<2x128xf32>
    %280 = arith.addf %279, %278 : vector<2x128xf32>
    %281 = arith.divf %279, %280 : vector<2x128xf32>
    %282 = vector.extract_strided_slice %269 {offsets = [0, 256], sizes = [2, 128], strides = [1, 1]} : vector<2x512xf32> to vector<2x128xf32>
    %283 = math.tanh %282 : vector<2x128xf32>
    %284 = vector.extract_strided_slice %269 {offsets = [0, 384], sizes = [2, 128], strides = [1, 1]} : vector<2x512xf32> to vector<2x128xf32>
    %285 = arith.negf %284 : vector<2x128xf32>
    %286 = math.exp %285 : vector<2x128xf32>
    %cst_51 = arith.constant 1.000000e+00 : f32
    %287 = vector.broadcast %cst_51 : f32 to vector<2x128xf32>
    %288 = arith.addf %287, %286 : vector<2x128xf32>
    %289 = arith.divf %287, %288 : vector<2x128xf32>
    %290 = arith.mulf %281, %235 : vector<2x128xf32>
    %291 = arith.mulf %275, %283 : vector<2x128xf32>
    %292 = arith.addf %290, %291 : vector<2x128xf32>
    %293 = math.tanh %292 : vector<2x128xf32>
    %294 = arith.mulf %289, %293 : vector<2x128xf32>
    %295 = vector.extract_strided_slice %5 {offsets = [10, 0], sizes = [2, 512], strides = [1, 1]} : vector<16x512xf32> to vector<2x512xf32>
    %cst_52 = arith.constant dense<0.000000e+00> : vector<2x512xf32>
    %296 = tpu.matmul %265, %6, %cst_52 {dimension_numbers = #tpu.dot_dimension_numbers<[1], [0], [0], [1], [0, 0, 1, 1], [], []>} : vector<2x128xf32>, vector<128x512xf32>, vector<2x512xf32> -> vector<2x512xf32>
    %297 = arith.addf %295, %296 : vector<2x512xf32>
    %298 = vector.extract_strided_slice %297 {offsets = [0, 0], sizes = [2, 128], strides = [1, 1]} : vector<2x512xf32> to vector<2x128xf32>
    %299 = arith.negf %298 : vector<2x128xf32>
    %300 = math.exp %299 : vector<2x128xf32>
    %cst_53 = arith.constant 1.000000e+00 : f32
    %301 = vector.broadcast %cst_53 : f32 to vector<2x128xf32>
    %302 = arith.addf %301, %300 : vector<2x128xf32>
    %303 = arith.divf %301, %302 : vector<2x128xf32>
    %304 = vector.extract_strided_slice %297 {offsets = [0, 128], sizes = [2, 128], strides = [1, 1]} : vector<2x512xf32> to vector<2x128xf32>
    %305 = arith.negf %304 : vector<2x128xf32>
    %306 = math.exp %305 : vector<2x128xf32>
    %cst_54 = arith.constant 1.000000e+00 : f32
    %307 = vector.broadcast %cst_54 : f32 to vector<2x128xf32>
    %308 = arith.addf %307, %306 : vector<2x128xf32>
    %309 = arith.divf %307, %308 : vector<2x128xf32>
    %310 = vector.extract_strided_slice %297 {offsets = [0, 256], sizes = [2, 128], strides = [1, 1]} : vector<2x512xf32> to vector<2x128xf32>
    %311 = math.tanh %310 : vector<2x128xf32>
    %312 = vector.extract_strided_slice %297 {offsets = [0, 384], sizes = [2, 128], strides = [1, 1]} : vector<2x512xf32> to vector<2x128xf32>
    %313 = arith.negf %312 : vector<2x128xf32>
    %314 = math.exp %313 : vector<2x128xf32>
    %cst_55 = arith.constant 1.000000e+00 : f32
    %315 = vector.broadcast %cst_55 : f32 to vector<2x128xf32>
    %316 = arith.addf %315, %314 : vector<2x128xf32>
    %317 = arith.divf %315, %316 : vector<2x128xf32>
    %318 = arith.mulf %309, %263 : vector<2x128xf32>
    %319 = arith.mulf %303, %311 : vector<2x128xf32>
    %320 = arith.addf %318, %319 : vector<2x128xf32>
    %321 = math.tanh %320 : vector<2x128xf32>
    %322 = arith.mulf %317, %321 : vector<2x128xf32>
    %323 = tpu.concatenate %322, %294 in 1 : vector<2x128xf32>, vector<2x128xf32> -> vector<2x256xf32>
    %cst_56 = arith.constant dense<0.000000e+00> : vector<2x512xf32>
    %324 = tpu.matmul %323, %7, %cst_56 {dimension_numbers = #tpu.dot_dimension_numbers<[1], [0], [0], [1], [0, 0, 1, 1], [], []>} : vector<2x256xf32>, vector<256x512xf32>, vector<2x512xf32> -> vector<2x512xf32>
    %325 = vector.broadcast %8 : vector<1x512xf32> to vector<2x512xf32>
    %326 = arith.addf %324, %325 : vector<2x512xf32>
    %327 = vector.extract_strided_slice %326 {offsets = [0, 0], sizes = [2, 128], strides = [1, 1]} : vector<2x512xf32> to vector<2x128xf32>
    %328 = arith.negf %327 : vector<2x128xf32>
    %329 = math.exp %328 : vector<2x128xf32>
    %cst_57 = arith.constant 1.000000e+00 : f32
    %330 = vector.broadcast %cst_57 : f32 to vector<2x128xf32>
    %331 = arith.addf %330, %329 : vector<2x128xf32>
    %332 = arith.divf %330, %331 : vector<2x128xf32>
    %333 = vector.extract_strided_slice %326 {offsets = [0, 128], sizes = [2, 128], strides = [1, 1]} : vector<2x512xf32> to vector<2x128xf32>
    %334 = arith.negf %333 : vector<2x128xf32>
    %335 = math.exp %334 : vector<2x128xf32>
    %cst_58 = arith.constant 1.000000e+00 : f32
    %336 = vector.broadcast %cst_58 : f32 to vector<2x128xf32>
    %337 = arith.addf %336, %335 : vector<2x128xf32>
    %338 = arith.divf %336, %337 : vector<2x128xf32>
    %339 = vector.extract_strided_slice %326 {offsets = [0, 256], sizes = [2, 128], strides = [1, 1]} : vector<2x512xf32> to vector<2x128xf32>
    %340 = math.tanh %339 : vector<2x128xf32>
    %341 = vector.extract_strided_slice %326 {offsets = [0, 384], sizes = [2, 128], strides = [1, 1]} : vector<2x512xf32> to vector<2x128xf32>
    %342 = arith.negf %341 : vector<2x128xf32>
    %343 = math.exp %342 : vector<2x128xf32>
    %cst_59 = arith.constant 1.000000e+00 : f32
    %344 = vector.broadcast %cst_59 : f32 to vector<2x128xf32>
    %345 = arith.addf %344, %343 : vector<2x128xf32>
    %346 = arith.divf %344, %345 : vector<2x128xf32>
    %347 = arith.mulf %338, %292 : vector<2x128xf32>
    %348 = arith.mulf %332, %340 : vector<2x128xf32>
    %349 = arith.addf %347, %348 : vector<2x128xf32>
    %350 = math.tanh %349 : vector<2x128xf32>
    %351 = arith.mulf %346, %350 : vector<2x128xf32>
    %352 = vector.extract_strided_slice %5 {offsets = [12, 0], sizes = [2, 512], strides = [1, 1]} : vector<16x512xf32> to vector<2x512xf32>
    %cst_60 = arith.constant dense<0.000000e+00> : vector<2x512xf32>
    %353 = tpu.matmul %322, %6, %cst_60 {dimension_numbers = #tpu.dot_dimension_numbers<[1], [0], [0], [1], [0, 0, 1, 1], [], []>} : vector<2x128xf32>, vector<128x512xf32>, vector<2x512xf32> -> vector<2x512xf32>
    %354 = arith.addf %352, %353 : vector<2x512xf32>
    %355 = vector.extract_strided_slice %354 {offsets = [0, 0], sizes = [2, 128], strides = [1, 1]} : vector<2x512xf32> to vector<2x128xf32>
    %356 = arith.negf %355 : vector<2x128xf32>
    %357 = math.exp %356 : vector<2x128xf32>
    %cst_61 = arith.constant 1.000000e+00 : f32
    %358 = vector.broadcast %cst_61 : f32 to vector<2x128xf32>
    %359 = arith.addf %358, %357 : vector<2x128xf32>
    %360 = arith.divf %358, %359 : vector<2x128xf32>
    %361 = vector.extract_strided_slice %354 {offsets = [0, 128], sizes = [2, 128], strides = [1, 1]} : vector<2x512xf32> to vector<2x128xf32>
    %362 = arith.negf %361 : vector<2x128xf32>
    %363 = math.exp %362 : vector<2x128xf32>
    %cst_62 = arith.constant 1.000000e+00 : f32
    %364 = vector.broadcast %cst_62 : f32 to vector<2x128xf32>
    %365 = arith.addf %364, %363 : vector<2x128xf32>
    %366 = arith.divf %364, %365 : vector<2x128xf32>
    %367 = vector.extract_strided_slice %354 {offsets = [0, 256], sizes = [2, 128], strides = [1, 1]} : vector<2x512xf32> to vector<2x128xf32>
    %368 = math.tanh %367 : vector<2x128xf32>
    %369 = vector.extract_strided_slice %354 {offsets = [0, 384], sizes = [2, 128], strides = [1, 1]} : vector<2x512xf32> to vector<2x128xf32>
    %370 = arith.negf %369 : vector<2x128xf32>
    %371 = math.exp %370 : vector<2x128xf32>
    %cst_63 = arith.constant 1.000000e+00 : f32
    %372 = vector.broadcast %cst_63 : f32 to vector<2x128xf32>
    %373 = arith.addf %372, %371 : vector<2x128xf32>
    %374 = arith.divf %372, %373 : vector<2x128xf32>
    %375 = arith.mulf %366, %320 : vector<2x128xf32>
    %376 = arith.mulf %360, %368 : vector<2x128xf32>
    %377 = arith.addf %375, %376 : vector<2x128xf32>
    %378 = math.tanh %377 : vector<2x128xf32>
    %379 = arith.mulf %374, %378 : vector<2x128xf32>
    %380 = tpu.concatenate %379, %351 in 1 : vector<2x128xf32>, vector<2x128xf32> -> vector<2x256xf32>
    %cst_64 = arith.constant dense<0.000000e+00> : vector<2x512xf32>
    %381 = tpu.matmul %380, %7, %cst_64 {dimension_numbers = #tpu.dot_dimension_numbers<[1], [0], [0], [1], [0, 0, 1, 1], [], []>} : vector<2x256xf32>, vector<256x512xf32>, vector<2x512xf32> -> vector<2x512xf32>
    %382 = vector.broadcast %8 : vector<1x512xf32> to vector<2x512xf32>
    %383 = arith.addf %381, %382 : vector<2x512xf32>
    %384 = vector.extract_strided_slice %383 {offsets = [0, 0], sizes = [2, 128], strides = [1, 1]} : vector<2x512xf32> to vector<2x128xf32>
    %385 = arith.negf %384 : vector<2x128xf32>
    %386 = math.exp %385 : vector<2x128xf32>
    %cst_65 = arith.constant 1.000000e+00 : f32
    %387 = vector.broadcast %cst_65 : f32 to vector<2x128xf32>
    %388 = arith.addf %387, %386 : vector<2x128xf32>
    %389 = arith.divf %387, %388 : vector<2x128xf32>
    %390 = vector.extract_strided_slice %383 {offsets = [0, 128], sizes = [2, 128], strides = [1, 1]} : vector<2x512xf32> to vector<2x128xf32>
    %391 = arith.negf %390 : vector<2x128xf32>
    %392 = math.exp %391 : vector<2x128xf32>
    %cst_66 = arith.constant 1.000000e+00 : f32
    %393 = vector.broadcast %cst_66 : f32 to vector<2x128xf32>
    %394 = arith.addf %393, %392 : vector<2x128xf32>
    %395 = arith.divf %393, %394 : vector<2x128xf32>
    %396 = vector.extract_strided_slice %383 {offsets = [0, 256], sizes = [2, 128], strides = [1, 1]} : vector<2x512xf32> to vector<2x128xf32>
    %397 = math.tanh %396 : vector<2x128xf32>
    %398 = vector.extract_strided_slice %383 {offsets = [0, 384], sizes = [2, 128], strides = [1, 1]} : vector<2x512xf32> to vector<2x128xf32>
    %399 = arith.negf %398 : vector<2x128xf32>
    %400 = math.exp %399 : vector<2x128xf32>
    %cst_67 = arith.constant 1.000000e+00 : f32
    %401 = vector.broadcast %cst_67 : f32 to vector<2x128xf32>
    %402 = arith.addf %401, %400 : vector<2x128xf32>
    %403 = arith.divf %401, %402 : vector<2x128xf32>
    %404 = arith.mulf %395, %349 : vector<2x128xf32>
    %405 = arith.mulf %389, %397 : vector<2x128xf32>
    %406 = arith.addf %404, %405 : vector<2x128xf32>
    %407 = math.tanh %406 : vector<2x128xf32>
    %408 = arith.mulf %403, %407 : vector<2x128xf32>
    %409 = vector.extract_strided_slice %5 {offsets = [14, 0], sizes = [2, 512], strides = [1, 1]} : vector<16x512xf32> to vector<2x512xf32>
    %cst_68 = arith.constant dense<0.000000e+00> : vector<2x512xf32>
    %410 = tpu.matmul %379, %6, %cst_68 {dimension_numbers = #tpu.dot_dimension_numbers<[1], [0], [0], [1], [0, 0, 1, 1], [], []>} : vector<2x128xf32>, vector<128x512xf32>, vector<2x512xf32> -> vector<2x512xf32>
    %411 = arith.addf %409, %410 : vector<2x512xf32>
    %412 = vector.extract_strided_slice %411 {offsets = [0, 0], sizes = [2, 128], strides = [1, 1]} : vector<2x512xf32> to vector<2x128xf32>
    %413 = arith.negf %412 : vector<2x128xf32>
    %414 = math.exp %413 : vector<2x128xf32>
    %cst_69 = arith.constant 1.000000e+00 : f32
    %415 = vector.broadcast %cst_69 : f32 to vector<2x128xf32>
    %416 = arith.addf %415, %414 : vector<2x128xf32>
    %417 = arith.divf %415, %416 : vector<2x128xf32>
    %418 = vector.extract_strided_slice %411 {offsets = [0, 128], sizes = [2, 128], strides = [1, 1]} : vector<2x512xf32> to vector<2x128xf32>
    %419 = arith.negf %418 : vector<2x128xf32>
    %420 = math.exp %419 : vector<2x128xf32>
    %cst_70 = arith.constant 1.000000e+00 : f32
    %421 = vector.broadcast %cst_70 : f32 to vector<2x128xf32>
    %422 = arith.addf %421, %420 : vector<2x128xf32>
    %423 = arith.divf %421, %422 : vector<2x128xf32>
    %424 = vector.extract_strided_slice %411 {offsets = [0, 256], sizes = [2, 128], strides = [1, 1]} : vector<2x512xf32> to vector<2x128xf32>
    %425 = math.tanh %424 : vector<2x128xf32>
    %426 = vector.extract_strided_slice %411 {offsets = [0, 384], sizes = [2, 128], strides = [1, 1]} : vector<2x512xf32> to vector<2x128xf32>
    %427 = arith.negf %426 : vector<2x128xf32>
    %428 = math.exp %427 : vector<2x128xf32>
    %cst_71 = arith.constant 1.000000e+00 : f32
    %429 = vector.broadcast %cst_71 : f32 to vector<2x128xf32>
    %430 = arith.addf %429, %428 : vector<2x128xf32>
    %431 = arith.divf %429, %430 : vector<2x128xf32>
    %432 = arith.mulf %423, %377 : vector<2x128xf32>
    %433 = arith.mulf %417, %425 : vector<2x128xf32>
    %434 = arith.addf %432, %433 : vector<2x128xf32>
    %435 = math.tanh %434 : vector<2x128xf32>
    %436 = arith.mulf %431, %435 : vector<2x128xf32>
    %437 = tpu.concatenate %436, %408 in 1 : vector<2x128xf32>, vector<2x128xf32> -> vector<2x256xf32>
    %cst_72 = arith.constant dense<0.000000e+00> : vector<2x512xf32>
    %438 = tpu.matmul %437, %7, %cst_72 {dimension_numbers = #tpu.dot_dimension_numbers<[1], [0], [0], [1], [0, 0, 1, 1], [], []>} : vector<2x256xf32>, vector<256x512xf32>, vector<2x512xf32> -> vector<2x512xf32>
    %439 = vector.broadcast %8 : vector<1x512xf32> to vector<2x512xf32>
    %440 = arith.addf %438, %439 : vector<2x512xf32>
    %441 = vector.extract_strided_slice %440 {offsets = [0, 0], sizes = [2, 128], strides = [1, 1]} : vector<2x512xf32> to vector<2x128xf32>
    %442 = arith.negf %441 : vector<2x128xf32>
    %443 = math.exp %442 : vector<2x128xf32>
    %cst_73 = arith.constant 1.000000e+00 : f32
    %444 = vector.broadcast %cst_73 : f32 to vector<2x128xf32>
    %445 = arith.addf %444, %443 : vector<2x128xf32>
    %446 = arith.divf %444, %445 : vector<2x128xf32>
    %447 = vector.extract_strided_slice %440 {offsets = [0, 128], sizes = [2, 128], strides = [1, 1]} : vector<2x512xf32> to vector<2x128xf32>
    %448 = arith.negf %447 : vector<2x128xf32>
    %449 = math.exp %448 : vector<2x128xf32>
    %cst_74 = arith.constant 1.000000e+00 : f32
    %450 = vector.broadcast %cst_74 : f32 to vector<2x128xf32>
    %451 = arith.addf %450, %449 : vector<2x128xf32>
    %452 = arith.divf %450, %451 : vector<2x128xf32>
    %453 = vector.extract_strided_slice %440 {offsets = [0, 256], sizes = [2, 128], strides = [1, 1]} : vector<2x512xf32> to vector<2x128xf32>
    %454 = math.tanh %453 : vector<2x128xf32>
    %455 = vector.extract_strided_slice %440 {offsets = [0, 384], sizes = [2, 128], strides = [1, 1]} : vector<2x512xf32> to vector<2x128xf32>
    %456 = arith.negf %455 : vector<2x128xf32>
    %457 = math.exp %456 : vector<2x128xf32>
    %cst_75 = arith.constant 1.000000e+00 : f32
    %458 = vector.broadcast %cst_75 : f32 to vector<2x128xf32>
    %459 = arith.addf %458, %457 : vector<2x128xf32>
    %460 = arith.divf %458, %459 : vector<2x128xf32>
    %461 = arith.mulf %452, %406 : vector<2x128xf32>
    %462 = arith.mulf %446, %454 : vector<2x128xf32>
    %463 = arith.addf %461, %462 : vector<2x128xf32>
    %464 = math.tanh %463 : vector<2x128xf32>
    %465 = arith.mulf %460, %464 : vector<2x128xf32>
    %c0_76 = arith.constant 0 : index
    %c0_77 = arith.constant 0 : index
    %466 = vector.load %arg6[%c0_76, %c0_77] : memref<1x128xf32, #tpu.memory_space<vmem>>, vector<1x128xf32>
    %467 = vector.broadcast %466 : vector<1x128xf32> to vector<2x128xf32>
    %468 = arith.mulf %465, %467 : vector<2x128xf32>
    %cst_78 = arith.constant dense<0.000000e+00> : vector<2xf32>
    %469 = vector.multi_reduction <add>, %468, %cst_78 [1] : vector<2x128xf32> to vector<2xf32>
    %470 = vector.shape_cast %469 : vector<2xf32> to vector<2x1xf32>
    %c0_79 = arith.constant 0 : index
    %c0_80 = arith.constant 0 : index
    %471 = vector.load %arg7[%c0_79, %c0_80] : memref<1x1xf32, #tpu.memory_space<vmem>>, vector<1x1xf32>
    %472 = vector.broadcast %471 : vector<1x1xf32> to vector<2x1xf32>
    %473 = arith.addf %470, %472 : vector<2x1xf32>
    %c0_81 = arith.constant 0 : index
    %c0_82 = arith.constant 0 : index
    %474 = vector.load %arg8[%c0_81, %c0_82] : memref<2x1xf32, #tpu.memory_space<vmem>>, vector<2x1xf32>
    tpu.vector_store %arg8[%c0_81, %c0_82], %473 {strides = array<i32>} : memref<2x1xf32, #tpu.memory_space<vmem>>, vector<2x1xf32>,
    return
  }
}

</mosaic_0001>

<llo_original>
// kernel: tpu_custom_call.1
$region0: #{tpu_custom_call.1}
  #allocation0 [shape = 'u32[]', space=smem, size = 0x4, offset = 0x4, fixed_abs, tag = 'smem constant byte address 0x4 - core index']
  #allocation1 [shape = 'u32[72,128]{1,0:T(1,128)}', space=vmem, size = 0x9000, scoped, tag = 'internal scratch']
  #allocation2 [shape = 'f32[1,1]{1,0:T(1,128)S(1)}', space=vmem, size = 0x200, scoped, tag = 'scoped memory for tpu_custom_call.1']
  %s0 = inlined_call_operand.hbm [shape: f32[16,32], index: 0, kind: input, shape index: {}]
  %s1 = inlined_call_operand.hbm [shape: f32[32,512], index: 1, kind: input, shape index: {}]
  %s2 = inlined_call_operand.hbm [shape: f32[128,512], index: 2, kind: input, shape index: {}]
  %s3 = inlined_call_operand.vmem [shape: f32[1,512], index: 3, kind: input, shape index: {}]
  %s4 = inlined_call_operand.hbm [shape: f32[256,512], index: 4, kind: input, shape index: {}]
  %s5 = inlined_call_operand.hbm [shape: f32[1,512], index: 5, kind: input, shape index: {}]
  %s6 = inlined_call_operand.vmem [shape: f32[1,128], index: 6, kind: input, shape index: {}]
  %s7 = inlined_call_operand.<no memory space> [shape: f32[1,1], index: 7, kind: input, shape index: {}]
  %s8 = inlined_call_operand.vmem [shape: f32[2,1], index: 8, kind: output, shape index: {}]
  %s9 = sld [smem:[#allocation0]]
  $region62: #{tpu_custom_call.1} parent=0
    _
  %s11 = ssub.s32 1, %s9
  %s12 = scalar_select 0, %s11, %s9
  %v13 = vstv %s7
  %14 = vst [vmem:[#allocation2] sm:$0x1] %v13
  $region1: #{tpu_custom_call.1} parent=0
    #allocation3 [shape = 'u8[8192]{0}', space=vmem, size = 0x2000, scoped, tag = 'input window, operand 0, single buffered']
    #allocation4 [shape = 's32[1]{0}', space=sflag, size = 0x4, scoped, tag = 'scoped memory for tpu_custom_call.1']
    #allocation5 [shape = 'u8[65536]{0}', space=vmem, size = 0x10000, scoped, tag = 'input window, operand 1, single buffered']
    #allocation6 [shape = 's32[1]{0}', space=sflag, size = 0x4, scoped, tag = 'scoped memory for tpu_custom_call.1']
    #allocation7 [shape = 'u8[262144]{0}', space=vmem, size = 0x40000, scoped, tag = 'input window, operand 2, single buffered']
    #allocation8 [shape = 'u8[524288]{0}', space=vmem, size = 0x80000, scoped, tag = 'input window, operand 4, single buffered']
    #allocation9 [shape = 's32[1]{0}', space=sflag, size = 0x4, scoped, tag = 'scoped memory for tpu_custom_call.1']
    #allocation10 [shape = 'u8[2048]{0}', space=vmem, size = 0x800, scoped, tag = 'input window, operand 5, single buffered']
    %15 = vsyncpa [#allocation4], 0
    %16 = vsyncpa [#allocation6], 0
    %17 = vsyncpa [#allocation9], 0
    // Predicated region
    $region2: #{tpu_custom_call.1} parent=1 // pred_check
      _
    $region3: #{tpu_custom_call.1} parent=1 // pred_check_branch
      %19 = sbr.rel (0) target = $region5
    $region4: #{tpu_custom_call.1} parent=1 // pred_region
      %21 = vsyncadd [#allocation4], 0
      %s22 = sshll.u32 %s0, 4
      %s23 = int_to_ptr.hbm [resolvable:$true] %s22
      %s24 = sshll.u32 [#allocation3], 4
      %s25 = int_to_ptr.vmem [resolvable:$true] %s24
      %30 = dma.hbm_to_vmem [thread:$0]  %s23, 256, %s25, [#allocation4], 128, 128, 8
    $region5: #{tpu_custom_call.1} parent=1 // pred_fallthru
      _
    // Predicated region
    $region6: #{tpu_custom_call.1} parent=1 // pred_check
      _
    $region7: #{tpu_custom_call.1} parent=1 // pred_check_branch
      %32 = sbr.rel (0) target = $region9
    $region8: #{tpu_custom_call.1} parent=1 // pred_region
      %34 = vsyncadd [#allocation6], 0
      %s35 = sshll.u32 %s1, 4
      %s36 = int_to_ptr.hbm [resolvable:$true] %s35
      %s37 = sshll.u32 [#allocation5], 4
      %s38 = int_to_ptr.vmem [resolvable:$true] %s37
      %43 = dma.hbm_to_vmem [thread:$0]  %s36, 2048, %s38, [#allocation6], 512, 512, 32
    $region9: #{tpu_custom_call.1} parent=1 // pred_fallthru
      _
    // Predicated region
    $region10: #{tpu_custom_call.1} parent=1 // pred_check
      _
    $region11: #{tpu_custom_call.1} parent=1 // pred_check_branch
      %45 = sbr.rel (0) target = $region13
    $region12: #{tpu_custom_call.1} parent=1 // pred_region
      %47 = vsyncadd [#allocation6], 0
      %s48 = sshll.u32 %s2, 4
      %s49 = int_to_ptr.hbm [resolvable:$true] %s48
      %s50 = sshll.u32 [#allocation7], 4
      %s51 = int_to_ptr.vmem [resolvable:$true] %s50
      %56 = dma.hbm_to_vmem [thread:$0]  %s49, 8192, %s51, [#allocation6], 512, 512, 32
    $region13: #{tpu_custom_call.1} parent=1 // pred_fallthru
      _
    // Predicated region
    $region14: #{tpu_custom_call.1} parent=1 // pred_check
      _
    $region15: #{tpu_custom_call.1} parent=1 // pred_check_branch
      %58 = sbr.rel (0) target = $region17
    $region16: #{tpu_custom_call.1} parent=1 // pred_region
      _
    $region17: #{tpu_custom_call.1} parent=1 // pred_fallthru
      _
    // Predicated region
    $region18: #{tpu_custom_call.1} parent=1 // pred_check
      _
    $region19: #{tpu_custom_call.1} parent=1 // pred_check_branch
      %60 = sbr.rel (0) target = $region21
    $region20: #{tpu_custom_call.1} parent=1 // pred_region
      %62 = vsyncadd [#allocation9], 0
      %s63 = sshll.u32 %s4, 4
      %s64 = int_to_ptr.hbm [resolvable:$true] %s63
      %s65 = sshll.u32 [#allocation8], 4
      %s66 = int_to_ptr.vmem [resolvable:$true] %s65
      %71 = dma.hbm_to_vmem [thread:$0]  %s64, 16384, %s66, [#allocation9], 512, 512, 32
    $region21: #{tpu_custom_call.1} parent=1 // pred_fallthru
      _
    // Predicated region
    $region22: #{tpu_custom_call.1} parent=1 // pred_check
      _
    $region23: #{tpu_custom_call.1} parent=1 // pred_check_branch
      %73 = sbr.rel (0) target = $region25
    $region24: #{tpu_custom_call.1} parent=1 // pred_region
      %75 = vsyncadd [#allocation9], 0
      %s77 = sshll.u32 %s5, 4
      %s78 = int_to_ptr.hbm [resolvable:$true] %s77
      %s79 = sshll.u32 [#allocation10], 4
      %s80 = int_to_ptr.vmem [resolvable:$true] %s79
      %82 = dma.hbm_to_vmem [thread:$0]  %s78, 64, %s80, [#allocation9]
    $region25: #{tpu_custom_call.1} parent=1 // pred_fallthru
      _
    // Predicated region
    $region26: #{tpu_custom_call.1} parent=1 // pred_check
      _
    $region27: #{tpu_custom_call.1} parent=1 // pred_check_branch
      %84 = sbr.rel (0) target = $region29
    $region28: #{tpu_custom_call.1} parent=1 // pred_region
      _
    $region29: #{tpu_custom_call.1} parent=1 // pred_fallthru
      _
    // Predicated region
    $region30: #{tpu_custom_call.1} parent=1 // pred_check
      _
    $region31: #{tpu_custom_call.1} parent=1 // pred_check_branch
      %86 = sbr.rel (0) target = $region33
    $region32: #{tpu_custom_call.1} parent=1 // pred_region
      _
    $region33: #{tpu_custom_call.1} parent=1 // pred_fallthru
      _
    // Predicated region
    $region34: #{tpu_custom_call.1} parent=1 // pred_check
      _
    $region35: #{tpu_custom_call.1} parent=1 // pred_check_branch
      %88 = sbr.rel (0) target = $region37
    $region36: #{tpu_custom_call.1} parent=1 // pred_region
      %90 = dma.done [#allocation4], 256
    $region37: #{tpu_custom_call.1} parent=1 // pred_fallthru
      _
    // Predicated region
    $region38: #{tpu_custom_call.1} parent=1 // pred_check
      _
    $region39: #{tpu_custom_call.1} parent=1 // pred_check_branch
      %92 = sbr.rel (0) target = $region41
    $region40: #{tpu_custom_call.1} parent=1 // pred_region
      %94 = dma.done [#allocation6], 2048
    $region41: #{tpu_custom_call.1} parent=1 // pred_fallthru
      _
    // Predicated region
    $region42: #{tpu_custom_call.1} parent=1 // pred_check
      _
    $region43: #{tpu_custom_call.1} parent=1 // pred_check_branch
      %96 = sbr.rel (0) target = $region45
    $region44: #{tpu_custom_call.1} parent=1 // pred_region
      %98 = dma.done [#allocation6], 8192
    $region45: #{tpu_custom_call.1} parent=1 // pred_fallthru
      _
    // Predicated region
    $region46: #{tpu_custom_call.1} parent=1 // pred_check
      _
    $region47: #{tpu_custom_call.1} parent=1 // pred_check_branch
      %100 = sbr.rel (0) target = $region49
    $region48: #{tpu_custom_call.1} parent=1 // pred_region
      %102 = dma.done [#allocation9], 16384
    $region49: #{tpu_custom_call.1} parent=1 // pred_fallthru
      _
    // Predicated region
    $region50: #{tpu_custom_call.1} parent=1 // pred_check
      _
    $region51: #{tpu_custom_call.1} parent=1 // pred_check_branch
      %104 = sbr.rel (0) target = $region53
    $region52: #{tpu_custom_call.1} parent=1 // pred_region
      %106 = dma.done [#allocation9], 64
    $region53: #{tpu_custom_call.1} parent=1 // pred_fallthru
      _
    %v107 = vld [vmem:[#allocation3] sm:$0xff]
    %v108 = vld [vmem:[#allocation3 + $0x8] sm:$0xff]
    %v109 = vld [vmem:[#allocation5] sm:$0xff]
    %v110 = vld [vmem:[#allocation5 + $0x8] sm:$0xff]
    %v111 = vld [vmem:[#allocation5 + $0x10] sm:$0xff]
    %v112 = vld [vmem:[#allocation5 + $0x18] sm:$0xff]
    %v113 = vld [vmem:[#allocation5 + $0x20] sm:$0xff]
    %v114 = vld [vmem:[#allocation5 + $0x28] sm:$0xff]
    %v115 = vld [vmem:[#allocation5 + $0x30] sm:$0xff]
    %v116 = vld [vmem:[#allocation5 + $0x38] sm:$0xff]
    %v117 = vld [vmem:[#allocation5 + $0x40] sm:$0xff]
    %v118 = vld [vmem:[#allocation5 + $0x48] sm:$0xff]
    %v119 = vld [vmem:[#allocation5 + $0x50] sm:$0xff]
    %v120 = vld [vmem:[#allocation5 + $0x58] sm:$0xff]
    %v121 = vld [vmem:[#allocation5 + $0x60] sm:$0xff]
    %v122 = vld [vmem:[#allocation5 + $0x68] sm:$0xff]
    %v123 = vld [vmem:[#allocation5 + $0x70] sm:$0xff]
    %v124 = vld [vmem:[#allocation5 + $0x78] sm:$0xff]
    %v125 = vld [vmem:[%s3] sm:$0xf]
    %v127 = vperm.slane %v125, 0
    %v128 = vperm.slane %v125, 1
    %v129 = vperm.slane %v125, 2
    %v130 = vperm.slane %v125, 3
    %vm135 = vcmask 261120
    %v137 = vsel %vm135, %v107, 0
    %v140 = vsel %vm135, %v108, 0
    %142 = vmatpush.msra.mxu0 0.0
    %143 = vmatpush.msra.mxu0 0.0
    %144 = vmatpush.msra.mxu0 0.0
    %145 = vmatpush.msra.mxu0 0.0
    %146 = vmatpush.msra.mxu0 0.0
    %147 = vmatpush.msra.mxu0 0.0
    %148 = vmatpush.msra.mxu0 0.0
    %149 = vmatpush.msra.mxu0 0.0
    %150 = vmatpush.msra.mxu0 0.0
    %151 = vmatpush.msra.mxu0 0.0
    %152 = vmatpush.msra.mxu0 0.0
    %153 = vmatpush.msra.mxu0 0.0
    %154 = vmatpush.msra.mxu0 %v121
    %155 = vmatpush.msra.mxu0 %v117
    %156 = vmatpush.msra.mxu0 %v113
    %157 = vmatpush.msra.mxu0 %v109
    %158 = vmatmul.f32.gmra.mxu0 %v137
    %v159 = vpop.f32.mrf.mxu0
    %v160 = vadd.f32 %v127, %v159
    %161 = vmatmul.f32.gmra.mxu0 %v140
    %v162 = vpop.f32.mrf.mxu0
    %v163 = vadd.f32 %v127, %v162
    %164 = vdwg.mxu0
    %165 = vmatpush.msra.mxu0 0.0
    %166 = vmatpush.msra.mxu0 0.0
    %167 = vmatpush.msra.mxu0 0.0
    %168 = vmatpush.msra.mxu0 0.0
    %169 = vmatpush.msra.mxu0 0.0
    %170 = vmatpush.msra.mxu0 0.0
    %171 = vmatpush.msra.mxu0 0.0
    %172 = vmatpush.msra.mxu0 0.0
    %173 = vmatpush.msra.mxu0 0.0
    %174 = vmatpush.msra.mxu0 0.0
    %175 = vmatpush.msra.mxu0 0.0
    %176 = vmatpush.msra.mxu0 0.0
    %177 = vmatpush.msra.mxu0 %v122
    %178 = vmatpush.msra.mxu0 %v118
    %179 = vmatpush.msra.mxu0 %v114
    %180 = vmatpush.msra.mxu0 %v110
    %181 = vmatmul.f32.gmra.mxu0 %v137
    %v182 = vpop.f32.mrf.mxu0
    %v183 = vadd.f32 %v128, %v182
    %184 = vmatmul.f32.gmra.mxu0 %v140
    %v185 = vpop.f32.mrf.mxu0
    %v186 = vadd.f32 %v128, %v185
    %187 = vdwg.mxu0
    %188 = vmatpush.msra.mxu0 0.0
    %189 = vmatpush.msra.mxu0 0.0
    %190 = vmatpush.msra.mxu0 0.0
    %191 = vmatpush.msra.mxu0 0.0
    %192 = vmatpush.msra.mxu0 0.0
    %193 = vmatpush.msra.mxu0 0.0
    %194 = vmatpush.msra.mxu0 0.0
    %195 = vmatpush.msra.mxu0 0.0
    %196 = vmatpush.msra.mxu0 0.0
    %197 = vmatpush.msra.mxu0 0.0
    %198 = vmatpush.msra.mxu0 0.0
    %199 = vmatpush.msra.mxu0 0.0
    %200 = vmatpush.msra.mxu0 %v123
    %201 = vmatpush.msra.mxu0 %v119
    %202 = vmatpush.msra.mxu0 %v115
    %203 = vmatpush.msra.mxu0 %v111
    %204 = vmatmul.f32.gmra.mxu0 %v137
    %v205 = vpop.f32.mrf.mxu0
    %v206 = vadd.f32 %v129, %v205
    %207 = vmatmul.f32.gmra.mxu0 %v140
    %v208 = vpop.f32.mrf.mxu0
    %v209 = vadd.f32 %v129, %v208
    %210 = vdwg.mxu0
    %211 = vmatpush.msra.mxu0 0.0
    %212 = vmatpush.msra.mxu0 0.0
    %213 = vmatpush.msra.mxu0 0.0
    %214 = vmatpush.msra.mxu0 0.0
    %215 = vmatpush.msra.mxu0 0.0
    %216 = vmatpush.msra.mxu0 0.0
    %217 = vmatpush.msra.mxu0 0.0
    %218 = vmatpush.msra.mxu0 0.0
    %219 = vmatpush.msra.mxu0 0.0
    %220 = vmatpush.msra.mxu0 0.0
    %221 = vmatpush.msra.mxu0 0.0
    %222 = vmatpush.msra.mxu0 0.0
    %223 = vmatpush.msra.mxu0 %v124
    %224 = vmatpush.msra.mxu0 %v120
    %225 = vmatpush.msra.mxu0 %v116
    %226 = vmatpush.msra.mxu0 %v112
    %227 = vmatmul.f32.gmra.mxu0 %v137
    %v228 = vpop.f32.mrf.mxu0
    %v229 = vadd.f32 %v130, %v228
    %230 = vmatmul.f32.gmra.mxu0 %v140
    %v231 = vpop.f32.mrf.mxu0
    %v232 = vadd.f32 %v130, %v231
    %233 = vdwg.mxu0
    %v234 = vld [vmem:[#allocation7] sm:$0xff]
    %v235 = vld [vmem:[#allocation7 + $0x8] sm:$0xff]
    %v236 = vld [vmem:[#allocation7 + $0x10] sm:$0xff]
    %v237 = vld [vmem:[#allocation7 + $0x18] sm:$0xff]
    %v238 = vld [vmem:[#allocation7 + $0x20] sm:$0xff]
    %v239 = vld [vmem:[#allocation7 + $0x28] sm:$0xff]
    %v240 = vld [vmem:[#allocation7 + $0x30] sm:$0xff]
    %v241 = vld [vmem:[#allocation7 + $0x38] sm:$0xff]
    %v242 = vld [vmem:[#allocation7 + $0x40] sm:$0xff]
    %v243 = vld [vmem:[#allocation7 + $0x48] sm:$0xff]
    %v244 = vld [vmem:[#allocation7 + $0x50] sm:$0xff]
    %v245 = vld [vmem:[#allocation7 + $0x58] sm:$0xff]
    %v246 = vld [vmem:[#allocation7 + $0x60] sm:$0xff]
    %v247 = vld [vmem:[#allocation7 + $0x68] sm:$0xff]
    %v248 = vld [vmem:[#allocation7 + $0x70] sm:$0xff]
    %v249 = vld [vmem:[#allocation7 + $0x78] sm:$0xff]
    %v250 = vld [vmem:[#allocation7 + $0x80] sm:$0xff]
    %v251 = vld [vmem:[#allocation7 + $0x88] sm:$0xff]
    %v252 = vld [vmem:[#allocation7 + $0x90] sm:$0xff]
    %v253 = vld [vmem:[#allocation7 + $0x98] sm:$0xff]
    %v254 = vld [vmem:[#allocation7 + $0xa0] sm:$0xff]
    %v255 = vld [vmem:[#allocation7 + $0xa8] sm:$0xff]
    %v256 = vld [vmem:[#allocation7 + $0xb0] sm:$0xff]
    %v257 = vld [vmem:[#allocation7 + $0xb8] sm:$0xff]
    %v258 = vld [vmem:[#allocation7 + $0xc0] sm:$0xff]
    %v259 = vld [vmem:[#allocation7 + $0xc8] sm:$0xff]
    %v260 = vld [vmem:[#allocation7 + $0xd0] sm:$0xff]
    %v261 = vld [vmem:[#allocation7 + $0xd8] sm:$0xff]
    %v262 = vld [vmem:[#allocation7 + $0xe0] sm:$0xff]
    %v263 = vld [vmem:[#allocation7 + $0xe8] sm:$0xff]
    %v264 = vld [vmem:[#allocation7 + $0xf0] sm:$0xff]
    %v265 = vld [vmem:[#allocation7 + $0xf8] sm:$0xff]
    %v266 = vld [vmem:[#allocation7 + $0x100] sm:$0xff]
    %v267 = vld [vmem:[#allocation7 + $0x108] sm:$0xff]
    %v268 = vld [vmem:[#allocation7 + $0x110] sm:$0xff]
    %v269 = vld [vmem:[#allocation7 + $0x118] sm:$0xff]
    %v270 = vld [vmem:[#allocation7 + $0x120] sm:$0xff]
    %v271 = vld [vmem:[#allocation7 + $0x128] sm:$0xff]
    %v272 = vld [vmem:[#allocation7 + $0x130] sm:$0xff]
    %v273 = vld [vmem:[#allocation7 + $0x138] sm:$0xff]
    %v274 = vld [vmem:[#allocation7 + $0x140] sm:$0xff]
    %v275 = vld [vmem:[#allocation7 + $0x148] sm:$0xff]
    %v276 = vld [vmem:[#allocation7 + $0x150] sm:$0xff]
    %v277 = vld [vmem:[#allocation7 + $0x158] sm:$0xff]
    %v278 = vld [vmem:[#allocation7 + $0x160] sm:$0xff]
    %v279 = vld [vmem:[#allocation7 + $0x168] sm:$0xff]
    %v280 = vld [vmem:[#allocation7 + $0x170] sm:$0xff]
    %v281 = vld [vmem:[#allocation7 + $0x178] sm:$0xff]
    %v282 = vld [vmem:[#allocation7 + $0x180] sm:$0xff]
    %v283 = vld [vmem:[#allocation7 + $0x188] sm:$0xff]
    %v284 = vld [vmem:[#allocation7 + $0x190] sm:$0xff]
    %v285 = vld [vmem:[#allocation7 + $0x198] sm:$0xff]
    %v286 = vld [vmem:[#allocation7 + $0x1a0] sm:$0xff]
    %v287 = vld [vmem:[#allocation7 + $0x1a8] sm:$0xff]
    %v288 = vld [vmem:[#allocation7 + $0x1b0] sm:$0xff]
    %v289 = vld [vmem:[#allocation7 + $0x1b8] sm:$0xff]
    %v290 = vld [vmem:[#allocation7 + $0x1c0] sm:$0xff]
    %v291 = vld [vmem:[#allocation7 + $0x1c8] sm:$0xff]
    %v292 = vld [vmem:[#allocation7 + $0x1d0] sm:$0xff]
    %v293 = vld [vmem:[#allocation7 + $0x1d8] sm:$0xff]
    %v294 = vld [vmem:[#allocation7 + $0x1e0] sm:$0xff]
    %v295 = vld [vmem:[#allocation7 + $0x1e8] sm:$0xff]
    %v296 = vld [vmem:[#allocation7 + $0x1f0] sm:$0xff]
    %v297 = vld [vmem:[#allocation7 + $0x1f8] sm:$0xff]
    %v298 = vld [vmem:[#allocation8] sm:$0xff]
    %v299 = vld [vmem:[#allocation8 + $0x8] sm:$0xff]
    %v300 = vld [vmem:[#allocation8 + $0x10] sm:$0xff]
    %v301 = vld [vmem:[#allocation8 + $0x18] sm:$0xff]
    %v302 = vld [vmem:[#allocation8 + $0x20] sm:$0xff]
    %v303 = vld [vmem:[#allocation8 + $0x28] sm:$0xff]
    %v304 = vld [vmem:[#allocation8 + $0x30] sm:$0xff]
    %v305 = vld [vmem:[#allocation8 + $0x38] sm:$0xff]
    %v306 = vld [vmem:[#allocation8 + $0x40] sm:$0xff]
    %v307 = vld [vmem:[#allocation8 + $0x48] sm:$0xff]
    %v308 = vld [vmem:[#allocation8 + $0x50] sm:$0xff]
    %v309 = vld [vmem:[#allocation8 + $0x58] sm:$0xff]
    %v310 = vld [vmem:[#allocation8 + $0x60] sm:$0xff]
    %v311 = vld [vmem:[#allocation8 + $0x68] sm:$0xff]
    %v312 = vld [vmem:[#allocation8 + $0x70] sm:$0xff]
    %v313 = vld [vmem:[#allocation8 + $0x78] sm:$0xff]
    %v314 = vld [vmem:[#allocation8 + $0x80] sm:$0xff]
    %v315 = vld [vmem:[#allocation8 + $0x88] sm:$0xff]
    %v316 = vld [vmem:[#allocation8 + $0x90] sm:$0xff]
    %v317 = vld [vmem:[#allocation8 + $0x98] sm:$0xff]
    %v318 = vld [vmem:[#allocation8 + $0xa0] sm:$0xff]
    %v319 = vld [vmem:[#allocation8 + $0xa8] sm:$0xff]
    %v320 = vld [vmem:[#allocation8 + $0xb0] sm:$0xff]
    %v321 = vld [vmem:[#allocation8 + $0xb8] sm:$0xff]
    %v322 = vld [vmem:[#allocation8 + $0xc0] sm:$0xff]
    %v323 = vld [vmem:[#allocation8 + $0xc8] sm:$0xff]
    %v324 = vld [vmem:[#allocation8 + $0xd0] sm:$0xff]
    %v325 = vld [vmem:[#allocation8 + $0xd8] sm:$0xff]
    %v326 = vld [vmem:[#allocation8 + $0xe0] sm:$0xff]
    %v327 = vld [vmem:[#allocation8 + $0xe8] sm:$0xff]
    %v328 = vld [vmem:[#allocation8 + $0xf0] sm:$0xff]
    %v329 = vld [vmem:[#allocation8 + $0xf8] sm:$0xff]
    %v330 = vld [vmem:[#allocation8 + $0x100] sm:$0xff]
    %v331 = vld [vmem:[#allocation8 + $0x108] sm:$0xff]
    %v332 = vld [vmem:[#allocation8 + $0x110] sm:$0xff]
    %v333 = vld [vmem:[#allocation8 + $0x118] sm:$0xff]
    %v334 = vld [vmem:[#allocation8 + $0x120] sm:$0xff]
    %v335 = vld [vmem:[#allocation8 + $0x128] sm:$0xff]
    %v336 = vld [vmem:[#allocation8 + $0x130] sm:$0xff]
    %v337 = vld [vmem:[#allocation8 + $0x138] sm:$0xff]
    %v338 = vld [vmem:[#allocation8 + $0x140] sm:$0xff]
    %v339 = vld [vmem:[#allocation8 + $0x148] sm:$0xff]
    %v340 = vld [vmem:[#allocation8 + $0x150] sm:$0xff]
    %v341 = vld [vmem:[#allocation8 + $0x158] sm:$0xff]
    %v342 = vld [vmem:[#allocation8 + $0x160] sm:$0xff]
    %v343 = vld [vmem:[#allocation8 + $0x168] sm:$0xff]
    %v344 = vld [vmem:[#allocation8 + $0x170] sm:$0xff]
    %v345 = vld [vmem:[#allocation8 + $0x178] sm:$0xff]
    %v346 = vld [vmem:[#allocation8 + $0x180] sm:$0xff]
    %v347 = vld [vmem:[#allocation8 + $0x188] sm:$0xff]
    %v348 = vld [vmem:[#allocation8 + $0x190] sm:$0xff]
    %v349 = vld [vmem:[#allocation8 + $0x198] sm:$0xff]
    %v350 = vld [vmem:[#allocation8 + $0x1a0] sm:$0xff]
    %v351 = vld [vmem:[#allocation8 + $0x1a8] sm:$0xff]
    %v352 = vld [vmem:[#allocation8 + $0x1b0] sm:$0xff]
    %v353 = vld [vmem:[#allocation8 + $0x1b8] sm:$0xff]
    %v354 = vld [vmem:[#allocation8 + $0x1c0] sm:$0xff]
    %v355 = vld [vmem:[#allocation8 + $0x1c8] sm:$0xff]
    %v356 = vld [vmem:[#allocation8 + $0x1d0] sm:$0xff]
    %v357 = vld [vmem:[#allocation8 + $0x1d8] sm:$0xff]
    %v358 = vld [vmem:[#allocation8 + $0x1e0] sm:$0xff]
    %v359 = vld [vmem:[#allocation8 + $0x1e8] sm:$0xff]
    %v360 = vld [vmem:[#allocation8 + $0x1f0] sm:$0xff]
    %v361 = vld [vmem:[#allocation8 + $0x1f8] sm:$0xff]
    %v362 = vld [vmem:[#allocation8 + $0x200] sm:$0xff]
    %v363 = vld [vmem:[#allocation8 + $0x208] sm:$0xff]
    %v364 = vld [vmem:[#allocation8 + $0x210] sm:$0xff]
    %v365 = vld [vmem:[#allocation8 + $0x218] sm:$0xff]
    %v366 = vld [vmem:[#allocation8 + $0x220] sm:$0xff]
    %v367 = vld [vmem:[#allocation8 + $0x228] sm:$0xff]
    %v368 = vld [vmem:[#allocation8 + $0x230] sm:$0xff]
    %v369 = vld [vmem:[#allocation8 + $0x238] sm:$0xff]
    %v370 = vld [vmem:[#allocation8 + $0x240] sm:$0xff]
    %v371 = vld [vmem:[#allocation8 + $0x248] sm:$0xff]
    %v372 = vld [vmem:[#allocation8 + $0x250] sm:$0xff]
    %v373 = vld [vmem:[#allocation8 + $0x258] sm:$0xff]
    %v374 = vld [vmem:[#allocation8 + $0x260] sm:$0xff]
    %v375 = vld [vmem:[#allocation8 + $0x268] sm:$0xff]
    %v376 = vld [vmem:[#allocation8 + $0x270] sm:$0xff]
    %v377 = vld [vmem:[#allocation8 + $0x278] sm:$0xff]
    %v378 = vld [vmem:[#allocation8 + $0x280] sm:$0xff]
    %v379 = vld [vmem:[#allocation8 + $0x288] sm:$0xff]
    %v380 = vld [vmem:[#allocation8 + $0x290] sm:$0xff]
    %v381 = vld [vmem:[#allocation8 + $0x298] sm:$0xff]
    %v382 = vld [vmem:[#allocation8 + $0x2a0] sm:$0xff]
    %v383 = vld [vmem:[#allocation8 + $0x2a8] sm:$0xff]
    %v384 = vld [vmem:[#allocation8 + $0x2b0] sm:$0xff]
    %v385 = vld [vmem:[#allocation8 + $0x2b8] sm:$0xff]
    %v386 = vld [vmem:[#allocation8 + $0x2c0] sm:$0xff]
    %v387 = vld [vmem:[#allocation8 + $0x2c8] sm:$0xff]
    %v388 = vld [vmem:[#allocation8 + $0x2d0] sm:$0xff]
    %v389 = vld [vmem:[#allocation8 + $0x2d8] sm:$0xff]
    %v390 = vld [vmem:[#allocation8 + $0x2e0] sm:$0xff]
    %v391 = vld [vmem:[#allocation8 + $0x2e8] sm:$0xff]
    %v392 = vld [vmem:[#allocation8 + $0x2f0] sm:$0xff]
    %v393 = vld [vmem:[#allocation8 + $0x2f8] sm:$0xff]
    %v394 = vld [vmem:[#allocation8 + $0x300] sm:$0xff]
    %v395 = vld [vmem:[#allocation8 + $0x308] sm:$0xff]
    %v396 = vld [vmem:[#allocation8 + $0x310] sm:$0xff]
    %v397 = vld [vmem:[#allocation8 + $0x318] sm:$0xff]
    %v398 = vld [vmem:[#allocation8 + $0x320] sm:$0xff]
    %v399 = vld [vmem:[#allocation8 + $0x328] sm:$0xff]
    %v400 = vld [vmem:[#allocation8 + $0x330] sm:$0xff]
    %v401 = vld [vmem:[#allocation8 + $0x338] sm:$0xff]
    %v402 = vld [vmem:[#allocation8 + $0x340] sm:$0xff]
    %v403 = vld [vmem:[#allocation8 + $0x348] sm:$0xff]
    %v404 = vld [vmem:[#allocation8 + $0x350] sm:$0xff]
    %v405 = vld [vmem:[#allocation8 + $0x358] sm:$0xff]
    %v406 = vld [vmem:[#allocation8 + $0x360] sm:$0xff]
    %v407 = vld [vmem:[#allocation8 + $0x368] sm:$0xff]
    %v408 = vld [vmem:[#allocation8 + $0x370] sm:$0xff]
    %v409 = vld [vmem:[#allocation8 + $0x378] sm:$0xff]
    %v410 = vld [vmem:[#allocation8 + $0x380] sm:$0xff]
    %v411 = vld [vmem:[#allocation8 + $0x388] sm:$0xff]
    %v412 = vld [vmem:[#allocation8 + $0x390] sm:$0xff]
    %v413 = vld [vmem:[#allocation8 + $0x398] sm:$0xff]
    %v414 = vld [vmem:[#allocation8 + $0x3a0] sm:$0xff]
    %v415 = vld [vmem:[#allocation8 + $0x3a8] sm:$0xff]
    %v416 = vld [vmem:[#allocation8 + $0x3b0] sm:$0xff]
    %v417 = vld [vmem:[#allocation8 + $0x3b8] sm:$0xff]
    %v418 = vld [vmem:[#allocation8 + $0x3c0] sm:$0xff]
    %v419 = vld [vmem:[#allocation8 + $0x3c8] sm:$0xff]
    %v420 = vld [vmem:[#allocation8 + $0x3d0] sm:$0xff]
    %v421 = vld [vmem:[#allocation8 + $0x3d8] sm:$0xff]
    %v422 = vld [vmem:[#allocation8 + $0x3e0] sm:$0xff]
    %v423 = vld [vmem:[#allocation8 + $0x3e8] sm:$0xff]
    %v424 = vld [vmem:[#allocation8 + $0x3f0] sm:$0xff]
    %v425 = vld [vmem:[#allocation8 + $0x3f8] sm:$0xff]
    %v426 = vld [vmem:[#allocation10] sm:$0xf]
    %427 = vmatpush.msra.mxu0 %v294
    %428 = vmatpush.msra.mxu0 %v290
    %429 = vmatpush.msra.mxu0 %v286
    %430 = vmatpush.msra.mxu0 %v282
    %431 = vmatpush.msra.mxu0 %v278
    %432 = vmatpush.msra.mxu0 %v274
    %433 = vmatpush.msra.mxu0 %v270
    %434 = vmatpush.msra.mxu0 %v266
    %435 = vmatpush.msra.mxu0 %v262
    %436 = vmatpush.msra.mxu0 %v258
    %437 = vmatpush.msra.mxu0 %v254
    %438 = vmatpush.msra.mxu0 %v250
    %439 = vmatpush.msra.mxu0 %v246
    %440 = vmatpush.msra.mxu0 %v242
    %441 = vmatpush.msra.mxu0 %v238
    %442 = vmatpush.msra.mxu0 %v234
    %443 = vmatmul.f32.gmra.mxu0 0.0
    %v444 = vpop.f32.mrf.mxu0
    %v445 = vadd.f32 0.0, %v444
    %446 = vdwg.mxu0
    %447 = vmatpush.msra.mxu0 %v295
    %448 = vmatpush.msra.mxu0 %v291
    %449 = vmatpush.msra.mxu0 %v287
    %450 = vmatpush.msra.mxu0 %v283
    %451 = vmatpush.msra.mxu0 %v279
    %452 = vmatpush.msra.mxu0 %v275
    %453 = vmatpush.msra.mxu0 %v271
    %454 = vmatpush.msra.mxu0 %v267
    %455 = vmatpush.msra.mxu0 %v263
    %456 = vmatpush.msra.mxu0 %v259
    %457 = vmatpush.msra.mxu0 %v255
    %458 = vmatpush.msra.mxu0 %v251
    %459 = vmatpush.msra.mxu0 %v247
    %460 = vmatpush.msra.mxu0 %v243
    %461 = vmatpush.msra.mxu0 %v239
    %462 = vmatpush.msra.mxu0 %v235
    %463 = vmatmul.f32.gmra.mxu0 0.0
    %v464 = vpop.f32.mrf.mxu0
    %v465 = vadd.f32 0.0, %v464
    %466 = vdwg.mxu0
    %467 = vmatpush.msra.mxu0 %v296
    %468 = vmatpush.msra.mxu0 %v292
    %469 = vmatpush.msra.mxu0 %v288
    %470 = vmatpush.msra.mxu0 %v284
    %471 = vmatpush.msra.mxu0 %v280
    %472 = vmatpush.msra.mxu0 %v276
    %473 = vmatpush.msra.mxu0 %v272
    %474 = vmatpush.msra.mxu0 %v268
    %475 = vmatpush.msra.mxu0 %v264
    %476 = vmatpush.msra.mxu0 %v260
    %477 = vmatpush.msra.mxu0 %v256
    %478 = vmatpush.msra.mxu0 %v252
    %479 = vmatpush.msra.mxu0 %v248
    %480 = vmatpush.msra.mxu0 %v244
    %481 = vmatpush.msra.mxu0 %v240
    %482 = vmatpush.msra.mxu0 %v236
    %483 = vmatmul.f32.gmra.mxu0 0.0
    %v484 = vpop.f32.mrf.mxu0
    %v485 = vadd.f32 0.0, %v484
    %486 = vdwg.mxu0
    %487 = vmatpush.msra.mxu0 %v297
    %488 = vmatpush.msra.mxu0 %v293
    %489 = vmatpush.msra.mxu0 %v289
    %490 = vmatpush.msra.mxu0 %v285
    %491 = vmatpush.msra.mxu0 %v281
    %492 = vmatpush.msra.mxu0 %v277
    %493 = vmatpush.msra.mxu0 %v273
    %494 = vmatpush.msra.mxu0 %v269
    %495 = vmatpush.msra.mxu0 %v265
    %496 = vmatpush.msra.mxu0 %v261
    %497 = vmatpush.msra.mxu0 %v257
    %498 = vmatpush.msra.mxu0 %v253
    %499 = vmatpush.msra.mxu0 %v249
    %500 = vmatpush.msra.mxu0 %v245
    %501 = vmatpush.msra.mxu0 %v241
    %502 = vmatpush.msra.mxu0 %v237
    %503 = vmatmul.f32.gmra.mxu0 0.0
    %v504 = vpop.f32.mrf.mxu0
    %v505 = vadd.f32 0.0, %v504
    %506 = vdwg.mxu0
    %v507 = vadd.f32 %v160, %v445
    %v508 = vadd.f32 %v183, %v465
    %v509 = vadd.f32 %v206, %v485
    %v510 = vadd.f32 %v229, %v505
    %v511 = vxor.u32 %v507, 2147483648
    %v512 = vmul.f32 %v511, 1.442695
    %v513 = vpow.pop %v512
    %v514 = vadd.f32 %v513, 1.0
    %v515 = vrcp.pop %v514
    %v516 = vmul.f32 %v514, %v515
    %v517 = vsub.f32 1.0, %v516
    %v518 = vmul.f32 %v515, %v517
    %v519 = vadd.f32 %v515, %v518
    %vm520 = vweird.f32 %v514
    %vm521 = vweird.f32 %v515
    %vm522 = vmor %vm520, %vm521
    %v523 = vsel %vm522, %v515, %v519
    %v524 = vand.u32 2147483647, %v514
    %vm525 = vcmp.eq.f32.partialorder %v524, 8.507059e+37
    %v526 = vand.u32 %v514, 2147483648
    %v527 = vor.u32 1.1754944e-38, %v526
    %v528 = vsel %vm525, %v527, %v523
    %v529 = vmul.f32 1.0, %v528
    %v530 = vxor.u32 %v508, 2147483648
    %v531 = vmul.f32 %v530, 1.442695
    %v532 = vpow.pop %v531
    %v533 = vadd.f32 %v532, 1.0
    %v534 = vrcp.pop %v533
    %v535 = vmul.f32 %v533, %v534
    %v536 = vsub.f32 1.0, %v535
    %v537 = vmul.f32 %v534, %v536
    %v538 = vadd.f32 %v534, %v537
    %vm539 = vweird.f32 %v533
    %vm540 = vweird.f32 %v534
    %vm541 = vmor %vm539, %vm540
    %v542 = vsel %vm541, %v534, %v538
    %v543 = vand.u32 2147483647, %v533
    %vm544 = vcmp.eq.f32.partialorder %v543, 8.507059e+37
    %v545 = vand.u32 %v533, 2147483648
    %v546 = vor.u32 1.1754944e-38, %v545
    %v547 = vsel %vm544, %v546, %v542
    %v548 = vmul.f32 1.0, %v547
    %v549 = vtanh.pop %v509
    %v550 = vxor.u32 %v510, 2147483648
    %v551 = vmul.f32 %v550, 1.442695
    %v552 = vpow.pop %v551
    %v553 = vadd.f32 %v552, 1.0
    %v554 = vrcp.pop %v553
    %v555 = vmul.f32 %v553, %v554
    %v556 = vsub.f32 1.0, %v555
    %v557 = vmul.f32 %v554, %v556
    %v558 = vadd.f32 %v554, %v557
    %vm559 = vweird.f32 %v553
    %vm560 = vweird.f32 %v554
    %vm561 = vmor %vm559, %vm560
    %v562 = vsel %vm561, %v554, %v558
    %v563 = vand.u32 2147483647, %v553
    %vm564 = vcmp.eq.f32.partialorder %v563, 8.507059e+37
    %v565 = vand.u32 %v553, 2147483648
    %v566 = vor.u32 1.1754944e-38, %v565
    %v567 = vsel %vm564, %v566, %v562
    %v568 = vmul.f32 1.0, %v567
    %v569 = vmul.f32 %v548, 0.0
    %v570 = vmul.f32 %v529, %v549
    %v571 = vadd.f32 %v569, %v570
    %v572 = vtanh.pop %v571
    %v573 = vmul.f32 %v568, %v572
    %v575 = vperm.slane %v426, 0
    %v576 = vperm.slane %v426, 1
    %v577 = vperm.slane %v426, 2
    %v578 = vperm.slane %v426, 3
    %583 = vmatpush.msra.mxu0 %v358
    %584 = vmatpush.msra.mxu0 %v354
    %585 = vmatpush.msra.mxu0 %v350
    %586 = vmatpush.msra.mxu0 %v346
    %587 = vmatpush.msra.mxu0 %v342
    %588 = vmatpush.msra.mxu0 %v338
    %589 = vmatpush.msra.mxu0 %v334
    %590 = vmatpush.msra.mxu0 %v330
    %591 = vmatpush.msra.mxu0 %v326
    %592 = vmatpush.msra.mxu0 %v322
    %593 = vmatpush.msra.mxu0 %v318
    %594 = vmatpush.msra.mxu0 %v314
    %595 = vmatpush.msra.mxu0 %v310
    %596 = vmatpush.msra.mxu0 %v306
    %597 = vmatpush.msra.mxu0 %v302
    %598 = vmatpush.msra.mxu0 %v298
    %599 = vmatmul.f32.gmra.mxu0 %v573
    %v600 = vpop.f32.mrf.mxu0
    %v601 = vadd.f32 %v575, %v600
    %602 = vdwg.mxu0
    %603 = vmatpush.msra.mxu0 %v422
    %604 = vmatpush.msra.mxu0 %v418
    %605 = vmatpush.msra.mxu0 %v414
    %606 = vmatpush.msra.mxu0 %v410
    %607 = vmatpush.msra.mxu0 %v406
    %608 = vmatpush.msra.mxu0 %v402
    %609 = vmatpush.msra.mxu0 %v398
    %610 = vmatpush.msra.mxu0 %v394
    %611 = vmatpush.msra.mxu0 %v390
    %612 = vmatpush.msra.mxu0 %v386
    %613 = vmatpush.msra.mxu0 %v382
    %614 = vmatpush.msra.mxu0 %v378
    %615 = vmatpush.msra.mxu0 %v374
    %616 = vmatpush.msra.mxu0 %v370
    %617 = vmatpush.msra.mxu0 %v366
    %618 = vmatpush.msra.mxu0 %v362
    %619 = vmatmul.f32.gmra.mxu0 0.0
    %v620 = vpop.f32.mrf.mxu0
    %v621 = vadd.f32 %v601, %v620
    %622 = vdwg.mxu0
    %623 = vmatpush.msra.mxu0 %v359
    %624 = vmatpush.msra.mxu0 %v355
    %625 = vmatpush.msra.mxu0 %v351
    %626 = vmatpush.msra.mxu0 %v347
    %627 = vmatpush.msra.mxu0 %v343
    %628 = vmatpush.msra.mxu0 %v339
    %629 = vmatpush.msra.mxu0 %v335
    %630 = vmatpush.msra.mxu0 %v331
    %631 = vmatpush.msra.mxu0 %v327
    %632 = vmatpush.msra.mxu0 %v323
    %633 = vmatpush.msra.mxu0 %v319
    %634 = vmatpush.msra.mxu0 %v315
    %635 = vmatpush.msra.mxu0 %v311
    %636 = vmatpush.msra.mxu0 %v307
    %637 = vmatpush.msra.mxu0 %v303
    %638 = vmatpush.msra.mxu0 %v299
    %639 = vmatmul.f32.gmra.mxu0 %v573
    %v640 = vpop.f32.mrf.mxu0
    %v641 = vadd.f32 %v576, %v640
    %642 = vdwg.mxu0
    %643 = vmatpush.msra.mxu0 %v423
    %644 = vmatpush.msra.mxu0 %v419
    %645 = vmatpush.msra.mxu0 %v415
    %646 = vmatpush.msra.mxu0 %v411
    %647 = vmatpush.msra.mxu0 %v407
    %648 = vmatpush.msra.mxu0 %v403
    %649 = vmatpush.msra.mxu0 %v399
    %650 = vmatpush.msra.mxu0 %v395
    %651 = vmatpush.msra.mxu0 %v391
    %652 = vmatpush.msra.mxu0 %v387
    %653 = vmatpush.msra.mxu0 %v383
    %654 = vmatpush.msra.mxu0 %v379
    %655 = vmatpush.msra.mxu0 %v375
    %656 = vmatpush.msra.mxu0 %v371
    %657 = vmatpush.msra.mxu0 %v367
    %658 = vmatpush.msra.mxu0 %v363
    %659 = vmatmul.f32.gmra.mxu0 0.0
    %v660 = vpop.f32.mrf.mxu0
    %v661 = vadd.f32 %v641, %v660
    %662 = vdwg.mxu0
    %663 = vmatpush.msra.mxu0 %v360
    %664 = vmatpush.msra.mxu0 %v356
    %665 = vmatpush.msra.mxu0 %v352
    %666 = vmatpush.msra.mxu0 %v348
    %667 = vmatpush.msra.mxu0 %v344
    %668 = vmatpush.msra.mxu0 %v340
    %669 = vmatpush.msra.mxu0 %v336
    %670 = vmatpush.msra.mxu0 %v332
    %671 = vmatpush.msra.mxu0 %v328
    %672 = vmatpush.msra.mxu0 %v324
    %673 = vmatpush.msra.mxu0 %v320
    %674 = vmatpush.msra.mxu0 %v316
    %675 = vmatpush.msra.mxu0 %v312
    %676 = vmatpush.msra.mxu0 %v308
    %677 = vmatpush.msra.mxu0 %v304
    %678 = vmatpush.msra.mxu0 %v300
    %679 = vmatmul.f32.gmra.mxu0 %v573
    %v680 = vpop.f32.mrf.mxu0
    %v681 = vadd.f32 %v577, %v680
    %682 = vdwg.mxu0
    %683 = vmatpush.msra.mxu0 %v424
    %684 = vmatpush.msra.mxu0 %v420
    %685 = vmatpush.msra.mxu0 %v416
    %686 = vmatpush.msra.mxu0 %v412
    %687 = vmatpush.msra.mxu0 %v408
    %688 = vmatpush.msra.mxu0 %v404
    %689 = vmatpush.msra.mxu0 %v400
    %690 = vmatpush.msra.mxu0 %v396
    %691 = vmatpush.msra.mxu0 %v392
    %692 = vmatpush.msra.mxu0 %v388
    %693 = vmatpush.msra.mxu0 %v384
    %694 = vmatpush.msra.mxu0 %v380
    %695 = vmatpush.msra.mxu0 %v376
    %696 = vmatpush.msra.mxu0 %v372
    %697 = vmatpush.msra.mxu0 %v368
    %698 = vmatpush.msra.mxu0 %v364
    %699 = vmatmul.f32.gmra.mxu0 0.0
    %v700 = vpop.f32.mrf.mxu0
    %v701 = vadd.f32 %v681, %v700
    %702 = vdwg.mxu0
    %703 = vmatpush.msra.mxu0 %v361
    %704 = vmatpush.msra.mxu0 %v357
    %705 = vmatpush.msra.mxu0 %v353
    %706 = vmatpush.msra.mxu0 %v349
    %707 = vmatpush.msra.mxu0 %v345
    %708 = vmatpush.msra.mxu0 %v341
    %709 = vmatpush.msra.mxu0 %v337
    %710 = vmatpush.msra.mxu0 %v333
    %711 = vmatpush.msra.mxu0 %v329
    %712 = vmatpush.msra.mxu0 %v325
    %713 = vmatpush.msra.mxu0 %v321
    %714 = vmatpush.msra.mxu0 %v317
    %715 = vmatpush.msra.mxu0 %v313
    %716 = vmatpush.msra.mxu0 %v309
    %717 = vmatpush.msra.mxu0 %v305
    %718 = vmatpush.msra.mxu0 %v301
    %719 = vmatmul.f32.gmra.mxu0 %v573
    %v720 = vpop.f32.mrf.mxu0
    %v721 = vadd.f32 %v578, %v720
    %722 = vdwg.mxu0
    %723 = vmatpush.msra.mxu0 %v425
    %724 = vmatpush.msra.mxu0 %v421
    %725 = vmatpush.msra.mxu0 %v417
    %726 = vmatpush.msra.mxu0 %v413
    %727 = vmatpush.msra.mxu0 %v409
    %728 = vmatpush.msra.mxu0 %v405
    %729 = vmatpush.msra.mxu0 %v401
    %730 = vmatpush.msra.mxu0 %v397
    %731 = vmatpush.msra.mxu0 %v393
    %732 = vmatpush.msra.mxu0 %v389
    %733 = vmatpush.msra.mxu0 %v385
    %734 = vmatpush.msra.mxu0 %v381
    %735 = vmatpush.msra.mxu0 %v377
    %736 = vmatpush.msra.mxu0 %v373
    %737 = vmatpush.msra.mxu0 %v369
    %738 = vmatpush.msra.mxu0 %v365
    %739 = vmatmul.f32.gmra.mxu0 0.0
    %v740 = vpop.f32.mrf.mxu0
    %v741 = vadd.f32 %v721, %v740
    %742 = vdwg.mxu0
    %v743 = vxor.u32 %v621, 2147483648
    %v744 = vmul.f32 %v743, 1.442695
    %v745 = vpow.pop %v744
    %v746 = vadd.f32 %v745, 1.0
    %v747 = vrcp.pop %v746
    %v748 = vmul.f32 %v746, %v747
    %v749 = vsub.f32 1.0, %v748
    %v750 = vmul.f32 %v747, %v749
    %v751 = vadd.f32 %v747, %v750
    %vm752 = vweird.f32 %v746
    %vm753 = vweird.f32 %v747
    %vm754 = vmor %vm752, %vm753
    %v755 = vsel %vm754, %v747, %v751
    %v756 = vand.u32 2147483647, %v746
    %vm757 = vcmp.eq.f32.partialorder %v756, 8.507059e+37
    %v758 = vand.u32 %v746, 2147483648
    %v759 = vor.u32 1.1754944e-38, %v758
    %v760 = vsel %vm757, %v759, %v755
    %v761 = vmul.f32 1.0, %v760
    %v762 = vxor.u32 %v661, 2147483648
    %v763 = vmul.f32 %v762, 1.442695
    %v764 = vpow.pop %v763
    %v765 = vadd.f32 %v764, 1.0
    %v766 = vrcp.pop %v765
    %v767 = vmul.f32 %v765, %v766
    %v768 = vsub.f32 1.0, %v767
    %v769 = vmul.f32 %v766, %v768
    %v770 = vadd.f32 %v766, %v769
    %vm771 = vweird.f32 %v765
    %vm772 = vweird.f32 %v766
    %vm773 = vmor %vm771, %vm772
    %v774 = vsel %vm773, %v766, %v770
    %v775 = vand.u32 2147483647, %v765
    %vm776 = vcmp.eq.f32.partialorder %v775, 8.507059e+37
    %v777 = vand.u32 %v765, 2147483648
    %v778 = vor.u32 1.1754944e-38, %v777
    %v779 = vsel %vm776, %v778, %v774
    %v780 = vmul.f32 1.0, %v779
    %v781 = vtanh.pop %v701
    %v782 = vxor.u32 %v741, 2147483648
    %v783 = vmul.f32 %v782, 1.442695
    %v784 = vpow.pop %v783
    %v785 = vadd.f32 %v784, 1.0
    %v786 = vrcp.pop %v785
    %v787 = vmul.f32 %v785, %v786
    %v788 = vsub.f32 1.0, %v787
    %v789 = vmul.f32 %v786, %v788
    %v790 = vadd.f32 %v786, %v789
    %vm791 = vweird.f32 %v785
    %vm792 = vweird.f32 %v786
    %vm793 = vmor %vm791, %vm792
    %v794 = vsel %vm793, %v786, %v790
    %v795 = vand.u32 2147483647, %v785
    %vm796 = vcmp.eq.f32.partialorder %v795, 8.507059e+37
    %v797 = vand.u32 %v785, 2147483648
    %v798 = vor.u32 1.1754944e-38, %v797
    %v799 = vsel %vm796, %v798, %v794
    %v800 = vmul.f32 1.0, %v799
    %v801 = vmul.f32 %v780, 0.0
    %v802 = vmul.f32 %v761, %v781
    %v803 = vadd.f32 %v801, %v802
    %v804 = vtanh.pop %v803
    %v805 = vmul.f32 %v800, %v804
    %806 = vmatpush.msra.mxu0 %v294
    %807 = vmatpush.msra.mxu0 %v290
    %808 = vmatpush.msra.mxu0 %v286
    %809 = vmatpush.msra.mxu0 %v282
    %810 = vmatpush.msra.mxu0 %v278
    %811 = vmatpush.msra.mxu0 %v274
    %812 = vmatpush.msra.mxu0 %v270
    %813 = vmatpush.msra.mxu0 %v266
    %814 = vmatpush.msra.mxu0 %v262
    %815 = vmatpush.msra.mxu0 %v258
    %816 = vmatpush.msra.mxu0 %v254
    %817 = vmatpush.msra.mxu0 %v250
    %818 = vmatpush.msra.mxu0 %v246
    %819 = vmatpush.msra.mxu0 %v242
    %820 = vmatpush.msra.mxu0 %v238
    %821 = vmatpush.msra.mxu0 %v234
    %822 = vmatmul.f32.gmra.mxu0 %v573
    %v823 = vpop.f32.mrf.mxu0
    %v824 = vadd.f32 0.0, %v823
    %825 = vdwg.mxu0
    %826 = vmatpush.msra.mxu0 %v295
    %827 = vmatpush.msra.mxu0 %v291
    %828 = vmatpush.msra.mxu0 %v287
    %829 = vmatpush.msra.mxu0 %v283
    %830 = vmatpush.msra.mxu0 %v279
    %831 = vmatpush.msra.mxu0 %v275
    %832 = vmatpush.msra.mxu0 %v271
    %833 = vmatpush.msra.mxu0 %v267
    %834 = vmatpush.msra.mxu0 %v263
    %835 = vmatpush.msra.mxu0 %v259
    %836 = vmatpush.msra.mxu0 %v255
    %837 = vmatpush.msra.mxu0 %v251
    %838 = vmatpush.msra.mxu0 %v247
    %839 = vmatpush.msra.mxu0 %v243
    %840 = vmatpush.msra.mxu0 %v239
    %841 = vmatpush.msra.mxu0 %v235
    %842 = vmatmul.f32.gmra.mxu0 %v573
    %v843 = vpop.f32.mrf.mxu0
    %v844 = vadd.f32 0.0, %v843
    %845 = vdwg.mxu0
    %846 = vmatpush.msra.mxu0 %v296
    %847 = vmatpush.msra.mxu0 %v292
    %848 = vmatpush.msra.mxu0 %v288
    %849 = vmatpush.msra.mxu0 %v284
    %850 = vmatpush.msra.mxu0 %v280
    %851 = vmatpush.msra.mxu0 %v276
    %852 = vmatpush.msra.mxu0 %v272
    %853 = vmatpush.msra.mxu0 %v268
    %854 = vmatpush.msra.mxu0 %v264
    %855 = vmatpush.msra.mxu0 %v260
    %856 = vmatpush.msra.mxu0 %v256
    %857 = vmatpush.msra.mxu0 %v252
    %858 = vmatpush.msra.mxu0 %v248
    %859 = vmatpush.msra.mxu0 %v244
    %860 = vmatpush.msra.mxu0 %v240
    %861 = vmatpush.msra.mxu0 %v236
    %862 = vmatmul.f32.gmra.mxu0 %v573
    %v863 = vpop.f32.mrf.mxu0
    %v864 = vadd.f32 0.0, %v863
    %865 = vdwg.mxu0
    %866 = vmatpush.msra.mxu0 %v297
    %867 = vmatpush.msra.mxu0 %v293
    %868 = vmatpush.msra.mxu0 %v289
    %869 = vmatpush.msra.mxu0 %v285
    %870 = vmatpush.msra.mxu0 %v281
    %871 = vmatpush.msra.mxu0 %v277
    %872 = vmatpush.msra.mxu0 %v273
    %873 = vmatpush.msra.mxu0 %v269
    %874 = vmatpush.msra.mxu0 %v265
    %875 = vmatpush.msra.mxu0 %v261
    %876 = vmatpush.msra.mxu0 %v257
    %877 = vmatpush.msra.mxu0 %v253
    %878 = vmatpush.msra.mxu0 %v249
    %879 = vmatpush.msra.mxu0 %v245
    %880 = vmatpush.msra.mxu0 %v241
    %881 = vmatpush.msra.mxu0 %v237
    %882 = vmatmul.f32.gmra.mxu0 %v573
    %v883 = vpop.f32.mrf.mxu0
    %v884 = vadd.f32 0.0, %v883
    %885 = vdwg.mxu0
    %v890 = vrot.slane %v824, 6
    %v891 = vrot.slane %v844, 6
    %v892 = vrot.slane %v864, 6
    %v893 = vrot.slane %v884, 6
    %v898 = vadd.f32 %v160, %v890
    %v899 = vadd.f32 %v183, %v891
    %v900 = vadd.f32 %v206, %v892
    %v901 = vadd.f32 %v229, %v893
    %v902 = vxor.u32 %v898, 2147483648
    %v903 = vmul.f32 %v902, 1.442695
    %v904 = vpow.pop %v903
    %v905 = vadd.f32 %v904, 1.0
    %v906 = vrcp.pop %v905
    %v907 = vmul.f32 %v905, %v906
    %v908 = vsub.f32 1.0, %v907
    %v909 = vmul.f32 %v906, %v908
    %v910 = vadd.f32 %v906, %v909
    %vm911 = vweird.f32 %v905
    %vm912 = vweird.f32 %v906
    %vm913 = vmor %vm911, %vm912
    %v914 = vsel %vm913, %v906, %v910
    %v915 = vand.u32 2147483647, %v905
    %vm916 = vcmp.eq.f32.partialorder %v915, 8.507059e+37
    %v917 = vand.u32 %v905, 2147483648
    %v918 = vor.u32 1.1754944e-38, %v917
    %v919 = vsel %vm916, %v918, %v914
    %v920 = vmul.f32 1.0, %v919
    %v921 = vxor.u32 %v899, 2147483648
    %v922 = vmul.f32 %v921, 1.442695
    %v923 = vpow.pop %v922
    %v924 = vadd.f32 %v923, 1.0
    %v925 = vrcp.pop %v924
    %v926 = vmul.f32 %v924, %v925
    %v927 = vsub.f32 1.0, %v926
    %v928 = vmul.f32 %v925, %v927
    %v929 = vadd.f32 %v925, %v928
    %vm930 = vweird.f32 %v924
    %vm931 = vweird.f32 %v925
    %vm932 = vmor %vm930, %vm931
    %v933 = vsel %vm932, %v925, %v929
    %v934 = vand.u32 2147483647, %v924
    %vm935 = vcmp.eq.f32.partialorder %v934, 8.507059e+37
    %v936 = vand.u32 %v924, 2147483648
    %v937 = vor.u32 1.1754944e-38, %v936
    %v938 = vsel %vm935, %v937, %v933
    %v939 = vmul.f32 1.0, %v938
    %v940 = vtanh.pop %v900
    %v941 = vxor.u32 %v901, 2147483648
    %v942 = vmul.f32 %v941, 1.442695
    %v943 = vpow.pop %v942
    %v944 = vadd.f32 %v943, 1.0
    %v945 = vrcp.pop %v944
    %v946 = vmul.f32 %v944, %v945
    %v947 = vsub.f32 1.0, %v946
    %v948 = vmul.f32 %v945, %v947
    %v949 = vadd.f32 %v945, %v948
    %vm950 = vweird.f32 %v944
    %vm951 = vweird.f32 %v945
    %vm952 = vmor %vm950, %vm951
    %v953 = vsel %vm952, %v945, %v949
    %v954 = vand.u32 2147483647, %v944
    %vm955 = vcmp.eq.f32.partialorder %v954, 8.507059e+37
    %v956 = vand.u32 %v944, 2147483648
    %v957 = vor.u32 1.1754944e-38, %v956
    %v958 = vsel %vm955, %v957, %v953
    %v959 = vmul.f32 1.0, %v958
    %v961 = vrot.slane %v571, 6
    %v963 = vmul.f32 %v939, %v961
    %v964 = vmul.f32 %v920, %v940
    %v965 = vadd.f32 %v963, %v964
    %v966 = vtanh.pop %v965
    %v967 = vmul.f32 %v959, %v966
    %v969 = vrot.slane %v805, 6
    %v971 = vrot.slane %v967, 2
    %v972 = vrot.slane %v969, 2
    %975 = vmatpush.msra.mxu0 %v358
    %976 = vmatpush.msra.mxu0 %v354
    %977 = vmatpush.msra.mxu0 %v350
    %978 = vmatpush.msra.mxu0 %v346
    %979 = vmatpush.msra.mxu0 %v342
    %980 = vmatpush.msra.mxu0 %v338
    %981 = vmatpush.msra.mxu0 %v334
    %982 = vmatpush.msra.mxu0 %v330
    %983 = vmatpush.msra.mxu0 %v326
    %984 = vmatpush.msra.mxu0 %v322
    %985 = vmatpush.msra.mxu0 %v318
    %986 = vmatpush.msra.mxu0 %v314
    %987 = vmatpush.msra.mxu0 %v310
    %988 = vmatpush.msra.mxu0 %v306
    %989 = vmatpush.msra.mxu0 %v302
    %990 = vmatpush.msra.mxu0 %v298
    %991 = vmatmul.f32.gmra.mxu0 %v971
    %v992 = vpop.f32.mrf.mxu0
    %v993 = vadd.f32 %v575, %v992
    %994 = vdwg.mxu0
    %995 = vmatpush.msra.mxu0 %v422
    %996 = vmatpush.msra.mxu0 %v418
    %997 = vmatpush.msra.mxu0 %v414
    %998 = vmatpush.msra.mxu0 %v410
    %999 = vmatpush.msra.mxu0 %v406
    %1000 = vmatpush.msra.mxu0 %v402
    %1001 = vmatpush.msra.mxu0 %v398
    %1002 = vmatpush.msra.mxu0 %v394
    %1003 = vmatpush.msra.mxu0 %v390
    %1004 = vmatpush.msra.mxu0 %v386
    %1005 = vmatpush.msra.mxu0 %v382
    %1006 = vmatpush.msra.mxu0 %v378
    %1007 = vmatpush.msra.mxu0 %v374
    %1008 = vmatpush.msra.mxu0 %v370
    %1009 = vmatpush.msra.mxu0 %v366
    %1010 = vmatpush.msra.mxu0 %v362
    %1011 = vmatmul.f32.gmra.mxu0 %v972
    %v1012 = vpop.f32.mrf.mxu0
    %v1013 = vadd.f32 %v993, %v1012
    %1014 = vdwg.mxu0
    %1015 = vmatpush.msra.mxu0 %v359
    %1016 = vmatpush.msra.mxu0 %v355
    %1017 = vmatpush.msra.mxu0 %v351
    %1018 = vmatpush.msra.mxu0 %v347
    %1019 = vmatpush.msra.mxu0 %v343
    %1020 = vmatpush.msra.mxu0 %v339
    %1021 = vmatpush.msra.mxu0 %v335
    %1022 = vmatpush.msra.mxu0 %v331
    %1023 = vmatpush.msra.mxu0 %v327
    %1024 = vmatpush.msra.mxu0 %v323
    %1025 = vmatpush.msra.mxu0 %v319
    %1026 = vmatpush.msra.mxu0 %v315
    %1027 = vmatpush.msra.mxu0 %v311
    %1028 = vmatpush.msra.mxu0 %v307
    %1029 = vmatpush.msra.mxu0 %v303
    %1030 = vmatpush.msra.mxu0 %v299
    %1031 = vmatmul.f32.gmra.mxu0 %v971
    %v1032 = vpop.f32.mrf.mxu0
    %v1033 = vadd.f32 %v576, %v1032
    %1034 = vdwg.mxu0
    %1035 = vmatpush.msra.mxu0 %v423
    %1036 = vmatpush.msra.mxu0 %v419
    %1037 = vmatpush.msra.mxu0 %v415
    %1038 = vmatpush.msra.mxu0 %v411
    %1039 = vmatpush.msra.mxu0 %v407
    %1040 = vmatpush.msra.mxu0 %v403
    %1041 = vmatpush.msra.mxu0 %v399
    %1042 = vmatpush.msra.mxu0 %v395
    %1043 = vmatpush.msra.mxu0 %v391
    %1044 = vmatpush.msra.mxu0 %v387
    %1045 = vmatpush.msra.mxu0 %v383
    %1046 = vmatpush.msra.mxu0 %v379
    %1047 = vmatpush.msra.mxu0 %v375
    %1048 = vmatpush.msra.mxu0 %v371
    %1049 = vmatpush.msra.mxu0 %v367
    %1050 = vmatpush.msra.mxu0 %v363
    %1051 = vmatmul.f32.gmra.mxu0 %v972
    %v1052 = vpop.f32.mrf.mxu0
    %v1053 = vadd.f32 %v1033, %v1052
    %1054 = vdwg.mxu0
    %1055 = vmatpush.msra.mxu0 %v360
    %1056 = vmatpush.msra.mxu0 %v356
    %1057 = vmatpush.msra.mxu0 %v352
    %1058 = vmatpush.msra.mxu0 %v348
    %1059 = vmatpush.msra.mxu0 %v344
    %1060 = vmatpush.msra.mxu0 %v340
    %1061 = vmatpush.msra.mxu0 %v336
    %1062 = vmatpush.msra.mxu0 %v332
    %1063 = vmatpush.msra.mxu0 %v328
    %1064 = vmatpush.msra.mxu0 %v324
    %1065 = vmatpush.msra.mxu0 %v320
    %1066 = vmatpush.msra.mxu0 %v316
    %1067 = vmatpush.msra.mxu0 %v312
    %1068 = vmatpush.msra.mxu0 %v308
    %1069 = vmatpush.msra.mxu0 %v304
    %1070 = vmatpush.msra.mxu0 %v300
    %1071 = vmatmul.f32.gmra.mxu0 %v971
    %v1072 = vpop.f32.mrf.mxu0
    %v1073 = vadd.f32 %v577, %v1072
    %1074 = vdwg.mxu0
    %1075 = vmatpush.msra.mxu0 %v424
    %1076 = vmatpush.msra.mxu0 %v420
    %1077 = vmatpush.msra.mxu0 %v416
    %1078 = vmatpush.msra.mxu0 %v412
    %1079 = vmatpush.msra.mxu0 %v408
    %1080 = vmatpush.msra.mxu0 %v404
    %1081 = vmatpush.msra.mxu0 %v400
    %1082 = vmatpush.msra.mxu0 %v396
    %1083 = vmatpush.msra.mxu0 %v392
    %1084 = vmatpush.msra.mxu0 %v388
    %1085 = vmatpush.msra.mxu0 %v384
    %1086 = vmatpush.msra.mxu0 %v380
    %1087 = vmatpush.msra.mxu0 %v376
    %1088 = vmatpush.msra.mxu0 %v372
    %1089 = vmatpush.msra.mxu0 %v368
    %1090 = vmatpush.msra.mxu0 %v364
    %1091 = vmatmul.f32.gmra.mxu0 %v972
    %v1092 = vpop.f32.mrf.mxu0
    %v1093 = vadd.f32 %v1073, %v1092
    %1094 = vdwg.mxu0
    %1095 = vmatpush.msra.mxu0 %v361
    %1096 = vmatpush.msra.mxu0 %v357
    %1097 = vmatpush.msra.mxu0 %v353
    %1098 = vmatpush.msra.mxu0 %v349
    %1099 = vmatpush.msra.mxu0 %v345
    %1100 = vmatpush.msra.mxu0 %v341
    %1101 = vmatpush.msra.mxu0 %v337
    %1102 = vmatpush.msra.mxu0 %v333
    %1103 = vmatpush.msra.mxu0 %v329
    %1104 = vmatpush.msra.mxu0 %v325
    %1105 = vmatpush.msra.mxu0 %v321
    %1106 = vmatpush.msra.mxu0 %v317
    %1107 = vmatpush.msra.mxu0 %v313
    %1108 = vmatpush.msra.mxu0 %v309
    %1109 = vmatpush.msra.mxu0 %v305
    %1110 = vmatpush.msra.mxu0 %v301
    %1111 = vmatmul.f32.gmra.mxu0 %v971
    %v1112 = vpop.f32.mrf.mxu0
    %v1113 = vadd.f32 %v578, %v1112
    %1114 = vdwg.mxu0
    %1115 = vmatpush.msra.mxu0 %v425
    %1116 = vmatpush.msra.mxu0 %v421
    %1117 = vmatpush.msra.mxu0 %v417
    %1118 = vmatpush.msra.mxu0 %v413
    %1119 = vmatpush.msra.mxu0 %v409
    %1120 = vmatpush.msra.mxu0 %v405
    %1121 = vmatpush.msra.mxu0 %v401
    %1122 = vmatpush.msra.mxu0 %v397
    %1123 = vmatpush.msra.mxu0 %v393
    %1124 = vmatpush.msra.mxu0 %v389
    %1125 = vmatpush.msra.mxu0 %v385
    %1126 = vmatpush.msra.mxu0 %v381
    %1127 = vmatpush.msra.mxu0 %v377
    %1128 = vmatpush.msra.mxu0 %v373
    %1129 = vmatpush.msra.mxu0 %v369
    %1130 = vmatpush.msra.mxu0 %v365
    %1131 = vmatmul.f32.gmra.mxu0 %v972
    %v1132 = vpop.f32.mrf.mxu0
    %v1133 = vadd.f32 %v1113, %v1132
    %1134 = vdwg.mxu0
    %v1135 = vxor.u32 %v1013, 2147483648
    %v1136 = vmul.f32 %v1135, 1.442695
    %v1137 = vpow.pop %v1136
    %v1138 = vadd.f32 %v1137, 1.0
    %v1139 = vrcp.pop %v1138
    %v1140 = vmul.f32 %v1138, %v1139
    %v1141 = vsub.f32 1.0, %v1140
    %v1142 = vmul.f32 %v1139, %v1141
    %v1143 = vadd.f32 %v1139, %v1142
    %vm1144 = vweird.f32 %v1138
    %vm1145 = vweird.f32 %v1139
    %vm1146 = vmor %vm1144, %vm1145
    %v1147 = vsel %vm1146, %v1139, %v1143
    %v1148 = vand.u32 2147483647, %v1138
    %vm1149 = vcmp.eq.f32.partialorder %v1148, 8.507059e+37
    %v1150 = vand.u32 %v1138, 2147483648
    %v1151 = vor.u32 1.1754944e-38, %v1150
    %v1152 = vsel %vm1149, %v1151, %v1147
    %v1153 = vmul.f32 1.0, %v1152
    %v1154 = vxor.u32 %v1053, 2147483648
    %v1155 = vmul.f32 %v1154, 1.442695
    %v1156 = vpow.pop %v1155
    %v1157 = vadd.f32 %v1156, 1.0
    %v1158 = vrcp.pop %v1157
    %v1159 = vmul.f32 %v1157, %v1158
    %v1160 = vsub.f32 1.0, %v1159
    %v1161 = vmul.f32 %v1158, %v1160
    %v1162 = vadd.f32 %v1158, %v1161
    %vm1163 = vweird.f32 %v1157
    %vm1164 = vweird.f32 %v1158
    %vm1165 = vmor %vm1163, %vm1164
    %v1166 = vsel %vm1165, %v1158, %v1162
    %v1167 = vand.u32 2147483647, %v1157
    %vm1168 = vcmp.eq.f32.partialorder %v1167, 8.507059e+37
    %v1169 = vand.u32 %v1157, 2147483648
    %v1170 = vor.u32 1.1754944e-38, %v1169
    %v1171 = vsel %vm1168, %v1170, %v1166
    %v1172 = vmul.f32 1.0, %v1171
    %v1173 = vtanh.pop %v1093
    %v1174 = vxor.u32 %v1133, 2147483648
    %v1175 = vmul.f32 %v1174, 1.442695
    %v1176 = vpow.pop %v1175
    %v1177 = vadd.f32 %v1176, 1.0
    %v1178 = vrcp.pop %v1177
    %v1179 = vmul.f32 %v1177, %v1178
    %v1180 = vsub.f32 1.0, %v1179
    %v1181 = vmul.f32 %v1178, %v1180
    %v1182 = vadd.f32 %v1178, %v1181
    %vm1183 = vweird.f32 %v1177
    %vm1184 = vweird.f32 %v1178
    %vm1185 = vmor %vm1183, %vm1184
    %v1186 = vsel %vm1185, %v1178, %v1182
    %v1187 = vand.u32 2147483647, %v1177
    %vm1188 = vcmp.eq.f32.partialorder %v1187, 8.507059e+37
    %v1189 = vand.u32 %v1177, 2147483648
    %v1190 = vor.u32 1.1754944e-38, %v1189
    %v1191 = vsel %vm1188, %v1190, %v1186
    %v1192 = vmul.f32 1.0, %v1191
    %v1193 = vmul.f32 %v1172, %v803
    %v1194 = vmul.f32 %v1153, %v1173
    %v1195 = vadd.f32 %v1193, %v1194
    %v1196 = vtanh.pop %v1195
    %v1197 = vmul.f32 %v1192, %v1196
    %1198 = vmatpush.msra.mxu0 %v294
    %1199 = vmatpush.msra.mxu0 %v290
    %1200 = vmatpush.msra.mxu0 %v286
    %1201 = vmatpush.msra.mxu0 %v282
    %1202 = vmatpush.msra.mxu0 %v278
    %1203 = vmatpush.msra.mxu0 %v274
    %1204 = vmatpush.msra.mxu0 %v270
    %1205 = vmatpush.msra.mxu0 %v266
    %1206 = vmatpush.msra.mxu0 %v262
    %1207 = vmatpush.msra.mxu0 %v258
    %1208 = vmatpush.msra.mxu0 %v254
    %1209 = vmatpush.msra.mxu0 %v250
    %1210 = vmatpush.msra.mxu0 %v246
    %1211 = vmatpush.msra.mxu0 %v242
    %1212 = vmatpush.msra.mxu0 %v238
    %1213 = vmatpush.msra.mxu0 %v234
    %1214 = vmatmul.f32.gmra.mxu0 %v971
    %v1215 = vpop.f32.mrf.mxu0
    %v1216 = vadd.f32 0.0, %v1215
    %1217 = vdwg.mxu0
    %1218 = vmatpush.msra.mxu0 %v295
    %1219 = vmatpush.msra.mxu0 %v291
    %1220 = vmatpush.msra.mxu0 %v287
    %1221 = vmatpush.msra.mxu0 %v283
    %1222 = vmatpush.msra.mxu0 %v279
    %1223 = vmatpush.msra.mxu0 %v275
    %1224 = vmatpush.msra.mxu0 %v271
    %1225 = vmatpush.msra.mxu0 %v267
    %1226 = vmatpush.msra.mxu0 %v263
    %1227 = vmatpush.msra.mxu0 %v259
    %1228 = vmatpush.msra.mxu0 %v255
    %1229 = vmatpush.msra.mxu0 %v251
    %1230 = vmatpush.msra.mxu0 %v247
    %1231 = vmatpush.msra.mxu0 %v243
    %1232 = vmatpush.msra.mxu0 %v239
    %1233 = vmatpush.msra.mxu0 %v235
    %1234 = vmatmul.f32.gmra.mxu0 %v971
    %v1235 = vpop.f32.mrf.mxu0
    %v1236 = vadd.f32 0.0, %v1235
    %1237 = vdwg.mxu0
    %1238 = vmatpush.msra.mxu0 %v296
    %1239 = vmatpush.msra.mxu0 %v292
    %1240 = vmatpush.msra.mxu0 %v288
    %1241 = vmatpush.msra.mxu0 %v284
    %1242 = vmatpush.msra.mxu0 %v280
    %1243 = vmatpush.msra.mxu0 %v276
    %1244 = vmatpush.msra.mxu0 %v272
    %1245 = vmatpush.msra.mxu0 %v268
    %1246 = vmatpush.msra.mxu0 %v264
    %1247 = vmatpush.msra.mxu0 %v260
    %1248 = vmatpush.msra.mxu0 %v256
    %1249 = vmatpush.msra.mxu0 %v252
    %1250 = vmatpush.msra.mxu0 %v248
    %1251 = vmatpush.msra.mxu0 %v244
    %1252 = vmatpush.msra.mxu0 %v240
    %1253 = vmatpush.msra.mxu0 %v236
    %1254 = vmatmul.f32.gmra.mxu0 %v971
    %v1255 = vpop.f32.mrf.mxu0
    %v1256 = vadd.f32 0.0, %v1255
    %1257 = vdwg.mxu0
    %1258 = vmatpush.msra.mxu0 %v297
    %1259 = vmatpush.msra.mxu0 %v293
    %1260 = vmatpush.msra.mxu0 %v289
    %1261 = vmatpush.msra.mxu0 %v285
    %1262 = vmatpush.msra.mxu0 %v281
    %1263 = vmatpush.msra.mxu0 %v277
    %1264 = vmatpush.msra.mxu0 %v273
    %1265 = vmatpush.msra.mxu0 %v269
    %1266 = vmatpush.msra.mxu0 %v265
    %1267 = vmatpush.msra.mxu0 %v261
    %1268 = vmatpush.msra.mxu0 %v257
    %1269 = vmatpush.msra.mxu0 %v253
    %1270 = vmatpush.msra.mxu0 %v249
    %1271 = vmatpush.msra.mxu0 %v245
    %1272 = vmatpush.msra.mxu0 %v241
    %1273 = vmatpush.msra.mxu0 %v237
    %1274 = vmatmul.f32.gmra.mxu0 %v971
    %v1275 = vpop.f32.mrf.mxu0
    %v1276 = vadd.f32 0.0, %v1275
    %1277 = vdwg.mxu0
    %v1282 = vrot.slane %v1216, 4
    %v1283 = vrot.slane %v1236, 4
    %v1284 = vrot.slane %v1256, 4
    %v1285 = vrot.slane %v1276, 4
    %v1290 = vadd.f32 %v160, %v1282
    %v1291 = vadd.f32 %v183, %v1283
    %v1292 = vadd.f32 %v206, %v1284
    %v1293 = vadd.f32 %v229, %v1285
    %v1294 = vxor.u32 %v1290, 2147483648
    %v1295 = vmul.f32 %v1294, 1.442695
    %v1296 = vpow.pop %v1295
    %v1297 = vadd.f32 %v1296, 1.0
    %v1298 = vrcp.pop %v1297
    %v1299 = vmul.f32 %v1297, %v1298
    %v1300 = vsub.f32 1.0, %v1299
    %v1301 = vmul.f32 %v1298, %v1300
    %v1302 = vadd.f32 %v1298, %v1301
    %vm1303 = vweird.f32 %v1297
    %vm1304 = vweird.f32 %v1298
    %vm1305 = vmor %vm1303, %vm1304
    %v1306 = vsel %vm1305, %v1298, %v1302
    %v1307 = vand.u32 2147483647, %v1297
    %vm1308 = vcmp.eq.f32.partialorder %v1307, 8.507059e+37
    %v1309 = vand.u32 %v1297, 2147483648
    %v1310 = vor.u32 1.1754944e-38, %v1309
    %v1311 = vsel %vm1308, %v1310, %v1306
    %v1312 = vmul.f32 1.0, %v1311
    %v1313 = vxor.u32 %v1291, 2147483648
    %v1314 = vmul.f32 %v1313, 1.442695
    %v1315 = vpow.pop %v1314
    %v1316 = vadd.f32 %v1315, 1.0
    %v1317 = vrcp.pop %v1316
    %v1318 = vmul.f32 %v1316, %v1317
    %v1319 = vsub.f32 1.0, %v1318
    %v1320 = vmul.f32 %v1317, %v1319
    %v1321 = vadd.f32 %v1317, %v1320
    %vm1322 = vweird.f32 %v1316
    %vm1323 = vweird.f32 %v1317
    %vm1324 = vmor %vm1322, %vm1323
    %v1325 = vsel %vm1324, %v1317, %v1321
    %v1326 = vand.u32 2147483647, %v1316
    %vm1327 = vcmp.eq.f32.partialorder %v1326, 8.507059e+37
    %v1328 = vand.u32 %v1316, 2147483648
    %v1329 = vor.u32 1.1754944e-38, %v1328
    %v1330 = vsel %vm1327, %v1329, %v1325
    %v1331 = vmul.f32 1.0, %v1330
    %v1332 = vtanh.pop %v1292
    %v1333 = vxor.u32 %v1293, 2147483648
    %v1334 = vmul.f32 %v1333, 1.442695
    %v1335 = vpow.pop %v1334
    %v1336 = vadd.f32 %v1335, 1.0
    %v1337 = vrcp.pop %v1336
    %v1338 = vmul.f32 %v1336, %v1337
    %v1339 = vsub.f32 1.0, %v1338
    %v1340 = vmul.f32 %v1337, %v1339
    %v1341 = vadd.f32 %v1337, %v1340
    %vm1342 = vweird.f32 %v1336
    %vm1343 = vweird.f32 %v1337
    %vm1344 = vmor %vm1342, %vm1343
    %v1345 = vsel %vm1344, %v1337, %v1341
    %v1346 = vand.u32 2147483647, %v1336
    %vm1347 = vcmp.eq.f32.partialorder %v1346, 8.507059e+37
    %v1348 = vand.u32 %v1336, 2147483648
    %v1349 = vor.u32 1.1754944e-38, %v1348
    %v1350 = vsel %vm1347, %v1349, %v1345
    %v1351 = vmul.f32 1.0, %v1350
    %v1353 = vrot.slane %v965, 6
    %v1355 = vmul.f32 %v1331, %v1353
    %v1356 = vmul.f32 %v1312, %v1332
    %v1357 = vadd.f32 %v1355, %v1356
    %v1358 = vtanh.pop %v1357
    %v1359 = vmul.f32 %v1351, %v1358
    %v1361 = vrot.slane %v1197, 4
    %v1363 = vrot.slane %v1359, 4
    %v1364 = vrot.slane %v1361, 4
    %1367 = vmatpush.msra.mxu0 %v358
    %1368 = vmatpush.msra.mxu0 %v354
    %1369 = vmatpush.msra.mxu0 %v350
    %1370 = vmatpush.msra.mxu0 %v346
    %1371 = vmatpush.msra.mxu0 %v342
    %1372 = vmatpush.msra.mxu0 %v338
    %1373 = vmatpush.msra.mxu0 %v334
    %1374 = vmatpush.msra.mxu0 %v330
    %1375 = vmatpush.msra.mxu0 %v326
    %1376 = vmatpush.msra.mxu0 %v322
    %1377 = vmatpush.msra.mxu0 %v318
    %1378 = vmatpush.msra.mxu0 %v314
    %1379 = vmatpush.msra.mxu0 %v310
    %1380 = vmatpush.msra.mxu0 %v306
    %1381 = vmatpush.msra.mxu0 %v302
    %1382 = vmatpush.msra.mxu0 %v298
    %1383 = vmatmul.f32.gmra.mxu0 %v1363
    %v1384 = vpop.f32.mrf.mxu0
    %v1385 = vadd.f32 %v575, %v1384
    %1386 = vdwg.mxu0
    %1387 = vmatpush.msra.mxu0 %v422
    %1388 = vmatpush.msra.mxu0 %v418
    %1389 = vmatpush.msra.mxu0 %v414
    %1390 = vmatpush.msra.mxu0 %v410
    %1391 = vmatpush.msra.mxu0 %v406
    %1392 = vmatpush.msra.mxu0 %v402
    %1393 = vmatpush.msra.mxu0 %v398
    %1394 = vmatpush.msra.mxu0 %v394
    %1395 = vmatpush.msra.mxu0 %v390
    %1396 = vmatpush.msra.mxu0 %v386
    %1397 = vmatpush.msra.mxu0 %v382
    %1398 = vmatpush.msra.mxu0 %v378
    %1399 = vmatpush.msra.mxu0 %v374
    %1400 = vmatpush.msra.mxu0 %v370
    %1401 = vmatpush.msra.mxu0 %v366
    %1402 = vmatpush.msra.mxu0 %v362
    %1403 = vmatmul.f32.gmra.mxu0 %v1364
    %v1404 = vpop.f32.mrf.mxu0
    %v1405 = vadd.f32 %v1385, %v1404
    %1406 = vdwg.mxu0
    %1407 = vmatpush.msra.mxu0 %v359
    %1408 = vmatpush.msra.mxu0 %v355
    %1409 = vmatpush.msra.mxu0 %v351
    %1410 = vmatpush.msra.mxu0 %v347
    %1411 = vmatpush.msra.mxu0 %v343
    %1412 = vmatpush.msra.mxu0 %v339
    %1413 = vmatpush.msra.mxu0 %v335
    %1414 = vmatpush.msra.mxu0 %v331
    %1415 = vmatpush.msra.mxu0 %v327
    %1416 = vmatpush.msra.mxu0 %v323
    %1417 = vmatpush.msra.mxu0 %v319
    %1418 = vmatpush.msra.mxu0 %v315
    %1419 = vmatpush.msra.mxu0 %v311
    %1420 = vmatpush.msra.mxu0 %v307
    %1421 = vmatpush.msra.mxu0 %v303
    %1422 = vmatpush.msra.mxu0 %v299
    %1423 = vmatmul.f32.gmra.mxu0 %v1363
    %v1424 = vpop.f32.mrf.mxu0
    %v1425 = vadd.f32 %v576, %v1424
    %1426 = vdwg.mxu0
    %1427 = vmatpush.msra.mxu0 %v423
    %1428 = vmatpush.msra.mxu0 %v419
    %1429 = vmatpush.msra.mxu0 %v415
    %1430 = vmatpush.msra.mxu0 %v411
    %1431 = vmatpush.msra.mxu0 %v407
    %1432 = vmatpush.msra.mxu0 %v403
    %1433 = vmatpush.msra.mxu0 %v399
    %1434 = vmatpush.msra.mxu0 %v395
    %1435 = vmatpush.msra.mxu0 %v391
    %1436 = vmatpush.msra.mxu0 %v387
    %1437 = vmatpush.msra.mxu0 %v383
    %1438 = vmatpush.msra.mxu0 %v379
    %1439 = vmatpush.msra.mxu0 %v375
    %1440 = vmatpush.msra.mxu0 %v371
    %1441 = vmatpush.msra.mxu0 %v367
    %1442 = vmatpush.msra.mxu0 %v363
    %1443 = vmatmul.f32.gmra.mxu0 %v1364
    %v1444 = vpop.f32.mrf.mxu0
    %v1445 = vadd.f32 %v1425, %v1444
    %1446 = vdwg.mxu0
    %1447 = vmatpush.msra.mxu0 %v360
    %1448 = vmatpush.msra.mxu0 %v356
    %1449 = vmatpush.msra.mxu0 %v352
    %1450 = vmatpush.msra.mxu0 %v348
    %1451 = vmatpush.msra.mxu0 %v344
    %1452 = vmatpush.msra.mxu0 %v340
    %1453 = vmatpush.msra.mxu0 %v336
    %1454 = vmatpush.msra.mxu0 %v332
    %1455 = vmatpush.msra.mxu0 %v328
    %1456 = vmatpush.msra.mxu0 %v324
    %1457 = vmatpush.msra.mxu0 %v320
    %1458 = vmatpush.msra.mxu0 %v316
    %1459 = vmatpush.msra.mxu0 %v312
    %1460 = vmatpush.msra.mxu0 %v308
    %1461 = vmatpush.msra.mxu0 %v304
    %1462 = vmatpush.msra.mxu0 %v300
    %1463 = vmatmul.f32.gmra.mxu0 %v1363
    %v1464 = vpop.f32.mrf.mxu0
    %v1465 = vadd.f32 %v577, %v1464
    %1466 = vdwg.mxu0
    %1467 = vmatpush.msra.mxu0 %v424
    %1468 = vmatpush.msra.mxu0 %v420
    %1469 = vmatpush.msra.mxu0 %v416
    %1470 = vmatpush.msra.mxu0 %v412
    %1471 = vmatpush.msra.mxu0 %v408
    %1472 = vmatpush.msra.mxu0 %v404
    %1473 = vmatpush.msra.mxu0 %v400
    %1474 = vmatpush.msra.mxu0 %v396
    %1475 = vmatpush.msra.mxu0 %v392
    %1476 = vmatpush.msra.mxu0 %v388
    %1477 = vmatpush.msra.mxu0 %v384
    %1478 = vmatpush.msra.mxu0 %v380
    %1479 = vmatpush.msra.mxu0 %v376
    %1480 = vmatpush.msra.mxu0 %v372
    %1481 = vmatpush.msra.mxu0 %v368
    %1482 = vmatpush.msra.mxu0 %v364
    %1483 = vmatmul.f32.gmra.mxu0 %v1364
    %v1484 = vpop.f32.mrf.mxu0
    %v1485 = vadd.f32 %v1465, %v1484
    %1486 = vdwg.mxu0
    %1487 = vmatpush.msra.mxu0 %v361
    %1488 = vmatpush.msra.mxu0 %v357
    %1489 = vmatpush.msra.mxu0 %v353
    %1490 = vmatpush.msra.mxu0 %v349
    %1491 = vmatpush.msra.mxu0 %v345
    %1492 = vmatpush.msra.mxu0 %v341
    %1493 = vmatpush.msra.mxu0 %v337
    %1494 = vmatpush.msra.mxu0 %v333
    %1495 = vmatpush.msra.mxu0 %v329
    %1496 = vmatpush.msra.mxu0 %v325
    %1497 = vmatpush.msra.mxu0 %v321
    %1498 = vmatpush.msra.mxu0 %v317
    %1499 = vmatpush.msra.mxu0 %v313
    %1500 = vmatpush.msra.mxu0 %v309
    %1501 = vmatpush.msra.mxu0 %v305
    %1502 = vmatpush.msra.mxu0 %v301
    %1503 = vmatmul.f32.gmra.mxu0 %v1363
    %v1504 = vpop.f32.mrf.mxu0
    %v1505 = vadd.f32 %v578, %v1504
    %1506 = vdwg.mxu0
    %1507 = vmatpush.msra.mxu0 %v425
    %1508 = vmatpush.msra.mxu0 %v421
    %1509 = vmatpush.msra.mxu0 %v417
    %1510 = vmatpush.msra.mxu0 %v413
    %1511 = vmatpush.msra.mxu0 %v409
    %1512 = vmatpush.msra.mxu0 %v405
    %1513 = vmatpush.msra.mxu0 %v401
    %1514 = vmatpush.msra.mxu0 %v397
    %1515 = vmatpush.msra.mxu0 %v393
    %1516 = vmatpush.msra.mxu0 %v389
    %1517 = vmatpush.msra.mxu0 %v385
    %1518 = vmatpush.msra.mxu0 %v381
    %1519 = vmatpush.msra.mxu0 %v377
    %1520 = vmatpush.msra.mxu0 %v373
    %1521 = vmatpush.msra.mxu0 %v369
    %1522 = vmatpush.msra.mxu0 %v365
    %1523 = vmatmul.f32.gmra.mxu0 %v1364
    %v1524 = vpop.f32.mrf.mxu0
    %v1525 = vadd.f32 %v1505, %v1524
    %1526 = vdwg.mxu0
    %v1527 = vxor.u32 %v1405, 2147483648
    %v1528 = vmul.f32 %v1527, 1.442695
    %v1529 = vpow.pop %v1528
    %v1530 = vadd.f32 %v1529, 1.0
    %v1531 = vrcp.pop %v1530
    %v1532 = vmul.f32 %v1530, %v1531
    %v1533 = vsub.f32 1.0, %v1532
    %v1534 = vmul.f32 %v1531, %v1533
    %v1535 = vadd.f32 %v1531, %v1534
    %vm1536 = vweird.f32 %v1530
    %vm1537 = vweird.f32 %v1531
    %vm1538 = vmor %vm1536, %vm1537
    %v1539 = vsel %vm1538, %v1531, %v1535
    %v1540 = vand.u32 2147483647, %v1530
    %vm1541 = vcmp.eq.f32.partialorder %v1540, 8.507059e+37
    %v1542 = vand.u32 %v1530, 2147483648
    %v1543 = vor.u32 1.1754944e-38, %v1542
    %v1544 = vsel %vm1541, %v1543, %v1539
    %v1545 = vmul.f32 1.0, %v1544
    %v1546 = vxor.u32 %v1445, 2147483648
    %v1547 = vmul.f32 %v1546, 1.442695
    %v1548 = vpow.pop %v1547
    %v1549 = vadd.f32 %v1548, 1.0
    %v1550 = vrcp.pop %v1549
    %v1551 = vmul.f32 %v1549, %v1550
    %v1552 = vsub.f32 1.0, %v1551
    %v1553 = vmul.f32 %v1550, %v1552
    %v1554 = vadd.f32 %v1550, %v1553
    %vm1555 = vweird.f32 %v1549
    %vm1556 = vweird.f32 %v1550
    %vm1557 = vmor %vm1555, %vm1556
    %v1558 = vsel %vm1557, %v1550, %v1554
    %v1559 = vand.u32 2147483647, %v1549
    %vm1560 = vcmp.eq.f32.partialorder %v1559, 8.507059e+37
    %v1561 = vand.u32 %v1549, 2147483648
    %v1562 = vor.u32 1.1754944e-38, %v1561
    %v1563 = vsel %vm1560, %v1562, %v1558
    %v1564 = vmul.f32 1.0, %v1563
    %v1565 = vtanh.pop %v1485
    %v1566 = vxor.u32 %v1525, 2147483648
    %v1567 = vmul.f32 %v1566, 1.442695
    %v1568 = vpow.pop %v1567
    %v1569 = vadd.f32 %v1568, 1.0
    %v1570 = vrcp.pop %v1569
    %v1571 = vmul.f32 %v1569, %v1570
    %v1572 = vsub.f32 1.0, %v1571
    %v1573 = vmul.f32 %v1570, %v1572
    %v1574 = vadd.f32 %v1570, %v1573
    %vm1575 = vweird.f32 %v1569
    %vm1576 = vweird.f32 %v1570
    %vm1577 = vmor %vm1575, %vm1576
    %v1578 = vsel %vm1577, %v1570, %v1574
    %v1579 = vand.u32 2147483647, %v1569
    %vm1580 = vcmp.eq.f32.partialorder %v1579, 8.507059e+37
    %v1581 = vand.u32 %v1569, 2147483648
    %v1582 = vor.u32 1.1754944e-38, %v1581
    %v1583 = vsel %vm1580, %v1582, %v1578
    %v1584 = vmul.f32 1.0, %v1583
    %v1585 = vmul.f32 %v1564, %v1195
    %v1586 = vmul.f32 %v1545, %v1565
    %v1587 = vadd.f32 %v1585, %v1586
    %v1588 = vtanh.pop %v1587
    %v1589 = vmul.f32 %v1584, %v1588
    %1590 = vmatpush.msra.mxu0 %v294
    %1591 = vmatpush.msra.mxu0 %v290
    %1592 = vmatpush.msra.mxu0 %v286
    %1593 = vmatpush.msra.mxu0 %v282
    %1594 = vmatpush.msra.mxu0 %v278
    %1595 = vmatpush.msra.mxu0 %v274
    %1596 = vmatpush.msra.mxu0 %v270
    %1597 = vmatpush.msra.mxu0 %v266
    %1598 = vmatpush.msra.mxu0 %v262
    %1599 = vmatpush.msra.mxu0 %v258
    %1600 = vmatpush.msra.mxu0 %v254
    %1601 = vmatpush.msra.mxu0 %v250
    %1602 = vmatpush.msra.mxu0 %v246
    %1603 = vmatpush.msra.mxu0 %v242
    %1604 = vmatpush.msra.mxu0 %v238
    %1605 = vmatpush.msra.mxu0 %v234
    %1606 = vmatmul.f32.gmra.mxu0 %v1363
    %v1607 = vpop.f32.mrf.mxu0
    %v1608 = vadd.f32 0.0, %v1607
    %1609 = vdwg.mxu0
    %1610 = vmatpush.msra.mxu0 %v295
    %1611 = vmatpush.msra.mxu0 %v291
    %1612 = vmatpush.msra.mxu0 %v287
    %1613 = vmatpush.msra.mxu0 %v283
    %1614 = vmatpush.msra.mxu0 %v279
    %1615 = vmatpush.msra.mxu0 %v275
    %1616 = vmatpush.msra.mxu0 %v271
    %1617 = vmatpush.msra.mxu0 %v267
    %1618 = vmatpush.msra.mxu0 %v263
    %1619 = vmatpush.msra.mxu0 %v259
    %1620 = vmatpush.msra.mxu0 %v255
    %1621 = vmatpush.msra.mxu0 %v251
    %1622 = vmatpush.msra.mxu0 %v247
    %1623 = vmatpush.msra.mxu0 %v243
    %1624 = vmatpush.msra.mxu0 %v239
    %1625 = vmatpush.msra.mxu0 %v235
    %1626 = vmatmul.f32.gmra.mxu0 %v1363
    %v1627 = vpop.f32.mrf.mxu0
    %v1628 = vadd.f32 0.0, %v1627
    %1629 = vdwg.mxu0
    %1630 = vmatpush.msra.mxu0 %v296
    %1631 = vmatpush.msra.mxu0 %v292
    %1632 = vmatpush.msra.mxu0 %v288
    %1633 = vmatpush.msra.mxu0 %v284
    %1634 = vmatpush.msra.mxu0 %v280
    %1635 = vmatpush.msra.mxu0 %v276
    %1636 = vmatpush.msra.mxu0 %v272
    %1637 = vmatpush.msra.mxu0 %v268
    %1638 = vmatpush.msra.mxu0 %v264
    %1639 = vmatpush.msra.mxu0 %v260
    %1640 = vmatpush.msra.mxu0 %v256
    %1641 = vmatpush.msra.mxu0 %v252
    %1642 = vmatpush.msra.mxu0 %v248
    %1643 = vmatpush.msra.mxu0 %v244
    %1644 = vmatpush.msra.mxu0 %v240
    %1645 = vmatpush.msra.mxu0 %v236
    %1646 = vmatmul.f32.gmra.mxu0 %v1363
    %v1647 = vpop.f32.mrf.mxu0
    %v1648 = vadd.f32 0.0, %v1647
    %1649 = vdwg.mxu0
    %1650 = vmatpush.msra.mxu0 %v297
    %1651 = vmatpush.msra.mxu0 %v293
    %1652 = vmatpush.msra.mxu0 %v289
    %1653 = vmatpush.msra.mxu0 %v285
    %1654 = vmatpush.msra.mxu0 %v281
    %1655 = vmatpush.msra.mxu0 %v277
    %1656 = vmatpush.msra.mxu0 %v273
    %1657 = vmatpush.msra.mxu0 %v269
    %1658 = vmatpush.msra.mxu0 %v265
    %1659 = vmatpush.msra.mxu0 %v261
    %1660 = vmatpush.msra.mxu0 %v257
    %1661 = vmatpush.msra.mxu0 %v253
    %1662 = vmatpush.msra.mxu0 %v249
    %1663 = vmatpush.msra.mxu0 %v245
    %1664 = vmatpush.msra.mxu0 %v241
    %1665 = vmatpush.msra.mxu0 %v237
    %1666 = vmatmul.f32.gmra.mxu0 %v1363
    %v1667 = vpop.f32.mrf.mxu0
    %v1668 = vadd.f32 0.0, %v1667
    %1669 = vdwg.mxu0
    %v1674 = vrot.slane %v1608, 2
    %v1675 = vrot.slane %v1628, 2
    %v1676 = vrot.slane %v1648, 2
    %v1677 = vrot.slane %v1668, 2
    %v1682 = vadd.f32 %v160, %v1674
    %v1683 = vadd.f32 %v183, %v1675
    %v1684 = vadd.f32 %v206, %v1676
    %v1685 = vadd.f32 %v229, %v1677
    %v1686 = vxor.u32 %v1682, 2147483648
    %v1687 = vmul.f32 %v1686, 1.442695
    %v1688 = vpow.pop %v1687
    %v1689 = vadd.f32 %v1688, 1.0
    %v1690 = vrcp.pop %v1689
    %v1691 = vmul.f32 %v1689, %v1690
    %v1692 = vsub.f32 1.0, %v1691
    %v1693 = vmul.f32 %v1690, %v1692
    %v1694 = vadd.f32 %v1690, %v1693
    %vm1695 = vweird.f32 %v1689
    %vm1696 = vweird.f32 %v1690
    %vm1697 = vmor %vm1695, %vm1696
    %v1698 = vsel %vm1697, %v1690, %v1694
    %v1699 = vand.u32 2147483647, %v1689
    %vm1700 = vcmp.eq.f32.partialorder %v1699, 8.507059e+37
    %v1701 = vand.u32 %v1689, 2147483648
    %v1702 = vor.u32 1.1754944e-38, %v1701
    %v1703 = vsel %vm1700, %v1702, %v1698
    %v1704 = vmul.f32 1.0, %v1703
    %v1705 = vxor.u32 %v1683, 2147483648
    %v1706 = vmul.f32 %v1705, 1.442695
    %v1707 = vpow.pop %v1706
    %v1708 = vadd.f32 %v1707, 1.0
    %v1709 = vrcp.pop %v1708
    %v1710 = vmul.f32 %v1708, %v1709
    %v1711 = vsub.f32 1.0, %v1710
    %v1712 = vmul.f32 %v1709, %v1711
    %v1713 = vadd.f32 %v1709, %v1712
    %vm1714 = vweird.f32 %v1708
    %vm1715 = vweird.f32 %v1709
    %vm1716 = vmor %vm1714, %vm1715
    %v1717 = vsel %vm1716, %v1709, %v1713
    %v1718 = vand.u32 2147483647, %v1708
    %vm1719 = vcmp.eq.f32.partialorder %v1718, 8.507059e+37
    %v1720 = vand.u32 %v1708, 2147483648
    %v1721 = vor.u32 1.1754944e-38, %v1720
    %v1722 = vsel %vm1719, %v1721, %v1717
    %v1723 = vmul.f32 1.0, %v1722
    %v1724 = vtanh.pop %v1684
    %v1725 = vxor.u32 %v1685, 2147483648
    %v1726 = vmul.f32 %v1725, 1.442695
    %v1727 = vpow.pop %v1726
    %v1728 = vadd.f32 %v1727, 1.0
    %v1729 = vrcp.pop %v1728
    %v1730 = vmul.f32 %v1728, %v1729
    %v1731 = vsub.f32 1.0, %v1730
    %v1732 = vmul.f32 %v1729, %v1731
    %v1733 = vadd.f32 %v1729, %v1732
    %vm1734 = vweird.f32 %v1728
    %vm1735 = vweird.f32 %v1729
    %vm1736 = vmor %vm1734, %vm1735
    %v1737 = vsel %vm1736, %v1729, %v1733
    %v1738 = vand.u32 2147483647, %v1728
    %vm1739 = vcmp.eq.f32.partialorder %v1738, 8.507059e+37
    %v1740 = vand.u32 %v1728, 2147483648
    %v1741 = vor.u32 1.1754944e-38, %v1740
    %v1742 = vsel %vm1739, %v1741, %v1737
    %v1743 = vmul.f32 1.0, %v1742
    %v1745 = vrot.slane %v1357, 6
    %v1747 = vmul.f32 %v1723, %v1745
    %v1748 = vmul.f32 %v1704, %v1724
    %v1749 = vadd.f32 %v1747, %v1748
    %v1750 = vtanh.pop %v1749
    %v1751 = vmul.f32 %v1743, %v1750
    %v1753 = vrot.slane %v1589, 2
    %v1755 = vrot.slane %v1751, 6
    %v1756 = vrot.slane %v1753, 6
    %1759 = vmatpush.msra.mxu0 %v358
    %1760 = vmatpush.msra.mxu0 %v354
    %1761 = vmatpush.msra.mxu0 %v350
    %1762 = vmatpush.msra.mxu0 %v346
    %1763 = vmatpush.msra.mxu0 %v342
    %1764 = vmatpush.msra.mxu0 %v338
    %1765 = vmatpush.msra.mxu0 %v334
    %1766 = vmatpush.msra.mxu0 %v330
    %1767 = vmatpush.msra.mxu0 %v326
    %1768 = vmatpush.msra.mxu0 %v322
    %1769 = vmatpush.msra.mxu0 %v318
    %1770 = vmatpush.msra.mxu0 %v314
    %1771 = vmatpush.msra.mxu0 %v310
    %1772 = vmatpush.msra.mxu0 %v306
    %1773 = vmatpush.msra.mxu0 %v302
    %1774 = vmatpush.msra.mxu0 %v298
    %1775 = vmatmul.f32.gmra.mxu0 %v1755
    %v1776 = vpop.f32.mrf.mxu0
    %v1777 = vadd.f32 %v575, %v1776
    %1778 = vdwg.mxu0
    %1779 = vmatpush.msra.mxu0 %v422
    %1780 = vmatpush.msra.mxu0 %v418
    %1781 = vmatpush.msra.mxu0 %v414
    %1782 = vmatpush.msra.mxu0 %v410
    %1783 = vmatpush.msra.mxu0 %v406
    %1784 = vmatpush.msra.mxu0 %v402
    %1785 = vmatpush.msra.mxu0 %v398
    %1786 = vmatpush.msra.mxu0 %v394
    %1787 = vmatpush.msra.mxu0 %v390
    %1788 = vmatpush.msra.mxu0 %v386
    %1789 = vmatpush.msra.mxu0 %v382
    %1790 = vmatpush.msra.mxu0 %v378
    %1791 = vmatpush.msra.mxu0 %v374
    %1792 = vmatpush.msra.mxu0 %v370
    %1793 = vmatpush.msra.mxu0 %v366
    %1794 = vmatpush.msra.mxu0 %v362
    %1795 = vmatmul.f32.gmra.mxu0 %v1756
    %v1796 = vpop.f32.mrf.mxu0
    %v1797 = vadd.f32 %v1777, %v1796
    %1798 = vdwg.mxu0
    %1799 = vmatpush.msra.mxu0 %v359
    %1800 = vmatpush.msra.mxu0 %v355
    %1801 = vmatpush.msra.mxu0 %v351
    %1802 = vmatpush.msra.mxu0 %v347
    %1803 = vmatpush.msra.mxu0 %v343
    %1804 = vmatpush.msra.mxu0 %v339
    %1805 = vmatpush.msra.mxu0 %v335
    %1806 = vmatpush.msra.mxu0 %v331
    %1807 = vmatpush.msra.mxu0 %v327
    %1808 = vmatpush.msra.mxu0 %v323
    %1809 = vmatpush.msra.mxu0 %v319
    %1810 = vmatpush.msra.mxu0 %v315
    %1811 = vmatpush.msra.mxu0 %v311
    %1812 = vmatpush.msra.mxu0 %v307
    %1813 = vmatpush.msra.mxu0 %v303
    %1814 = vmatpush.msra.mxu0 %v299
    %1815 = vmatmul.f32.gmra.mxu0 %v1755
    %v1816 = vpop.f32.mrf.mxu0
    %v1817 = vadd.f32 %v576, %v1816
    %1818 = vdwg.mxu0
    %1819 = vmatpush.msra.mxu0 %v423
    %1820 = vmatpush.msra.mxu0 %v419
    %1821 = vmatpush.msra.mxu0 %v415
    %1822 = vmatpush.msra.mxu0 %v411
    %1823 = vmatpush.msra.mxu0 %v407
    %1824 = vmatpush.msra.mxu0 %v403
    %1825 = vmatpush.msra.mxu0 %v399
    %1826 = vmatpush.msra.mxu0 %v395
    %1827 = vmatpush.msra.mxu0 %v391
    %1828 = vmatpush.msra.mxu0 %v387
    %1829 = vmatpush.msra.mxu0 %v383
    %1830 = vmatpush.msra.mxu0 %v379
    %1831 = vmatpush.msra.mxu0 %v375
    %1832 = vmatpush.msra.mxu0 %v371
    %1833 = vmatpush.msra.mxu0 %v367
    %1834 = vmatpush.msra.mxu0 %v363
    %1835 = vmatmul.f32.gmra.mxu0 %v1756
    %v1836 = vpop.f32.mrf.mxu0
    %v1837 = vadd.f32 %v1817, %v1836
    %1838 = vdwg.mxu0
    %1839 = vmatpush.msra.mxu0 %v360
    %1840 = vmatpush.msra.mxu0 %v356
    %1841 = vmatpush.msra.mxu0 %v352
    %1842 = vmatpush.msra.mxu0 %v348
    %1843 = vmatpush.msra.mxu0 %v344
    %1844 = vmatpush.msra.mxu0 %v340
    %1845 = vmatpush.msra.mxu0 %v336
    %1846 = vmatpush.msra.mxu0 %v332
    %1847 = vmatpush.msra.mxu0 %v328
    %1848 = vmatpush.msra.mxu0 %v324
    %1849 = vmatpush.msra.mxu0 %v320
    %1850 = vmatpush.msra.mxu0 %v316
    %1851 = vmatpush.msra.mxu0 %v312
    %1852 = vmatpush.msra.mxu0 %v308
    %1853 = vmatpush.msra.mxu0 %v304
    %1854 = vmatpush.msra.mxu0 %v300
    %1855 = vmatmul.f32.gmra.mxu0 %v1755
    %v1856 = vpop.f32.mrf.mxu0
    %v1857 = vadd.f32 %v577, %v1856
    %1858 = vdwg.mxu0
    %1859 = vmatpush.msra.mxu0 %v424
    %1860 = vmatpush.msra.mxu0 %v420
    %1861 = vmatpush.msra.mxu0 %v416
    %1862 = vmatpush.msra.mxu0 %v412
    %1863 = vmatpush.msra.mxu0 %v408
    %1864 = vmatpush.msra.mxu0 %v404
    %1865 = vmatpush.msra.mxu0 %v400
    %1866 = vmatpush.msra.mxu0 %v396
    %1867 = vmatpush.msra.mxu0 %v392
    %1868 = vmatpush.msra.mxu0 %v388
    %1869 = vmatpush.msra.mxu0 %v384
    %1870 = vmatpush.msra.mxu0 %v380
    %1871 = vmatpush.msra.mxu0 %v376
    %1872 = vmatpush.msra.mxu0 %v372
    %1873 = vmatpush.msra.mxu0 %v368
    %1874 = vmatpush.msra.mxu0 %v364
    %1875 = vmatmul.f32.gmra.mxu0 %v1756
    %v1876 = vpop.f32.mrf.mxu0
    %v1877 = vadd.f32 %v1857, %v1876
    %1878 = vdwg.mxu0
    %1879 = vmatpush.msra.mxu0 %v361
    %1880 = vmatpush.msra.mxu0 %v357
    %1881 = vmatpush.msra.mxu0 %v353
    %1882 = vmatpush.msra.mxu0 %v349
    %1883 = vmatpush.msra.mxu0 %v345
    %1884 = vmatpush.msra.mxu0 %v341
    %1885 = vmatpush.msra.mxu0 %v337
    %1886 = vmatpush.msra.mxu0 %v333
    %1887 = vmatpush.msra.mxu0 %v329
    %1888 = vmatpush.msra.mxu0 %v325
    %1889 = vmatpush.msra.mxu0 %v321
    %1890 = vmatpush.msra.mxu0 %v317
    %1891 = vmatpush.msra.mxu0 %v313
    %1892 = vmatpush.msra.mxu0 %v309
    %1893 = vmatpush.msra.mxu0 %v305
    %1894 = vmatpush.msra.mxu0 %v301
    %1895 = vmatmul.f32.gmra.mxu0 %v1755
    %v1896 = vpop.f32.mrf.mxu0
    %v1897 = vadd.f32 %v578, %v1896
    %1898 = vdwg.mxu0
    %1899 = vmatpush.msra.mxu0 %v425
    %1900 = vmatpush.msra.mxu0 %v421
    %1901 = vmatpush.msra.mxu0 %v417
    %1902 = vmatpush.msra.mxu0 %v413
    %1903 = vmatpush.msra.mxu0 %v409
    %1904 = vmatpush.msra.mxu0 %v405
    %1905 = vmatpush.msra.mxu0 %v401
    %1906 = vmatpush.msra.mxu0 %v397
    %1907 = vmatpush.msra.mxu0 %v393
    %1908 = vmatpush.msra.mxu0 %v389
    %1909 = vmatpush.msra.mxu0 %v385
    %1910 = vmatpush.msra.mxu0 %v381
    %1911 = vmatpush.msra.mxu0 %v377
    %1912 = vmatpush.msra.mxu0 %v373
    %1913 = vmatpush.msra.mxu0 %v369
    %1914 = vmatpush.msra.mxu0 %v365
    %1915 = vmatmul.f32.gmra.mxu0 %v1756
    %v1916 = vpop.f32.mrf.mxu0
    %v1917 = vadd.f32 %v1897, %v1916
    %1918 = vdwg.mxu0
    %v1919 = vxor.u32 %v1797, 2147483648
    %v1920 = vmul.f32 %v1919, 1.442695
    %v1921 = vpow.pop %v1920
    %v1922 = vadd.f32 %v1921, 1.0
    %v1923 = vrcp.pop %v1922
    %v1924 = vmul.f32 %v1922, %v1923
    %v1925 = vsub.f32 1.0, %v1924
    %v1926 = vmul.f32 %v1923, %v1925
    %v1927 = vadd.f32 %v1923, %v1926
    %vm1928 = vweird.f32 %v1922
    %vm1929 = vweird.f32 %v1923
    %vm1930 = vmor %vm1928, %vm1929
    %v1931 = vsel %vm1930, %v1923, %v1927
    %v1932 = vand.u32 2147483647, %v1922
    %vm1933 = vcmp.eq.f32.partialorder %v1932, 8.507059e+37
    %v1934 = vand.u32 %v1922, 2147483648
    %v1935 = vor.u32 1.1754944e-38, %v1934
    %v1936 = vsel %vm1933, %v1935, %v1931
    %v1937 = vmul.f32 1.0, %v1936
    %v1938 = vxor.u32 %v1837, 2147483648
    %v1939 = vmul.f32 %v1938, 1.442695
    %v1940 = vpow.pop %v1939
    %v1941 = vadd.f32 %v1940, 1.0
    %v1942 = vrcp.pop %v1941
    %v1943 = vmul.f32 %v1941, %v1942
    %v1944 = vsub.f32 1.0, %v1943
    %v1945 = vmul.f32 %v1942, %v1944
    %v1946 = vadd.f32 %v1942, %v1945
    %vm1947 = vweird.f32 %v1941
    %vm1948 = vweird.f32 %v1942
    %vm1949 = vmor %vm1947, %vm1948
    %v1950 = vsel %vm1949, %v1942, %v1946
    %v1951 = vand.u32 2147483647, %v1941
    %vm1952 = vcmp.eq.f32.partialorder %v1951, 8.507059e+37
    %v1953 = vand.u32 %v1941, 2147483648
    %v1954 = vor.u32 1.1754944e-38, %v1953
    %v1955 = vsel %vm1952, %v1954, %v1950
    %v1956 = vmul.f32 1.0, %v1955
    %v1957 = vtanh.pop %v1877
    %v1958 = vxor.u32 %v1917, 2147483648
    %v1959 = vmul.f32 %v1958, 1.442695
    %v1960 = vpow.pop %v1959
    %v1961 = vadd.f32 %v1960, 1.0
    %v1962 = vrcp.pop %v1961
    %v1963 = vmul.f32 %v1961, %v1962
    %v1964 = vsub.f32 1.0, %v1963
    %v1965 = vmul.f32 %v1962, %v1964
    %v1966 = vadd.f32 %v1962, %v1965
    %vm1967 = vweird.f32 %v1961
    %vm1968 = vweird.f32 %v1962
    %vm1969 = vmor %vm1967, %vm1968
    %v1970 = vsel %vm1969, %v1962, %v1966
    %v1971 = vand.u32 2147483647, %v1961
    %vm1972 = vcmp.eq.f32.partialorder %v1971, 8.507059e+37
    %v1973 = vand.u32 %v1961, 2147483648
    %v1974 = vor.u32 1.1754944e-38, %v1973
    %v1975 = vsel %vm1972, %v1974, %v1970
    %v1976 = vmul.f32 1.0, %v1975
    %v1977 = vmul.f32 %v1956, %v1587
    %v1978 = vmul.f32 %v1937, %v1957
    %v1979 = vadd.f32 %v1977, %v1978
    %v1980 = vtanh.pop %v1979
    %v1981 = vmul.f32 %v1976, %v1980
    %1982 = vmatpush.msra.mxu0 %v294
    %1983 = vmatpush.msra.mxu0 %v290
    %1984 = vmatpush.msra.mxu0 %v286
    %1985 = vmatpush.msra.mxu0 %v282
    %1986 = vmatpush.msra.mxu0 %v278
    %1987 = vmatpush.msra.mxu0 %v274
    %1988 = vmatpush.msra.mxu0 %v270
    %1989 = vmatpush.msra.mxu0 %v266
    %1990 = vmatpush.msra.mxu0 %v262
    %1991 = vmatpush.msra.mxu0 %v258
    %1992 = vmatpush.msra.mxu0 %v254
    %1993 = vmatpush.msra.mxu0 %v250
    %1994 = vmatpush.msra.mxu0 %v246
    %1995 = vmatpush.msra.mxu0 %v242
    %1996 = vmatpush.msra.mxu0 %v238
    %1997 = vmatpush.msra.mxu0 %v234
    %1998 = vmatmul.f32.gmra.mxu0 %v1755
    %v1999 = vpop.f32.mrf.mxu0
    %v2000 = vadd.f32 0.0, %v1999
    %2001 = vdwg.mxu0
    %2002 = vmatpush.msra.mxu0 %v295
    %2003 = vmatpush.msra.mxu0 %v291
    %2004 = vmatpush.msra.mxu0 %v287
    %2005 = vmatpush.msra.mxu0 %v283
    %2006 = vmatpush.msra.mxu0 %v279
    %2007 = vmatpush.msra.mxu0 %v275
    %2008 = vmatpush.msra.mxu0 %v271
    %2009 = vmatpush.msra.mxu0 %v267
    %2010 = vmatpush.msra.mxu0 %v263
    %2011 = vmatpush.msra.mxu0 %v259
    %2012 = vmatpush.msra.mxu0 %v255
    %2013 = vmatpush.msra.mxu0 %v251
    %2014 = vmatpush.msra.mxu0 %v247
    %2015 = vmatpush.msra.mxu0 %v243
    %2016 = vmatpush.msra.mxu0 %v239
    %2017 = vmatpush.msra.mxu0 %v235
    %2018 = vmatmul.f32.gmra.mxu0 %v1755
    %v2019 = vpop.f32.mrf.mxu0
    %v2020 = vadd.f32 0.0, %v2019
    %2021 = vdwg.mxu0
    %2022 = vmatpush.msra.mxu0 %v296
    %2023 = vmatpush.msra.mxu0 %v292
    %2024 = vmatpush.msra.mxu0 %v288
    %2025 = vmatpush.msra.mxu0 %v284
    %2026 = vmatpush.msra.mxu0 %v280
    %2027 = vmatpush.msra.mxu0 %v276
    %2028 = vmatpush.msra.mxu0 %v272
    %2029 = vmatpush.msra.mxu0 %v268
    %2030 = vmatpush.msra.mxu0 %v264
    %2031 = vmatpush.msra.mxu0 %v260
    %2032 = vmatpush.msra.mxu0 %v256
    %2033 = vmatpush.msra.mxu0 %v252
    %2034 = vmatpush.msra.mxu0 %v248
    %2035 = vmatpush.msra.mxu0 %v244
    %2036 = vmatpush.msra.mxu0 %v240
    %2037 = vmatpush.msra.mxu0 %v236
    %2038 = vmatmul.f32.gmra.mxu0 %v1755
    %v2039 = vpop.f32.mrf.mxu0
    %v2040 = vadd.f32 0.0, %v2039
    %2041 = vdwg.mxu0
    %2042 = vmatpush.msra.mxu0 %v297
    %2043 = vmatpush.msra.mxu0 %v293
    %2044 = vmatpush.msra.mxu0 %v289
    %2045 = vmatpush.msra.mxu0 %v285
    %2046 = vmatpush.msra.mxu0 %v281
    %2047 = vmatpush.msra.mxu0 %v277
    %2048 = vmatpush.msra.mxu0 %v273
    %2049 = vmatpush.msra.mxu0 %v269
    %2050 = vmatpush.msra.mxu0 %v265
    %2051 = vmatpush.msra.mxu0 %v261
    %2052 = vmatpush.msra.mxu0 %v257
    %2053 = vmatpush.msra.mxu0 %v253
    %2054 = vmatpush.msra.mxu0 %v249
    %2055 = vmatpush.msra.mxu0 %v245
    %2056 = vmatpush.msra.mxu0 %v241
    %2057 = vmatpush.msra.mxu0 %v237
    %2058 = vmatmul.f32.gmra.mxu0 %v1755
    %v2059 = vpop.f32.mrf.mxu0
    %v2060 = vadd.f32 0.0, %v2059
    %2061 = vdwg.mxu0
    %v2062 = vadd.f32 %v163, %v2000
    %v2063 = vadd.f32 %v186, %v2020
    %v2064 = vadd.f32 %v209, %v2040
    %v2065 = vadd.f32 %v232, %v2060
    %v2066 = vxor.u32 %v2062, 2147483648
    %v2067 = vmul.f32 %v2066, 1.442695
    %v2068 = vpow.pop %v2067
    %v2069 = vadd.f32 %v2068, 1.0
    %v2070 = vrcp.pop %v2069
    %v2071 = vmul.f32 %v2069, %v2070
    %v2072 = vsub.f32 1.0, %v2071
    %v2073 = vmul.f32 %v2070, %v2072
    %v2074 = vadd.f32 %v2070, %v2073
    %vm2075 = vweird.f32 %v2069
    %vm2076 = vweird.f32 %v2070
    %vm2077 = vmor %vm2075, %vm2076
    %v2078 = vsel %vm2077, %v2070, %v2074
    %v2079 = vand.u32 2147483647, %v2069
    %vm2080 = vcmp.eq.f32.partialorder %v2079, 8.507059e+37
    %v2081 = vand.u32 %v2069, 2147483648
    %v2082 = vor.u32 1.1754944e-38, %v2081
    %v2083 = vsel %vm2080, %v2082, %v2078
    %v2084 = vmul.f32 1.0, %v2083
    %v2085 = vxor.u32 %v2063, 2147483648
    %v2086 = vmul.f32 %v2085, 1.442695
    %v2087 = vpow.pop %v2086
    %v2088 = vadd.f32 %v2087, 1.0
    %v2089 = vrcp.pop %v2088
    %v2090 = vmul.f32 %v2088, %v2089
    %v2091 = vsub.f32 1.0, %v2090
    %v2092 = vmul.f32 %v2089, %v2091
    %v2093 = vadd.f32 %v2089, %v2092
    %vm2094 = vweird.f32 %v2088
    %vm2095 = vweird.f32 %v2089
    %vm2096 = vmor %vm2094, %vm2095
    %v2097 = vsel %vm2096, %v2089, %v2093
    %v2098 = vand.u32 2147483647, %v2088
    %vm2099 = vcmp.eq.f32.partialorder %v2098, 8.507059e+37
    %v2100 = vand.u32 %v2088, 2147483648
    %v2101 = vor.u32 1.1754944e-38, %v2100
    %v2102 = vsel %vm2099, %v2101, %v2097
    %v2103 = vmul.f32 1.0, %v2102
    %v2104 = vtanh.pop %v2064
    %v2105 = vxor.u32 %v2065, 2147483648
    %v2106 = vmul.f32 %v2105, 1.442695
    %v2107 = vpow.pop %v2106
    %v2108 = vadd.f32 %v2107, 1.0
    %v2109 = vrcp.pop %v2108
    %v2110 = vmul.f32 %v2108, %v2109
    %v2111 = vsub.f32 1.0, %v2110
    %v2112 = vmul.f32 %v2109, %v2111
    %v2113 = vadd.f32 %v2109, %v2112
    %vm2114 = vweird.f32 %v2108
    %vm2115 = vweird.f32 %v2109
    %vm2116 = vmor %vm2114, %vm2115
    %v2117 = vsel %vm2116, %v2109, %v2113
    %v2118 = vand.u32 2147483647, %v2108
    %vm2119 = vcmp.eq.f32.partialorder %v2118, 8.507059e+37
    %v2120 = vand.u32 %v2108, 2147483648
    %v2121 = vor.u32 1.1754944e-38, %v2120
    %v2122 = vsel %vm2119, %v2121, %v2117
    %v2123 = vmul.f32 1.0, %v2122
    %v2125 = vrot.slane %v1749, 6
    %v2127 = vmul.f32 %v2103, %v2125
    %v2128 = vmul.f32 %v2084, %v2104
    %v2129 = vadd.f32 %v2127, %v2128
    %v2130 = vtanh.pop %v2129
    %v2131 = vmul.f32 %v2123, %v2130
    %2132 = vmatpush.msra.mxu0 %v358
    %2133 = vmatpush.msra.mxu0 %v354
    %2134 = vmatpush.msra.mxu0 %v350
    %2135 = vmatpush.msra.mxu0 %v346
    %2136 = vmatpush.msra.mxu0 %v342
    %2137 = vmatpush.msra.mxu0 %v338
    %2138 = vmatpush.msra.mxu0 %v334
    %2139 = vmatpush.msra.mxu0 %v330
    %2140 = vmatpush.msra.mxu0 %v326
    %2141 = vmatpush.msra.mxu0 %v322
    %2142 = vmatpush.msra.mxu0 %v318
    %2143 = vmatpush.msra.mxu0 %v314
    %2144 = vmatpush.msra.mxu0 %v310
    %2145 = vmatpush.msra.mxu0 %v306
    %2146 = vmatpush.msra.mxu0 %v302
    %2147 = vmatpush.msra.mxu0 %v298
    %2148 = vmatmul.f32.gmra.mxu0 %v2131
    %v2149 = vpop.f32.mrf.mxu0
    %v2150 = vadd.f32 %v575, %v2149
    %2151 = vdwg.mxu0
    %2152 = vmatpush.msra.mxu0 %v422
    %2153 = vmatpush.msra.mxu0 %v418
    %2154 = vmatpush.msra.mxu0 %v414
    %2155 = vmatpush.msra.mxu0 %v410
    %2156 = vmatpush.msra.mxu0 %v406
    %2157 = vmatpush.msra.mxu0 %v402
    %2158 = vmatpush.msra.mxu0 %v398
    %2159 = vmatpush.msra.mxu0 %v394
    %2160 = vmatpush.msra.mxu0 %v390
    %2161 = vmatpush.msra.mxu0 %v386
    %2162 = vmatpush.msra.mxu0 %v382
    %2163 = vmatpush.msra.mxu0 %v378
    %2164 = vmatpush.msra.mxu0 %v374
    %2165 = vmatpush.msra.mxu0 %v370
    %2166 = vmatpush.msra.mxu0 %v366
    %2167 = vmatpush.msra.mxu0 %v362
    %2168 = vmatmul.f32.gmra.mxu0 %v1981
    %v2169 = vpop.f32.mrf.mxu0
    %v2170 = vadd.f32 %v2150, %v2169
    %2171 = vdwg.mxu0
    %2172 = vmatpush.msra.mxu0 %v359
    %2173 = vmatpush.msra.mxu0 %v355
    %2174 = vmatpush.msra.mxu0 %v351
    %2175 = vmatpush.msra.mxu0 %v347
    %2176 = vmatpush.msra.mxu0 %v343
    %2177 = vmatpush.msra.mxu0 %v339
    %2178 = vmatpush.msra.mxu0 %v335
    %2179 = vmatpush.msra.mxu0 %v331
    %2180 = vmatpush.msra.mxu0 %v327
    %2181 = vmatpush.msra.mxu0 %v323
    %2182 = vmatpush.msra.mxu0 %v319
    %2183 = vmatpush.msra.mxu0 %v315
    %2184 = vmatpush.msra.mxu0 %v311
    %2185 = vmatpush.msra.mxu0 %v307
    %2186 = vmatpush.msra.mxu0 %v303
    %2187 = vmatpush.msra.mxu0 %v299
    %2188 = vmatmul.f32.gmra.mxu0 %v2131
    %v2189 = vpop.f32.mrf.mxu0
    %v2190 = vadd.f32 %v576, %v2189
    %2191 = vdwg.mxu0
    %2192 = vmatpush.msra.mxu0 %v423
    %2193 = vmatpush.msra.mxu0 %v419
    %2194 = vmatpush.msra.mxu0 %v415
    %2195 = vmatpush.msra.mxu0 %v411
    %2196 = vmatpush.msra.mxu0 %v407
    %2197 = vmatpush.msra.mxu0 %v403
    %2198 = vmatpush.msra.mxu0 %v399
    %2199 = vmatpush.msra.mxu0 %v395
    %2200 = vmatpush.msra.mxu0 %v391
    %2201 = vmatpush.msra.mxu0 %v387
    %2202 = vmatpush.msra.mxu0 %v383
    %2203 = vmatpush.msra.mxu0 %v379
    %2204 = vmatpush.msra.mxu0 %v375
    %2205 = vmatpush.msra.mxu0 %v371
    %2206 = vmatpush.msra.mxu0 %v367
    %2207 = vmatpush.msra.mxu0 %v363
    %2208 = vmatmul.f32.gmra.mxu0 %v1981
    %v2209 = vpop.f32.mrf.mxu0
    %v2210 = vadd.f32 %v2190, %v2209
    %2211 = vdwg.mxu0
    %2212 = vmatpush.msra.mxu0 %v360
    %2213 = vmatpush.msra.mxu0 %v356
    %2214 = vmatpush.msra.mxu0 %v352
    %2215 = vmatpush.msra.mxu0 %v348
    %2216 = vmatpush.msra.mxu0 %v344
    %2217 = vmatpush.msra.mxu0 %v340
    %2218 = vmatpush.msra.mxu0 %v336
    %2219 = vmatpush.msra.mxu0 %v332
    %2220 = vmatpush.msra.mxu0 %v328
    %2221 = vmatpush.msra.mxu0 %v324
    %2222 = vmatpush.msra.mxu0 %v320
    %2223 = vmatpush.msra.mxu0 %v316
    %2224 = vmatpush.msra.mxu0 %v312
    %2225 = vmatpush.msra.mxu0 %v308
    %2226 = vmatpush.msra.mxu0 %v304
    %2227 = vmatpush.msra.mxu0 %v300
    %2228 = vmatmul.f32.gmra.mxu0 %v2131
    %v2229 = vpop.f32.mrf.mxu0
    %v2230 = vadd.f32 %v577, %v2229
    %2231 = vdwg.mxu0
    %2232 = vmatpush.msra.mxu0 %v424
    %2233 = vmatpush.msra.mxu0 %v420
    %2234 = vmatpush.msra.mxu0 %v416
    %2235 = vmatpush.msra.mxu0 %v412
    %2236 = vmatpush.msra.mxu0 %v408
    %2237 = vmatpush.msra.mxu0 %v404
    %2238 = vmatpush.msra.mxu0 %v400
    %2239 = vmatpush.msra.mxu0 %v396
    %2240 = vmatpush.msra.mxu0 %v392
    %2241 = vmatpush.msra.mxu0 %v388
    %2242 = vmatpush.msra.mxu0 %v384
    %2243 = vmatpush.msra.mxu0 %v380
    %2244 = vmatpush.msra.mxu0 %v376
    %2245 = vmatpush.msra.mxu0 %v372
    %2246 = vmatpush.msra.mxu0 %v368
    %2247 = vmatpush.msra.mxu0 %v364
    %2248 = vmatmul.f32.gmra.mxu0 %v1981
    %v2249 = vpop.f32.mrf.mxu0
    %v2250 = vadd.f32 %v2230, %v2249
    %2251 = vdwg.mxu0
    %2252 = vmatpush.msra.mxu0 %v361
    %2253 = vmatpush.msra.mxu0 %v357
    %2254 = vmatpush.msra.mxu0 %v353
    %2255 = vmatpush.msra.mxu0 %v349
    %2256 = vmatpush.msra.mxu0 %v345
    %2257 = vmatpush.msra.mxu0 %v341
    %2258 = vmatpush.msra.mxu0 %v337
    %2259 = vmatpush.msra.mxu0 %v333
    %2260 = vmatpush.msra.mxu0 %v329
    %2261 = vmatpush.msra.mxu0 %v325
    %2262 = vmatpush.msra.mxu0 %v321
    %2263 = vmatpush.msra.mxu0 %v317
    %2264 = vmatpush.msra.mxu0 %v313
    %2265 = vmatpush.msra.mxu0 %v309
    %2266 = vmatpush.msra.mxu0 %v305
    %2267 = vmatpush.msra.mxu0 %v301
    %2268 = vmatmul.f32.gmra.mxu0 %v2131
    %v2269 = vpop.f32.mrf.mxu0
    %v2270 = vadd.f32 %v578, %v2269
    %2271 = vdwg.mxu0
    %2272 = vmatpush.msra.mxu0 %v425
    %2273 = vmatpush.msra.mxu0 %v421
    %2274 = vmatpush.msra.mxu0 %v417
    %2275 = vmatpush.msra.mxu0 %v413
    %2276 = vmatpush.msra.mxu0 %v409
    %2277 = vmatpush.msra.mxu0 %v405
    %2278 = vmatpush.msra.mxu0 %v401
    %2279 = vmatpush.msra.mxu0 %v397
    %2280 = vmatpush.msra.mxu0 %v393
    %2281 = vmatpush.msra.mxu0 %v389
    %2282 = vmatpush.msra.mxu0 %v385
    %2283 = vmatpush.msra.mxu0 %v381
    %2284 = vmatpush.msra.mxu0 %v377
    %2285 = vmatpush.msra.mxu0 %v373
    %2286 = vmatpush.msra.mxu0 %v369
    %2287 = vmatpush.msra.mxu0 %v365
    %2288 = vmatmul.f32.gmra.mxu0 %v1981
    %v2289 = vpop.f32.mrf.mxu0
    %v2290 = vadd.f32 %v2270, %v2289
    %2291 = vdwg.mxu0
    %v2292 = vxor.u32 %v2170, 2147483648
    %v2293 = vmul.f32 %v2292, 1.442695
    %v2294 = vpow.pop %v2293
    %v2295 = vadd.f32 %v2294, 1.0
    %v2296 = vrcp.pop %v2295
    %v2297 = vmul.f32 %v2295, %v2296
    %v2298 = vsub.f32 1.0, %v2297
    %v2299 = vmul.f32 %v2296, %v2298
    %v2300 = vadd.f32 %v2296, %v2299
    %vm2301 = vweird.f32 %v2295
    %vm2302 = vweird.f32 %v2296
    %vm2303 = vmor %vm2301, %vm2302
    %v2304 = vsel %vm2303, %v2296, %v2300
    %v2305 = vand.u32 2147483647, %v2295
    %vm2306 = vcmp.eq.f32.partialorder %v2305, 8.507059e+37
    %v2307 = vand.u32 %v2295, 2147483648
    %v2308 = vor.u32 1.1754944e-38, %v2307
    %v2309 = vsel %vm2306, %v2308, %v2304
    %v2310 = vmul.f32 1.0, %v2309
    %v2311 = vxor.u32 %v2210, 2147483648
    %v2312 = vmul.f32 %v2311, 1.442695
    %v2313 = vpow.pop %v2312
    %v2314 = vadd.f32 %v2313, 1.0
    %v2315 = vrcp.pop %v2314
    %v2316 = vmul.f32 %v2314, %v2315
    %v2317 = vsub.f32 1.0, %v2316
    %v2318 = vmul.f32 %v2315, %v2317
    %v2319 = vadd.f32 %v2315, %v2318
    %vm2320 = vweird.f32 %v2314
    %vm2321 = vweird.f32 %v2315
    %vm2322 = vmor %vm2320, %vm2321
    %v2323 = vsel %vm2322, %v2315, %v2319
    %v2324 = vand.u32 2147483647, %v2314
    %vm2325 = vcmp.eq.f32.partialorder %v2324, 8.507059e+37
    %v2326 = vand.u32 %v2314, 2147483648
    %v2327 = vor.u32 1.1754944e-38, %v2326
    %v2328 = vsel %vm2325, %v2327, %v2323
    %v2329 = vmul.f32 1.0, %v2328
    %v2330 = vtanh.pop %v2250
    %v2331 = vxor.u32 %v2290, 2147483648
    %v2332 = vmul.f32 %v2331, 1.442695
    %v2333 = vpow.pop %v2332
    %v2334 = vadd.f32 %v2333, 1.0
    %v2335 = vrcp.pop %v2334
    %v2336 = vmul.f32 %v2334, %v2335
    %v2337 = vsub.f32 1.0, %v2336
    %v2338 = vmul.f32 %v2335, %v2337
    %v2339 = vadd.f32 %v2335, %v2338
    %vm2340 = vweird.f32 %v2334
    %vm2341 = vweird.f32 %v2335
    %vm2342 = vmor %vm2340, %vm2341
    %v2343 = vsel %vm2342, %v2335, %v2339
    %v2344 = vand.u32 2147483647, %v2334
    %vm2345 = vcmp.eq.f32.partialorder %v2344, 8.507059e+37
    %v2346 = vand.u32 %v2334, 2147483648
    %v2347 = vor.u32 1.1754944e-38, %v2346
    %v2348 = vsel %vm2345, %v2347, %v2343
    %v2349 = vmul.f32 1.0, %v2348
    %v2350 = vmul.f32 %v2329, %v1979
    %v2351 = vmul.f32 %v2310, %v2330
    %v2352 = vadd.f32 %v2350, %v2351
    %v2353 = vtanh.pop %v2352
    %v2354 = vmul.f32 %v2349, %v2353
    %2355 = vmatpush.msra.mxu0 %v294
    %2356 = vmatpush.msra.mxu0 %v290
    %2357 = vmatpush.msra.mxu0 %v286
    %2358 = vmatpush.msra.mxu0 %v282
    %2359 = vmatpush.msra.mxu0 %v278
    %2360 = vmatpush.msra.mxu0 %v274
    %2361 = vmatpush.msra.mxu0 %v270
    %2362 = vmatpush.msra.mxu0 %v266
    %2363 = vmatpush.msra.mxu0 %v262
    %2364 = vmatpush.msra.mxu0 %v258
    %2365 = vmatpush.msra.mxu0 %v254
    %2366 = vmatpush.msra.mxu0 %v250
    %2367 = vmatpush.msra.mxu0 %v246
    %2368 = vmatpush.msra.mxu0 %v242
    %2369 = vmatpush.msra.mxu0 %v238
    %2370 = vmatpush.msra.mxu0 %v234
    %2371 = vmatmul.f32.gmra.mxu0 %v2131
    %v2372 = vpop.f32.mrf.mxu0
    %v2373 = vadd.f32 0.0, %v2372
    %2374 = vdwg.mxu0
    %2375 = vmatpush.msra.mxu0 %v295
    %2376 = vmatpush.msra.mxu0 %v291
    %2377 = vmatpush.msra.mxu0 %v287
    %2378 = vmatpush.msra.mxu0 %v283
    %2379 = vmatpush.msra.mxu0 %v279
    %2380 = vmatpush.msra.mxu0 %v275
    %2381 = vmatpush.msra.mxu0 %v271
    %2382 = vmatpush.msra.mxu0 %v267
    %2383 = vmatpush.msra.mxu0 %v263
    %2384 = vmatpush.msra.mxu0 %v259
    %2385 = vmatpush.msra.mxu0 %v255
    %2386 = vmatpush.msra.mxu0 %v251
    %2387 = vmatpush.msra.mxu0 %v247
    %2388 = vmatpush.msra.mxu0 %v243
    %2389 = vmatpush.msra.mxu0 %v239
    %2390 = vmatpush.msra.mxu0 %v235
    %2391 = vmatmul.f32.gmra.mxu0 %v2131
    %v2392 = vpop.f32.mrf.mxu0
    %v2393 = vadd.f32 0.0, %v2392
    %2394 = vdwg.mxu0
    %2395 = vmatpush.msra.mxu0 %v296
    %2396 = vmatpush.msra.mxu0 %v292
    %2397 = vmatpush.msra.mxu0 %v288
    %2398 = vmatpush.msra.mxu0 %v284
    %2399 = vmatpush.msra.mxu0 %v280
    %2400 = vmatpush.msra.mxu0 %v276
    %2401 = vmatpush.msra.mxu0 %v272
    %2402 = vmatpush.msra.mxu0 %v268
    %2403 = vmatpush.msra.mxu0 %v264
    %2404 = vmatpush.msra.mxu0 %v260
    %2405 = vmatpush.msra.mxu0 %v256
    %2406 = vmatpush.msra.mxu0 %v252
    %2407 = vmatpush.msra.mxu0 %v248
    %2408 = vmatpush.msra.mxu0 %v244
    %2409 = vmatpush.msra.mxu0 %v240
    %2410 = vmatpush.msra.mxu0 %v236
    %2411 = vmatmul.f32.gmra.mxu0 %v2131
    %v2412 = vpop.f32.mrf.mxu0
    %v2413 = vadd.f32 0.0, %v2412
    %2414 = vdwg.mxu0
    %2415 = vmatpush.msra.mxu0 %v297
    %2416 = vmatpush.msra.mxu0 %v293
    %2417 = vmatpush.msra.mxu0 %v289
    %2418 = vmatpush.msra.mxu0 %v285
    %2419 = vmatpush.msra.mxu0 %v281
    %2420 = vmatpush.msra.mxu0 %v277
    %2421 = vmatpush.msra.mxu0 %v273
    %2422 = vmatpush.msra.mxu0 %v269
    %2423 = vmatpush.msra.mxu0 %v265
    %2424 = vmatpush.msra.mxu0 %v261
    %2425 = vmatpush.msra.mxu0 %v257
    %2426 = vmatpush.msra.mxu0 %v253
    %2427 = vmatpush.msra.mxu0 %v249
    %2428 = vmatpush.msra.mxu0 %v245
    %2429 = vmatpush.msra.mxu0 %v241
    %2430 = vmatpush.msra.mxu0 %v237
    %2431 = vmatmul.f32.gmra.mxu0 %v2131
    %v2432 = vpop.f32.mrf.mxu0
    %v2433 = vadd.f32 0.0, %v2432
    %2434 = vdwg.mxu0
    %v2439 = vrot.slane %v2373, 6
    %v2440 = vrot.slane %v2393, 6
    %v2441 = vrot.slane %v2413, 6
    %v2442 = vrot.slane %v2433, 6
    %v2447 = vadd.f32 %v163, %v2439
    %v2448 = vadd.f32 %v186, %v2440
    %v2449 = vadd.f32 %v209, %v2441
    %v2450 = vadd.f32 %v232, %v2442
    %v2451 = vxor.u32 %v2447, 2147483648
    %v2452 = vmul.f32 %v2451, 1.442695
    %v2453 = vpow.pop %v2452
    %v2454 = vadd.f32 %v2453, 1.0
    %v2455 = vrcp.pop %v2454
    %v2456 = vmul.f32 %v2454, %v2455
    %v2457 = vsub.f32 1.0, %v2456
    %v2458 = vmul.f32 %v2455, %v2457
    %v2459 = vadd.f32 %v2455, %v2458
    %vm2460 = vweird.f32 %v2454
    %vm2461 = vweird.f32 %v2455
    %vm2462 = vmor %vm2460, %vm2461
    %v2463 = vsel %vm2462, %v2455, %v2459
    %v2464 = vand.u32 2147483647, %v2454
    %vm2465 = vcmp.eq.f32.partialorder %v2464, 8.507059e+37
    %v2466 = vand.u32 %v2454, 2147483648
    %v2467 = vor.u32 1.1754944e-38, %v2466
    %v2468 = vsel %vm2465, %v2467, %v2463
    %v2469 = vmul.f32 1.0, %v2468
    %v2470 = vxor.u32 %v2448, 2147483648
    %v2471 = vmul.f32 %v2470, 1.442695
    %v2472 = vpow.pop %v2471
    %v2473 = vadd.f32 %v2472, 1.0
    %v2474 = vrcp.pop %v2473
    %v2475 = vmul.f32 %v2473, %v2474
    %v2476 = vsub.f32 1.0, %v2475
    %v2477 = vmul.f32 %v2474, %v2476
    %v2478 = vadd.f32 %v2474, %v2477
    %vm2479 = vweird.f32 %v2473
    %vm2480 = vweird.f32 %v2474
    %vm2481 = vmor %vm2479, %vm2480
    %v2482 = vsel %vm2481, %v2474, %v2478
    %v2483 = vand.u32 2147483647, %v2473
    %vm2484 = vcmp.eq.f32.partialorder %v2483, 8.507059e+37
    %v2485 = vand.u32 %v2473, 2147483648
    %v2486 = vor.u32 1.1754944e-38, %v2485
    %v2487 = vsel %vm2484, %v2486, %v2482
    %v2488 = vmul.f32 1.0, %v2487
    %v2489 = vtanh.pop %v2449
    %v2490 = vxor.u32 %v2450, 2147483648
    %v2491 = vmul.f32 %v2490, 1.442695
    %v2492 = vpow.pop %v2491
    %v2493 = vadd.f32 %v2492, 1.0
    %v2494 = vrcp.pop %v2493
    %v2495 = vmul.f32 %v2493, %v2494
    %v2496 = vsub.f32 1.0, %v2495
    %v2497 = vmul.f32 %v2494, %v2496
    %v2498 = vadd.f32 %v2494, %v2497
    %vm2499 = vweird.f32 %v2493
    %vm2500 = vweird.f32 %v2494
    %vm2501 = vmor %vm2499, %vm2500
    %v2502 = vsel %vm2501, %v2494, %v2498
    %v2503 = vand.u32 2147483647, %v2493
    %vm2504 = vcmp.eq.f32.partialorder %v2503, 8.507059e+37
    %v2505 = vand.u32 %v2493, 2147483648
    %v2506 = vor.u32 1.1754944e-38, %v2505
    %v2507 = vsel %vm2504, %v2506, %v2502
    %v2508 = vmul.f32 1.0, %v2507
    %v2510 = vrot.slane %v2129, 6
    %v2512 = vmul.f32 %v2488, %v2510
    %v2513 = vmul.f32 %v2469, %v2489
    %v2514 = vadd.f32 %v2512, %v2513
    %v2515 = vtanh.pop %v2514
    %v2516 = vmul.f32 %v2508, %v2515
    %v2518 = vrot.slane %v2354, 6
    %v2520 = vrot.slane %v2516, 2
    %v2521 = vrot.slane %v2518, 2
    %2524 = vmatpush.msra.mxu0 %v358
    %2525 = vmatpush.msra.mxu0 %v354
    %2526 = vmatpush.msra.mxu0 %v350
    %2527 = vmatpush.msra.mxu0 %v346
    %2528 = vmatpush.msra.mxu0 %v342
    %2529 = vmatpush.msra.mxu0 %v338
    %2530 = vmatpush.msra.mxu0 %v334
    %2531 = vmatpush.msra.mxu0 %v330
    %2532 = vmatpush.msra.mxu0 %v326
    %2533 = vmatpush.msra.mxu0 %v322
    %2534 = vmatpush.msra.mxu0 %v318
    %2535 = vmatpush.msra.mxu0 %v314
    %2536 = vmatpush.msra.mxu0 %v310
    %2537 = vmatpush.msra.mxu0 %v306
    %2538 = vmatpush.msra.mxu0 %v302
    %2539 = vmatpush.msra.mxu0 %v298
    %2540 = vmatmul.f32.gmra.mxu0 %v2520
    %v2541 = vpop.f32.mrf.mxu0
    %v2542 = vadd.f32 %v575, %v2541
    %2543 = vdwg.mxu0
    %2544 = vmatpush.msra.mxu0 %v422
    %2545 = vmatpush.msra.mxu0 %v418
    %2546 = vmatpush.msra.mxu0 %v414
    %2547 = vmatpush.msra.mxu0 %v410
    %2548 = vmatpush.msra.mxu0 %v406
    %2549 = vmatpush.msra.mxu0 %v402
    %2550 = vmatpush.msra.mxu0 %v398
    %2551 = vmatpush.msra.mxu0 %v394
    %2552 = vmatpush.msra.mxu0 %v390
    %2553 = vmatpush.msra.mxu0 %v386
    %2554 = vmatpush.msra.mxu0 %v382
    %2555 = vmatpush.msra.mxu0 %v378
    %2556 = vmatpush.msra.mxu0 %v374
    %2557 = vmatpush.msra.mxu0 %v370
    %2558 = vmatpush.msra.mxu0 %v366
    %2559 = vmatpush.msra.mxu0 %v362
    %2560 = vmatmul.f32.gmra.mxu0 %v2521
    %v2561 = vpop.f32.mrf.mxu0
    %v2562 = vadd.f32 %v2542, %v2561
    %2563 = vdwg.mxu0
    %2564 = vmatpush.msra.mxu0 %v359
    %2565 = vmatpush.msra.mxu0 %v355
    %2566 = vmatpush.msra.mxu0 %v351
    %2567 = vmatpush.msra.mxu0 %v347
    %2568 = vmatpush.msra.mxu0 %v343
    %2569 = vmatpush.msra.mxu0 %v339
    %2570 = vmatpush.msra.mxu0 %v335
    %2571 = vmatpush.msra.mxu0 %v331
    %2572 = vmatpush.msra.mxu0 %v327
    %2573 = vmatpush.msra.mxu0 %v323
    %2574 = vmatpush.msra.mxu0 %v319
    %2575 = vmatpush.msra.mxu0 %v315
    %2576 = vmatpush.msra.mxu0 %v311
    %2577 = vmatpush.msra.mxu0 %v307
    %2578 = vmatpush.msra.mxu0 %v303
    %2579 = vmatpush.msra.mxu0 %v299
    %2580 = vmatmul.f32.gmra.mxu0 %v2520
    %v2581 = vpop.f32.mrf.mxu0
    %v2582 = vadd.f32 %v576, %v2581
    %2583 = vdwg.mxu0
    %2584 = vmatpush.msra.mxu0 %v423
    %2585 = vmatpush.msra.mxu0 %v419
    %2586 = vmatpush.msra.mxu0 %v415
    %2587 = vmatpush.msra.mxu0 %v411
    %2588 = vmatpush.msra.mxu0 %v407
    %2589 = vmatpush.msra.mxu0 %v403
    %2590 = vmatpush.msra.mxu0 %v399
    %2591 = vmatpush.msra.mxu0 %v395
    %2592 = vmatpush.msra.mxu0 %v391
    %2593 = vmatpush.msra.mxu0 %v387
    %2594 = vmatpush.msra.mxu0 %v383
    %2595 = vmatpush.msra.mxu0 %v379
    %2596 = vmatpush.msra.mxu0 %v375
    %2597 = vmatpush.msra.mxu0 %v371
    %2598 = vmatpush.msra.mxu0 %v367
    %2599 = vmatpush.msra.mxu0 %v363
    %2600 = vmatmul.f32.gmra.mxu0 %v2521
    %v2601 = vpop.f32.mrf.mxu0
    %v2602 = vadd.f32 %v2582, %v2601
    %2603 = vdwg.mxu0
    %2604 = vmatpush.msra.mxu0 %v360
    %2605 = vmatpush.msra.mxu0 %v356
    %2606 = vmatpush.msra.mxu0 %v352
    %2607 = vmatpush.msra.mxu0 %v348
    %2608 = vmatpush.msra.mxu0 %v344
    %2609 = vmatpush.msra.mxu0 %v340
    %2610 = vmatpush.msra.mxu0 %v336
    %2611 = vmatpush.msra.mxu0 %v332
    %2612 = vmatpush.msra.mxu0 %v328
    %2613 = vmatpush.msra.mxu0 %v324
    %2614 = vmatpush.msra.mxu0 %v320
    %2615 = vmatpush.msra.mxu0 %v316
    %2616 = vmatpush.msra.mxu0 %v312
    %2617 = vmatpush.msra.mxu0 %v308
    %2618 = vmatpush.msra.mxu0 %v304
    %2619 = vmatpush.msra.mxu0 %v300
    %2620 = vmatmul.f32.gmra.mxu0 %v2520
    %v2621 = vpop.f32.mrf.mxu0
    %v2622 = vadd.f32 %v577, %v2621
    %2623 = vdwg.mxu0
    %2624 = vmatpush.msra.mxu0 %v424
    %2625 = vmatpush.msra.mxu0 %v420
    %2626 = vmatpush.msra.mxu0 %v416
    %2627 = vmatpush.msra.mxu0 %v412
    %2628 = vmatpush.msra.mxu0 %v408
    %2629 = vmatpush.msra.mxu0 %v404
    %2630 = vmatpush.msra.mxu0 %v400
    %2631 = vmatpush.msra.mxu0 %v396
    %2632 = vmatpush.msra.mxu0 %v392
    %2633 = vmatpush.msra.mxu0 %v388
    %2634 = vmatpush.msra.mxu0 %v384
    %2635 = vmatpush.msra.mxu0 %v380
    %2636 = vmatpush.msra.mxu0 %v376
    %2637 = vmatpush.msra.mxu0 %v372
    %2638 = vmatpush.msra.mxu0 %v368
    %2639 = vmatpush.msra.mxu0 %v364
    %2640 = vmatmul.f32.gmra.mxu0 %v2521
    %v2641 = vpop.f32.mrf.mxu0
    %v2642 = vadd.f32 %v2622, %v2641
    %2643 = vdwg.mxu0
    %2644 = vmatpush.msra.mxu0 %v361
    %2645 = vmatpush.msra.mxu0 %v357
    %2646 = vmatpush.msra.mxu0 %v353
    %2647 = vmatpush.msra.mxu0 %v349
    %2648 = vmatpush.msra.mxu0 %v345
    %2649 = vmatpush.msra.mxu0 %v341
    %2650 = vmatpush.msra.mxu0 %v337
    %2651 = vmatpush.msra.mxu0 %v333
    %2652 = vmatpush.msra.mxu0 %v329
    %2653 = vmatpush.msra.mxu0 %v325
    %2654 = vmatpush.msra.mxu0 %v321
    %2655 = vmatpush.msra.mxu0 %v317
    %2656 = vmatpush.msra.mxu0 %v313
    %2657 = vmatpush.msra.mxu0 %v309
    %2658 = vmatpush.msra.mxu0 %v305
    %2659 = vmatpush.msra.mxu0 %v301
    %2660 = vmatmul.f32.gmra.mxu0 %v2520
    %v2661 = vpop.f32.mrf.mxu0
    %v2662 = vadd.f32 %v578, %v2661
    %2663 = vdwg.mxu0
    %2664 = vmatpush.msra.mxu0 %v425
    %2665 = vmatpush.msra.mxu0 %v421
    %2666 = vmatpush.msra.mxu0 %v417
    %2667 = vmatpush.msra.mxu0 %v413
    %2668 = vmatpush.msra.mxu0 %v409
    %2669 = vmatpush.msra.mxu0 %v405
    %2670 = vmatpush.msra.mxu0 %v401
    %2671 = vmatpush.msra.mxu0 %v397
    %2672 = vmatpush.msra.mxu0 %v393
    %2673 = vmatpush.msra.mxu0 %v389
    %2674 = vmatpush.msra.mxu0 %v385
    %2675 = vmatpush.msra.mxu0 %v381
    %2676 = vmatpush.msra.mxu0 %v377
    %2677 = vmatpush.msra.mxu0 %v373
    %2678 = vmatpush.msra.mxu0 %v369
    %2679 = vmatpush.msra.mxu0 %v365
    %2680 = vmatmul.f32.gmra.mxu0 %v2521
    %v2681 = vpop.f32.mrf.mxu0
    %v2682 = vadd.f32 %v2662, %v2681
    %2683 = vdwg.mxu0
    %v2684 = vxor.u32 %v2562, 2147483648
    %v2685 = vmul.f32 %v2684, 1.442695
    %v2686 = vpow.pop %v2685
    %v2687 = vadd.f32 %v2686, 1.0
    %v2688 = vrcp.pop %v2687
    %v2689 = vmul.f32 %v2687, %v2688
    %v2690 = vsub.f32 1.0, %v2689
    %v2691 = vmul.f32 %v2688, %v2690
    %v2692 = vadd.f32 %v2688, %v2691
    %vm2693 = vweird.f32 %v2687
    %vm2694 = vweird.f32 %v2688
    %vm2695 = vmor %vm2693, %vm2694
    %v2696 = vsel %vm2695, %v2688, %v2692
    %v2697 = vand.u32 2147483647, %v2687
    %vm2698 = vcmp.eq.f32.partialorder %v2697, 8.507059e+37
    %v2699 = vand.u32 %v2687, 2147483648
    %v2700 = vor.u32 1.1754944e-38, %v2699
    %v2701 = vsel %vm2698, %v2700, %v2696
    %v2702 = vmul.f32 1.0, %v2701
    %v2703 = vxor.u32 %v2602, 2147483648
    %v2704 = vmul.f32 %v2703, 1.442695
    %v2705 = vpow.pop %v2704
    %v2706 = vadd.f32 %v2705, 1.0
    %v2707 = vrcp.pop %v2706
    %v2708 = vmul.f32 %v2706, %v2707
    %v2709 = vsub.f32 1.0, %v2708
    %v2710 = vmul.f32 %v2707, %v2709
    %v2711 = vadd.f32 %v2707, %v2710
    %vm2712 = vweird.f32 %v2706
    %vm2713 = vweird.f32 %v2707
    %vm2714 = vmor %vm2712, %vm2713
    %v2715 = vsel %vm2714, %v2707, %v2711
    %v2716 = vand.u32 2147483647, %v2706
    %vm2717 = vcmp.eq.f32.partialorder %v2716, 8.507059e+37
    %v2718 = vand.u32 %v2706, 2147483648
    %v2719 = vor.u32 1.1754944e-38, %v2718
    %v2720 = vsel %vm2717, %v2719, %v2715
    %v2721 = vmul.f32 1.0, %v2720
    %v2722 = vtanh.pop %v2642
    %v2723 = vxor.u32 %v2682, 2147483648
    %v2724 = vmul.f32 %v2723, 1.442695
    %v2725 = vpow.pop %v2724
    %v2726 = vadd.f32 %v2725, 1.0
    %v2727 = vrcp.pop %v2726
    %v2728 = vmul.f32 %v2726, %v2727
    %v2729 = vsub.f32 1.0, %v2728
    %v2730 = vmul.f32 %v2727, %v2729
    %v2731 = vadd.f32 %v2727, %v2730
    %vm2732 = vweird.f32 %v2726
    %vm2733 = vweird.f32 %v2727
    %vm2734 = vmor %vm2732, %vm2733
    %v2735 = vsel %vm2734, %v2727, %v2731
    %v2736 = vand.u32 2147483647, %v2726
    %vm2737 = vcmp.eq.f32.partialorder %v2736, 8.507059e+37
    %v2738 = vand.u32 %v2726, 2147483648
    %v2739 = vor.u32 1.1754944e-38, %v2738
    %v2740 = vsel %vm2737, %v2739, %v2735
    %v2741 = vmul.f32 1.0, %v2740
    %v2742 = vmul.f32 %v2721, %v2352
    %v2743 = vmul.f32 %v2702, %v2722
    %v2744 = vadd.f32 %v2742, %v2743
    %v2745 = vtanh.pop %v2744
    %v2746 = vmul.f32 %v2741, %v2745
    %2747 = vmatpush.msra.mxu0 %v294
    %2748 = vmatpush.msra.mxu0 %v290
    %2749 = vmatpush.msra.mxu0 %v286
    %2750 = vmatpush.msra.mxu0 %v282
    %2751 = vmatpush.msra.mxu0 %v278
    %2752 = vmatpush.msra.mxu0 %v274
    %2753 = vmatpush.msra.mxu0 %v270
    %2754 = vmatpush.msra.mxu0 %v266
    %2755 = vmatpush.msra.mxu0 %v262
    %2756 = vmatpush.msra.mxu0 %v258
    %2757 = vmatpush.msra.mxu0 %v254
    %2758 = vmatpush.msra.mxu0 %v250
    %2759 = vmatpush.msra.mxu0 %v246
    %2760 = vmatpush.msra.mxu0 %v242
    %2761 = vmatpush.msra.mxu0 %v238
    %2762 = vmatpush.msra.mxu0 %v234
    %2763 = vmatmul.f32.gmra.mxu0 %v2520
    %v2764 = vpop.f32.mrf.mxu0
    %v2765 = vadd.f32 0.0, %v2764
    %2766 = vdwg.mxu0
    %2767 = vmatpush.msra.mxu0 %v295
    %2768 = vmatpush.msra.mxu0 %v291
    %2769 = vmatpush.msra.mxu0 %v287
    %2770 = vmatpush.msra.mxu0 %v283
    %2771 = vmatpush.msra.mxu0 %v279
    %2772 = vmatpush.msra.mxu0 %v275
    %2773 = vmatpush.msra.mxu0 %v271
    %2774 = vmatpush.msra.mxu0 %v267
    %2775 = vmatpush.msra.mxu0 %v263
    %2776 = vmatpush.msra.mxu0 %v259
    %2777 = vmatpush.msra.mxu0 %v255
    %2778 = vmatpush.msra.mxu0 %v251
    %2779 = vmatpush.msra.mxu0 %v247
    %2780 = vmatpush.msra.mxu0 %v243
    %2781 = vmatpush.msra.mxu0 %v239
    %2782 = vmatpush.msra.mxu0 %v235
    %2783 = vmatmul.f32.gmra.mxu0 %v2520
    %v2784 = vpop.f32.mrf.mxu0
    %v2785 = vadd.f32 0.0, %v2784
    %2786 = vdwg.mxu0
    %2787 = vmatpush.msra.mxu0 %v296
    %2788 = vmatpush.msra.mxu0 %v292
    %2789 = vmatpush.msra.mxu0 %v288
    %2790 = vmatpush.msra.mxu0 %v284
    %2791 = vmatpush.msra.mxu0 %v280
    %2792 = vmatpush.msra.mxu0 %v276
    %2793 = vmatpush.msra.mxu0 %v272
    %2794 = vmatpush.msra.mxu0 %v268
    %2795 = vmatpush.msra.mxu0 %v264
    %2796 = vmatpush.msra.mxu0 %v260
    %2797 = vmatpush.msra.mxu0 %v256
    %2798 = vmatpush.msra.mxu0 %v252
    %2799 = vmatpush.msra.mxu0 %v248
    %2800 = vmatpush.msra.mxu0 %v244
    %2801 = vmatpush.msra.mxu0 %v240
    %2802 = vmatpush.msra.mxu0 %v236
    %2803 = vmatmul.f32.gmra.mxu0 %v2520
    %v2804 = vpop.f32.mrf.mxu0
    %v2805 = vadd.f32 0.0, %v2804
    %2806 = vdwg.mxu0
    %2807 = vmatpush.msra.mxu0 %v297
    %2808 = vmatpush.msra.mxu0 %v293
    %2809 = vmatpush.msra.mxu0 %v289
    %2810 = vmatpush.msra.mxu0 %v285
    %2811 = vmatpush.msra.mxu0 %v281
    %2812 = vmatpush.msra.mxu0 %v277
    %2813 = vmatpush.msra.mxu0 %v273
    %2814 = vmatpush.msra.mxu0 %v269
    %2815 = vmatpush.msra.mxu0 %v265
    %2816 = vmatpush.msra.mxu0 %v261
    %2817 = vmatpush.msra.mxu0 %v257
    %2818 = vmatpush.msra.mxu0 %v253
    %2819 = vmatpush.msra.mxu0 %v249
    %2820 = vmatpush.msra.mxu0 %v245
    %2821 = vmatpush.msra.mxu0 %v241
    %2822 = vmatpush.msra.mxu0 %v237
    %2823 = vmatmul.f32.gmra.mxu0 %v2520
    %v2824 = vpop.f32.mrf.mxu0
    %v2825 = vadd.f32 0.0, %v2824
    %2826 = vdwg.mxu0
    %v2831 = vrot.slane %v2765, 4
    %v2832 = vrot.slane %v2785, 4
    %v2833 = vrot.slane %v2805, 4
    %v2834 = vrot.slane %v2825, 4
    %v2839 = vadd.f32 %v163, %v2831
    %v2840 = vadd.f32 %v186, %v2832
    %v2841 = vadd.f32 %v209, %v2833
    %v2842 = vadd.f32 %v232, %v2834
    %v2843 = vxor.u32 %v2839, 2147483648
    %v2844 = vmul.f32 %v2843, 1.442695
    %v2845 = vpow.pop %v2844
    %v2846 = vadd.f32 %v2845, 1.0
    %v2847 = vrcp.pop %v2846
    %v2848 = vmul.f32 %v2846, %v2847
    %v2849 = vsub.f32 1.0, %v2848
    %v2850 = vmul.f32 %v2847, %v2849
    %v2851 = vadd.f32 %v2847, %v2850
    %vm2852 = vweird.f32 %v2846
    %vm2853 = vweird.f32 %v2847
    %vm2854 = vmor %vm2852, %vm2853
    %v2855 = vsel %vm2854, %v2847, %v2851
    %v2856 = vand.u32 2147483647, %v2846
    %vm2857 = vcmp.eq.f32.partialorder %v2856, 8.507059e+37
    %v2858 = vand.u32 %v2846, 2147483648
    %v2859 = vor.u32 1.1754944e-38, %v2858
    %v2860 = vsel %vm2857, %v2859, %v2855
    %v2861 = vmul.f32 1.0, %v2860
    %v2862 = vxor.u32 %v2840, 2147483648
    %v2863 = vmul.f32 %v2862, 1.442695
    %v2864 = vpow.pop %v2863
    %v2865 = vadd.f32 %v2864, 1.0
    %v2866 = vrcp.pop %v2865
    %v2867 = vmul.f32 %v2865, %v2866
    %v2868 = vsub.f32 1.0, %v2867
    %v2869 = vmul.f32 %v2866, %v2868
    %v2870 = vadd.f32 %v2866, %v2869
    %vm2871 = vweird.f32 %v2865
    %vm2872 = vweird.f32 %v2866
    %vm2873 = vmor %vm2871, %vm2872
    %v2874 = vsel %vm2873, %v2866, %v2870
    %v2875 = vand.u32 2147483647, %v2865
    %vm2876 = vcmp.eq.f32.partialorder %v2875, 8.507059e+37
    %v2877 = vand.u32 %v2865, 2147483648
    %v2878 = vor.u32 1.1754944e-38, %v2877
    %v2879 = vsel %vm2876, %v2878, %v2874
    %v2880 = vmul.f32 1.0, %v2879
    %v2881 = vtanh.pop %v2841
    %v2882 = vxor.u32 %v2842, 2147483648
    %v2883 = vmul.f32 %v2882, 1.442695
    %v2884 = vpow.pop %v2883
    %v2885 = vadd.f32 %v2884, 1.0
    %v2886 = vrcp.pop %v2885
    %v2887 = vmul.f32 %v2885, %v2886
    %v2888 = vsub.f32 1.0, %v2887
    %v2889 = vmul.f32 %v2886, %v2888
    %v2890 = vadd.f32 %v2886, %v2889
    %vm2891 = vweird.f32 %v2885
    %vm2892 = vweird.f32 %v2886
    %vm2893 = vmor %vm2891, %vm2892
    %v2894 = vsel %vm2893, %v2886, %v2890
    %v2895 = vand.u32 2147483647, %v2885
    %vm2896 = vcmp.eq.f32.partialorder %v2895, 8.507059e+37
    %v2897 = vand.u32 %v2885, 2147483648
    %v2898 = vor.u32 1.1754944e-38, %v2897
    %v2899 = vsel %vm2896, %v2898, %v2894
    %v2900 = vmul.f32 1.0, %v2899
    %v2902 = vrot.slane %v2514, 6
    %v2904 = vmul.f32 %v2880, %v2902
    %v2905 = vmul.f32 %v2861, %v2881
    %v2906 = vadd.f32 %v2904, %v2905
    %v2907 = vtanh.pop %v2906
    %v2908 = vmul.f32 %v2900, %v2907
    %v2910 = vrot.slane %v2746, 4
    %v2912 = vrot.slane %v2908, 4
    %v2913 = vrot.slane %v2910, 4
    %2916 = vmatpush.msra.mxu0 %v358
    %2917 = vmatpush.msra.mxu0 %v354
    %2918 = vmatpush.msra.mxu0 %v350
    %2919 = vmatpush.msra.mxu0 %v346
    %2920 = vmatpush.msra.mxu0 %v342
    %2921 = vmatpush.msra.mxu0 %v338
    %2922 = vmatpush.msra.mxu0 %v334
    %2923 = vmatpush.msra.mxu0 %v330
    %2924 = vmatpush.msra.mxu0 %v326
    %2925 = vmatpush.msra.mxu0 %v322
    %2926 = vmatpush.msra.mxu0 %v318
    %2927 = vmatpush.msra.mxu0 %v314
    %2928 = vmatpush.msra.mxu0 %v310
    %2929 = vmatpush.msra.mxu0 %v306
    %2930 = vmatpush.msra.mxu0 %v302
    %2931 = vmatpush.msra.mxu0 %v298
    %2932 = vmatmul.f32.gmra.mxu0 %v2912
    %v2933 = vpop.f32.mrf.mxu0
    %v2934 = vadd.f32 %v575, %v2933
    %2935 = vdwg.mxu0
    %2936 = vmatpush.msra.mxu0 %v422
    %2937 = vmatpush.msra.mxu0 %v418
    %2938 = vmatpush.msra.mxu0 %v414
    %2939 = vmatpush.msra.mxu0 %v410
    %2940 = vmatpush.msra.mxu0 %v406
    %2941 = vmatpush.msra.mxu0 %v402
    %2942 = vmatpush.msra.mxu0 %v398
    %2943 = vmatpush.msra.mxu0 %v394
    %2944 = vmatpush.msra.mxu0 %v390
    %2945 = vmatpush.msra.mxu0 %v386
    %2946 = vmatpush.msra.mxu0 %v382
    %2947 = vmatpush.msra.mxu0 %v378
    %2948 = vmatpush.msra.mxu0 %v374
    %2949 = vmatpush.msra.mxu0 %v370
    %2950 = vmatpush.msra.mxu0 %v366
    %2951 = vmatpush.msra.mxu0 %v362
    %2952 = vmatmul.f32.gmra.mxu0 %v2913
    %v2953 = vpop.f32.mrf.mxu0
    %v2954 = vadd.f32 %v2934, %v2953
    %2955 = vdwg.mxu0
    %2956 = vmatpush.msra.mxu0 %v359
    %2957 = vmatpush.msra.mxu0 %v355
    %2958 = vmatpush.msra.mxu0 %v351
    %2959 = vmatpush.msra.mxu0 %v347
    %2960 = vmatpush.msra.mxu0 %v343
    %2961 = vmatpush.msra.mxu0 %v339
    %2962 = vmatpush.msra.mxu0 %v335
    %2963 = vmatpush.msra.mxu0 %v331
    %2964 = vmatpush.msra.mxu0 %v327
    %2965 = vmatpush.msra.mxu0 %v323
    %2966 = vmatpush.msra.mxu0 %v319
    %2967 = vmatpush.msra.mxu0 %v315
    %2968 = vmatpush.msra.mxu0 %v311
    %2969 = vmatpush.msra.mxu0 %v307
    %2970 = vmatpush.msra.mxu0 %v303
    %2971 = vmatpush.msra.mxu0 %v299
    %2972 = vmatmul.f32.gmra.mxu0 %v2912
    %v2973 = vpop.f32.mrf.mxu0
    %v2974 = vadd.f32 %v576, %v2973
    %2975 = vdwg.mxu0
    %2976 = vmatpush.msra.mxu0 %v423
    %2977 = vmatpush.msra.mxu0 %v419
    %2978 = vmatpush.msra.mxu0 %v415
    %2979 = vmatpush.msra.mxu0 %v411
    %2980 = vmatpush.msra.mxu0 %v407
    %2981 = vmatpush.msra.mxu0 %v403
    %2982 = vmatpush.msra.mxu0 %v399
    %2983 = vmatpush.msra.mxu0 %v395
    %2984 = vmatpush.msra.mxu0 %v391
    %2985 = vmatpush.msra.mxu0 %v387
    %2986 = vmatpush.msra.mxu0 %v383
    %2987 = vmatpush.msra.mxu0 %v379
    %2988 = vmatpush.msra.mxu0 %v375
    %2989 = vmatpush.msra.mxu0 %v371
    %2990 = vmatpush.msra.mxu0 %v367
    %2991 = vmatpush.msra.mxu0 %v363
    %2992 = vmatmul.f32.gmra.mxu0 %v2913
    %v2993 = vpop.f32.mrf.mxu0
    %v2994 = vadd.f32 %v2974, %v2993
    %2995 = vdwg.mxu0
    %2996 = vmatpush.msra.mxu0 %v360
    %2997 = vmatpush.msra.mxu0 %v356
    %2998 = vmatpush.msra.mxu0 %v352
    %2999 = vmatpush.msra.mxu0 %v348
    %3000 = vmatpush.msra.mxu0 %v344
    %3001 = vmatpush.msra.mxu0 %v340
    %3002 = vmatpush.msra.mxu0 %v336
    %3003 = vmatpush.msra.mxu0 %v332
    %3004 = vmatpush.msra.mxu0 %v328
    %3005 = vmatpush.msra.mxu0 %v324
    %3006 = vmatpush.msra.mxu0 %v320
    %3007 = vmatpush.msra.mxu0 %v316
    %3008 = vmatpush.msra.mxu0 %v312
    %3009 = vmatpush.msra.mxu0 %v308
    %3010 = vmatpush.msra.mxu0 %v304
    %3011 = vmatpush.msra.mxu0 %v300
    %3012 = vmatmul.f32.gmra.mxu0 %v2912
    %v3013 = vpop.f32.mrf.mxu0
    %v3014 = vadd.f32 %v577, %v3013
    %3015 = vdwg.mxu0
    %3016 = vmatpush.msra.mxu0 %v424
    %3017 = vmatpush.msra.mxu0 %v420
    %3018 = vmatpush.msra.mxu0 %v416
    %3019 = vmatpush.msra.mxu0 %v412
    %3020 = vmatpush.msra.mxu0 %v408
    %3021 = vmatpush.msra.mxu0 %v404
    %3022 = vmatpush.msra.mxu0 %v400
    %3023 = vmatpush.msra.mxu0 %v396
    %3024 = vmatpush.msra.mxu0 %v392
    %3025 = vmatpush.msra.mxu0 %v388
    %3026 = vmatpush.msra.mxu0 %v384
    %3027 = vmatpush.msra.mxu0 %v380
    %3028 = vmatpush.msra.mxu0 %v376
    %3029 = vmatpush.msra.mxu0 %v372
    %3030 = vmatpush.msra.mxu0 %v368
    %3031 = vmatpush.msra.mxu0 %v364
    %3032 = vmatmul.f32.gmra.mxu0 %v2913
    %v3033 = vpop.f32.mrf.mxu0
    %v3034 = vadd.f32 %v3014, %v3033
    %3035 = vdwg.mxu0
    %3036 = vmatpush.msra.mxu0 %v361
    %3037 = vmatpush.msra.mxu0 %v357
    %3038 = vmatpush.msra.mxu0 %v353
    %3039 = vmatpush.msra.mxu0 %v349
    %3040 = vmatpush.msra.mxu0 %v345
    %3041 = vmatpush.msra.mxu0 %v341
    %3042 = vmatpush.msra.mxu0 %v337
    %3043 = vmatpush.msra.mxu0 %v333
    %3044 = vmatpush.msra.mxu0 %v329
    %3045 = vmatpush.msra.mxu0 %v325
    %3046 = vmatpush.msra.mxu0 %v321
    %3047 = vmatpush.msra.mxu0 %v317
    %3048 = vmatpush.msra.mxu0 %v313
    %3049 = vmatpush.msra.mxu0 %v309
    %3050 = vmatpush.msra.mxu0 %v305
    %3051 = vmatpush.msra.mxu0 %v301
    %3052 = vmatmul.f32.gmra.mxu0 %v2912
    %v3053 = vpop.f32.mrf.mxu0
    %v3054 = vadd.f32 %v578, %v3053
    %3055 = vdwg.mxu0
    %3056 = vmatpush.msra.mxu0 %v425
    %3057 = vmatpush.msra.mxu0 %v421
    %3058 = vmatpush.msra.mxu0 %v417
    %3059 = vmatpush.msra.mxu0 %v413
    %3060 = vmatpush.msra.mxu0 %v409
    %3061 = vmatpush.msra.mxu0 %v405
    %3062 = vmatpush.msra.mxu0 %v401
    %3063 = vmatpush.msra.mxu0 %v397
    %3064 = vmatpush.msra.mxu0 %v393
    %3065 = vmatpush.msra.mxu0 %v389
    %3066 = vmatpush.msra.mxu0 %v385
    %3067 = vmatpush.msra.mxu0 %v381
    %3068 = vmatpush.msra.mxu0 %v377
    %3069 = vmatpush.msra.mxu0 %v373
    %3070 = vmatpush.msra.mxu0 %v369
    %3071 = vmatpush.msra.mxu0 %v365
    %3072 = vmatmul.f32.gmra.mxu0 %v2913
    %v3073 = vpop.f32.mrf.mxu0
    %v3074 = vadd.f32 %v3054, %v3073
    %3075 = vdwg.mxu0
    %v3076 = vxor.u32 %v2954, 2147483648
    %v3077 = vmul.f32 %v3076, 1.442695
    %v3078 = vpow.pop %v3077
    %v3079 = vadd.f32 %v3078, 1.0
    %v3080 = vrcp.pop %v3079
    %v3081 = vmul.f32 %v3079, %v3080
    %v3082 = vsub.f32 1.0, %v3081
    %v3083 = vmul.f32 %v3080, %v3082
    %v3084 = vadd.f32 %v3080, %v3083
    %vm3085 = vweird.f32 %v3079
    %vm3086 = vweird.f32 %v3080
    %vm3087 = vmor %vm3085, %vm3086
    %v3088 = vsel %vm3087, %v3080, %v3084
    %v3089 = vand.u32 2147483647, %v3079
    %vm3090 = vcmp.eq.f32.partialorder %v3089, 8.507059e+37
    %v3091 = vand.u32 %v3079, 2147483648
    %v3092 = vor.u32 1.1754944e-38, %v3091
    %v3093 = vsel %vm3090, %v3092, %v3088
    %v3094 = vmul.f32 1.0, %v3093
    %v3095 = vxor.u32 %v2994, 2147483648
    %v3096 = vmul.f32 %v3095, 1.442695
    %v3097 = vpow.pop %v3096
    %v3098 = vadd.f32 %v3097, 1.0
    %v3099 = vrcp.pop %v3098
    %v3100 = vmul.f32 %v3098, %v3099
    %v3101 = vsub.f32 1.0, %v3100
    %v3102 = vmul.f32 %v3099, %v3101
    %v3103 = vadd.f32 %v3099, %v3102
    %vm3104 = vweird.f32 %v3098
    %vm3105 = vweird.f32 %v3099
    %vm3106 = vmor %vm3104, %vm3105
    %v3107 = vsel %vm3106, %v3099, %v3103
    %v3108 = vand.u32 2147483647, %v3098
    %vm3109 = vcmp.eq.f32.partialorder %v3108, 8.507059e+37
    %v3110 = vand.u32 %v3098, 2147483648
    %v3111 = vor.u32 1.1754944e-38, %v3110
    %v3112 = vsel %vm3109, %v3111, %v3107
    %v3113 = vmul.f32 1.0, %v3112
    %v3114 = vtanh.pop %v3034
    %v3115 = vxor.u32 %v3074, 2147483648
    %v3116 = vmul.f32 %v3115, 1.442695
    %v3117 = vpow.pop %v3116
    %v3118 = vadd.f32 %v3117, 1.0
    %v3119 = vrcp.pop %v3118
    %v3120 = vmul.f32 %v3118, %v3119
    %v3121 = vsub.f32 1.0, %v3120
    %v3122 = vmul.f32 %v3119, %v3121
    %v3123 = vadd.f32 %v3119, %v3122
    %vm3124 = vweird.f32 %v3118
    %vm3125 = vweird.f32 %v3119
    %vm3126 = vmor %vm3124, %vm3125
    %v3127 = vsel %vm3126, %v3119, %v3123
    %v3128 = vand.u32 2147483647, %v3118
    %vm3129 = vcmp.eq.f32.partialorder %v3128, 8.507059e+37
    %v3130 = vand.u32 %v3118, 2147483648
    %v3131 = vor.u32 1.1754944e-38, %v3130
    %v3132 = vsel %vm3129, %v3131, %v3127
    %v3133 = vmul.f32 1.0, %v3132
    %v3134 = vmul.f32 %v3113, %v2744
    %v3135 = vmul.f32 %v3094, %v3114
    %v3136 = vadd.f32 %v3134, %v3135
    %v3137 = vtanh.pop %v3136
    %v3138 = vmul.f32 %v3133, %v3137
    %3139 = vmatpush.msra.mxu0 %v294
    %3140 = vmatpush.msra.mxu0 %v290
    %3141 = vmatpush.msra.mxu0 %v286
    %3142 = vmatpush.msra.mxu0 %v282
    %3143 = vmatpush.msra.mxu0 %v278
    %3144 = vmatpush.msra.mxu0 %v274
    %3145 = vmatpush.msra.mxu0 %v270
    %3146 = vmatpush.msra.mxu0 %v266
    %3147 = vmatpush.msra.mxu0 %v262
    %3148 = vmatpush.msra.mxu0 %v258
    %3149 = vmatpush.msra.mxu0 %v254
    %3150 = vmatpush.msra.mxu0 %v250
    %3151 = vmatpush.msra.mxu0 %v246
    %3152 = vmatpush.msra.mxu0 %v242
    %3153 = vmatpush.msra.mxu0 %v238
    %3154 = vmatpush.msra.mxu0 %v234
    %3155 = vmatmul.f32.gmra.mxu0 %v2912
    %v3156 = vpop.f32.mrf.mxu0
    %v3157 = vadd.f32 0.0, %v3156
    %3158 = vdwg.mxu0
    %3159 = vmatpush.msra.mxu0 %v295
    %3160 = vmatpush.msra.mxu0 %v291
    %3161 = vmatpush.msra.mxu0 %v287
    %3162 = vmatpush.msra.mxu0 %v283
    %3163 = vmatpush.msra.mxu0 %v279
    %3164 = vmatpush.msra.mxu0 %v275
    %3165 = vmatpush.msra.mxu0 %v271
    %3166 = vmatpush.msra.mxu0 %v267
    %3167 = vmatpush.msra.mxu0 %v263
    %3168 = vmatpush.msra.mxu0 %v259
    %3169 = vmatpush.msra.mxu0 %v255
    %3170 = vmatpush.msra.mxu0 %v251
    %3171 = vmatpush.msra.mxu0 %v247
    %3172 = vmatpush.msra.mxu0 %v243
    %3173 = vmatpush.msra.mxu0 %v239
    %3174 = vmatpush.msra.mxu0 %v235
    %3175 = vmatmul.f32.gmra.mxu0 %v2912
    %v3176 = vpop.f32.mrf.mxu0
    %v3177 = vadd.f32 0.0, %v3176
    %3178 = vdwg.mxu0
    %3179 = vmatpush.msra.mxu0 %v296
    %3180 = vmatpush.msra.mxu0 %v292
    %3181 = vmatpush.msra.mxu0 %v288
    %3182 = vmatpush.msra.mxu0 %v284
    %3183 = vmatpush.msra.mxu0 %v280
    %3184 = vmatpush.msra.mxu0 %v276
    %3185 = vmatpush.msra.mxu0 %v272
    %3186 = vmatpush.msra.mxu0 %v268
    %3187 = vmatpush.msra.mxu0 %v264
    %3188 = vmatpush.msra.mxu0 %v260
    %3189 = vmatpush.msra.mxu0 %v256
    %3190 = vmatpush.msra.mxu0 %v252
    %3191 = vmatpush.msra.mxu0 %v248
    %3192 = vmatpush.msra.mxu0 %v244
    %3193 = vmatpush.msra.mxu0 %v240
    %3194 = vmatpush.msra.mxu0 %v236
    %3195 = vmatmul.f32.gmra.mxu0 %v2912
    %v3196 = vpop.f32.mrf.mxu0
    %v3197 = vadd.f32 0.0, %v3196
    %3198 = vdwg.mxu0
    %3199 = vmatpush.msra.mxu0 %v297
    %3200 = vmatpush.msra.mxu0 %v293
    %3201 = vmatpush.msra.mxu0 %v289
    %3202 = vmatpush.msra.mxu0 %v285
    %3203 = vmatpush.msra.mxu0 %v281
    %3204 = vmatpush.msra.mxu0 %v277
    %3205 = vmatpush.msra.mxu0 %v273
    %3206 = vmatpush.msra.mxu0 %v269
    %3207 = vmatpush.msra.mxu0 %v265
    %3208 = vmatpush.msra.mxu0 %v261
    %3209 = vmatpush.msra.mxu0 %v257
    %3210 = vmatpush.msra.mxu0 %v253
    %3211 = vmatpush.msra.mxu0 %v249
    %3212 = vmatpush.msra.mxu0 %v245
    %3213 = vmatpush.msra.mxu0 %v241
    %3214 = vmatpush.msra.mxu0 %v237
    %3215 = vmatmul.f32.gmra.mxu0 %v2912
    %v3216 = vpop.f32.mrf.mxu0
    %v3217 = vadd.f32 0.0, %v3216
    %3218 = vdwg.mxu0
    %v3223 = vrot.slane %v3157, 2
    %v3224 = vrot.slane %v3177, 2
    %v3225 = vrot.slane %v3197, 2
    %v3226 = vrot.slane %v3217, 2
    %v3231 = vadd.f32 %v163, %v3223
    %v3232 = vadd.f32 %v186, %v3224
    %v3233 = vadd.f32 %v209, %v3225
    %v3234 = vadd.f32 %v232, %v3226
    %v3235 = vxor.u32 %v3231, 2147483648
    %v3236 = vmul.f32 %v3235, 1.442695
    %v3237 = vpow.pop %v3236
    %v3238 = vadd.f32 %v3237, 1.0
    %v3239 = vrcp.pop %v3238
    %v3240 = vmul.f32 %v3238, %v3239
    %v3241 = vsub.f32 1.0, %v3240
    %v3242 = vmul.f32 %v3239, %v3241
    %v3243 = vadd.f32 %v3239, %v3242
    %vm3244 = vweird.f32 %v3238
    %vm3245 = vweird.f32 %v3239
    %vm3246 = vmor %vm3244, %vm3245
    %v3247 = vsel %vm3246, %v3239, %v3243
    %v3248 = vand.u32 2147483647, %v3238
    %vm3249 = vcmp.eq.f32.partialorder %v3248, 8.507059e+37
    %v3250 = vand.u32 %v3238, 2147483648
    %v3251 = vor.u32 1.1754944e-38, %v3250
    %v3252 = vsel %vm3249, %v3251, %v3247
    %v3253 = vmul.f32 1.0, %v3252
    %v3254 = vxor.u32 %v3232, 2147483648
    %v3255 = vmul.f32 %v3254, 1.442695
    %v3256 = vpow.pop %v3255
    %v3257 = vadd.f32 %v3256, 1.0
    %v3258 = vrcp.pop %v3257
    %v3259 = vmul.f32 %v3257, %v3258
    %v3260 = vsub.f32 1.0, %v3259
    %v3261 = vmul.f32 %v3258, %v3260
    %v3262 = vadd.f32 %v3258, %v3261
    %vm3263 = vweird.f32 %v3257
    %vm3264 = vweird.f32 %v3258
    %vm3265 = vmor %vm3263, %vm3264
    %v3266 = vsel %vm3265, %v3258, %v3262
    %v3267 = vand.u32 2147483647, %v3257
    %vm3268 = vcmp.eq.f32.partialorder %v3267, 8.507059e+37
    %v3269 = vand.u32 %v3257, 2147483648
    %v3270 = vor.u32 1.1754944e-38, %v3269
    %v3271 = vsel %vm3268, %v3270, %v3266
    %v3272 = vmul.f32 1.0, %v3271
    %v3273 = vtanh.pop %v3233
    %v3274 = vxor.u32 %v3234, 2147483648
    %v3275 = vmul.f32 %v3274, 1.442695
    %v3276 = vpow.pop %v3275
    %v3277 = vadd.f32 %v3276, 1.0
    %v3278 = vrcp.pop %v3277
    %v3279 = vmul.f32 %v3277, %v3278
    %v3280 = vsub.f32 1.0, %v3279
    %v3281 = vmul.f32 %v3278, %v3280
    %v3282 = vadd.f32 %v3278, %v3281
    %vm3283 = vweird.f32 %v3277
    %vm3284 = vweird.f32 %v3278
    %vm3285 = vmor %vm3283, %vm3284
    %v3286 = vsel %vm3285, %v3278, %v3282
    %v3287 = vand.u32 2147483647, %v3277
    %vm3288 = vcmp.eq.f32.partialorder %v3287, 8.507059e+37
    %v3289 = vand.u32 %v3277, 2147483648
    %v3290 = vor.u32 1.1754944e-38, %v3289
    %v3291 = vsel %vm3288, %v3290, %v3286
    %v3292 = vmul.f32 1.0, %v3291
    %v3294 = vrot.slane %v2906, 6
    %v3296 = vmul.f32 %v3272, %v3294
    %v3297 = vmul.f32 %v3253, %v3273
    %v3298 = vadd.f32 %v3296, %v3297
    %v3299 = vtanh.pop %v3298
    %v3300 = vmul.f32 %v3292, %v3299
    %v3302 = vrot.slane %v3138, 2
    %v3304 = vrot.slane %v3300, 6
    %v3305 = vrot.slane %v3302, 6
    %3308 = vmatpush.msra.mxu0 %v358
    %3309 = vmatpush.msra.mxu0 %v354
    %3310 = vmatpush.msra.mxu0 %v350
    %3311 = vmatpush.msra.mxu0 %v346
    %3312 = vmatpush.msra.mxu0 %v342
    %3313 = vmatpush.msra.mxu0 %v338
    %3314 = vmatpush.msra.mxu0 %v334
    %3315 = vmatpush.msra.mxu0 %v330
    %3316 = vmatpush.msra.mxu0 %v326
    %3317 = vmatpush.msra.mxu0 %v322
    %3318 = vmatpush.msra.mxu0 %v318
    %3319 = vmatpush.msra.mxu0 %v314
    %3320 = vmatpush.msra.mxu0 %v310
    %3321 = vmatpush.msra.mxu0 %v306
    %3322 = vmatpush.msra.mxu0 %v302
    %3323 = vmatpush.msra.mxu0 %v298
    %3324 = vmatmul.f32.gmra.mxu0 %v3304
    %v3325 = vpop.f32.mrf.mxu0
    %v3326 = vadd.f32 %v575, %v3325
    %3327 = vdwg.mxu0
    %3328 = vmatpush.msra.mxu0 %v422
    %3329 = vmatpush.msra.mxu0 %v418
    %3330 = vmatpush.msra.mxu0 %v414
    %3331 = vmatpush.msra.mxu0 %v410
    %3332 = vmatpush.msra.mxu0 %v406
    %3333 = vmatpush.msra.mxu0 %v402
    %3334 = vmatpush.msra.mxu0 %v398
    %3335 = vmatpush.msra.mxu0 %v394
    %3336 = vmatpush.msra.mxu0 %v390
    %3337 = vmatpush.msra.mxu0 %v386
    %3338 = vmatpush.msra.mxu0 %v382
    %3339 = vmatpush.msra.mxu0 %v378
    %3340 = vmatpush.msra.mxu0 %v374
    %3341 = vmatpush.msra.mxu0 %v370
    %3342 = vmatpush.msra.mxu0 %v366
    %3343 = vmatpush.msra.mxu0 %v362
    %3344 = vmatmul.f32.gmra.mxu0 %v3305
    %v3345 = vpop.f32.mrf.mxu0
    %v3346 = vadd.f32 %v3326, %v3345
    %3347 = vdwg.mxu0
    %3348 = vmatpush.msra.mxu0 %v359
    %3349 = vmatpush.msra.mxu0 %v355
    %3350 = vmatpush.msra.mxu0 %v351
    %3351 = vmatpush.msra.mxu0 %v347
    %3352 = vmatpush.msra.mxu0 %v343
    %3353 = vmatpush.msra.mxu0 %v339
    %3354 = vmatpush.msra.mxu0 %v335
    %3355 = vmatpush.msra.mxu0 %v331
    %3356 = vmatpush.msra.mxu0 %v327
    %3357 = vmatpush.msra.mxu0 %v323
    %3358 = vmatpush.msra.mxu0 %v319
    %3359 = vmatpush.msra.mxu0 %v315
    %3360 = vmatpush.msra.mxu0 %v311
    %3361 = vmatpush.msra.mxu0 %v307
    %3362 = vmatpush.msra.mxu0 %v303
    %3363 = vmatpush.msra.mxu0 %v299
    %3364 = vmatmul.f32.gmra.mxu0 %v3304
    %v3365 = vpop.f32.mrf.mxu0
    %v3366 = vadd.f32 %v576, %v3365
    %3367 = vdwg.mxu0
    %3368 = vmatpush.msra.mxu0 %v423
    %3369 = vmatpush.msra.mxu0 %v419
    %3370 = vmatpush.msra.mxu0 %v415
    %3371 = vmatpush.msra.mxu0 %v411
    %3372 = vmatpush.msra.mxu0 %v407
    %3373 = vmatpush.msra.mxu0 %v403
    %3374 = vmatpush.msra.mxu0 %v399
    %3375 = vmatpush.msra.mxu0 %v395
    %3376 = vmatpush.msra.mxu0 %v391
    %3377 = vmatpush.msra.mxu0 %v387
    %3378 = vmatpush.msra.mxu0 %v383
    %3379 = vmatpush.msra.mxu0 %v379
    %3380 = vmatpush.msra.mxu0 %v375
    %3381 = vmatpush.msra.mxu0 %v371
    %3382 = vmatpush.msra.mxu0 %v367
    %3383 = vmatpush.msra.mxu0 %v363
    %3384 = vmatmul.f32.gmra.mxu0 %v3305
    %v3385 = vpop.f32.mrf.mxu0
    %v3386 = vadd.f32 %v3366, %v3385
    %3387 = vdwg.mxu0
    %3388 = vmatpush.msra.mxu0 %v360
    %3389 = vmatpush.msra.mxu0 %v356
    %3390 = vmatpush.msra.mxu0 %v352
    %3391 = vmatpush.msra.mxu0 %v348
    %3392 = vmatpush.msra.mxu0 %v344
    %3393 = vmatpush.msra.mxu0 %v340
    %3394 = vmatpush.msra.mxu0 %v336
    %3395 = vmatpush.msra.mxu0 %v332
    %3396 = vmatpush.msra.mxu0 %v328
    %3397 = vmatpush.msra.mxu0 %v324
    %3398 = vmatpush.msra.mxu0 %v320
    %3399 = vmatpush.msra.mxu0 %v316
    %3400 = vmatpush.msra.mxu0 %v312
    %3401 = vmatpush.msra.mxu0 %v308
    %3402 = vmatpush.msra.mxu0 %v304
    %3403 = vmatpush.msra.mxu0 %v300
    %3404 = vmatmul.f32.gmra.mxu0 %v3304
    %v3405 = vpop.f32.mrf.mxu0
    %v3406 = vadd.f32 %v577, %v3405
    %3407 = vdwg.mxu0
    %3408 = vmatpush.msra.mxu0 %v424
    %3409 = vmatpush.msra.mxu0 %v420
    %3410 = vmatpush.msra.mxu0 %v416
    %3411 = vmatpush.msra.mxu0 %v412
    %3412 = vmatpush.msra.mxu0 %v408
    %3413 = vmatpush.msra.mxu0 %v404
    %3414 = vmatpush.msra.mxu0 %v400
    %3415 = vmatpush.msra.mxu0 %v396
    %3416 = vmatpush.msra.mxu0 %v392
    %3417 = vmatpush.msra.mxu0 %v388
    %3418 = vmatpush.msra.mxu0 %v384
    %3419 = vmatpush.msra.mxu0 %v380
    %3420 = vmatpush.msra.mxu0 %v376
    %3421 = vmatpush.msra.mxu0 %v372
    %3422 = vmatpush.msra.mxu0 %v368
    %3423 = vmatpush.msra.mxu0 %v364
    %3424 = vmatmul.f32.gmra.mxu0 %v3305
    %v3425 = vpop.f32.mrf.mxu0
    %v3426 = vadd.f32 %v3406, %v3425
    %3427 = vdwg.mxu0
    %3428 = vmatpush.msra.mxu0 %v361
    %3429 = vmatpush.msra.mxu0 %v357
    %3430 = vmatpush.msra.mxu0 %v353
    %3431 = vmatpush.msra.mxu0 %v349
    %3432 = vmatpush.msra.mxu0 %v345
    %3433 = vmatpush.msra.mxu0 %v341
    %3434 = vmatpush.msra.mxu0 %v337
    %3435 = vmatpush.msra.mxu0 %v333
    %3436 = vmatpush.msra.mxu0 %v329
    %3437 = vmatpush.msra.mxu0 %v325
    %3438 = vmatpush.msra.mxu0 %v321
    %3439 = vmatpush.msra.mxu0 %v317
    %3440 = vmatpush.msra.mxu0 %v313
    %3441 = vmatpush.msra.mxu0 %v309
    %3442 = vmatpush.msra.mxu0 %v305
    %3443 = vmatpush.msra.mxu0 %v301
    %3444 = vmatmul.f32.gmra.mxu0 %v3304
    %v3445 = vpop.f32.mrf.mxu0
    %v3446 = vadd.f32 %v578, %v3445
    %3447 = vdwg.mxu0
    %3448 = vmatpush.msra.mxu0 %v425
    %3449 = vmatpush.msra.mxu0 %v421
    %3450 = vmatpush.msra.mxu0 %v417
    %3451 = vmatpush.msra.mxu0 %v413
    %3452 = vmatpush.msra.mxu0 %v409
    %3453 = vmatpush.msra.mxu0 %v405
    %3454 = vmatpush.msra.mxu0 %v401
    %3455 = vmatpush.msra.mxu0 %v397
    %3456 = vmatpush.msra.mxu0 %v393
    %3457 = vmatpush.msra.mxu0 %v389
    %3458 = vmatpush.msra.mxu0 %v385
    %3459 = vmatpush.msra.mxu0 %v381
    %3460 = vmatpush.msra.mxu0 %v377
    %3461 = vmatpush.msra.mxu0 %v373
    %3462 = vmatpush.msra.mxu0 %v369
    %3463 = vmatpush.msra.mxu0 %v365
    %3464 = vmatmul.f32.gmra.mxu0 %v3305
    %v3465 = vpop.f32.mrf.mxu0
    %v3466 = vadd.f32 %v3446, %v3465
    %3467 = vdwg.mxu0
    %v3468 = vxor.u32 %v3346, 2147483648
    %v3469 = vmul.f32 %v3468, 1.442695
    %v3470 = vpow.pop %v3469
    %v3471 = vadd.f32 %v3470, 1.0
    %v3472 = vrcp.pop %v3471
    %v3473 = vmul.f32 %v3471, %v3472
    %v3474 = vsub.f32 1.0, %v3473
    %v3475 = vmul.f32 %v3472, %v3474
    %v3476 = vadd.f32 %v3472, %v3475
    %vm3477 = vweird.f32 %v3471
    %vm3478 = vweird.f32 %v3472
    %vm3479 = vmor %vm3477, %vm3478
    %v3480 = vsel %vm3479, %v3472, %v3476
    %v3481 = vand.u32 2147483647, %v3471
    %vm3482 = vcmp.eq.f32.partialorder %v3481, 8.507059e+37
    %v3483 = vand.u32 %v3471, 2147483648
    %v3484 = vor.u32 1.1754944e-38, %v3483
    %v3485 = vsel %vm3482, %v3484, %v3480
    %v3486 = vmul.f32 1.0, %v3485
    %v3487 = vxor.u32 %v3386, 2147483648
    %v3488 = vmul.f32 %v3487, 1.442695
    %v3489 = vpow.pop %v3488
    %v3490 = vadd.f32 %v3489, 1.0
    %v3491 = vrcp.pop %v3490
    %v3492 = vmul.f32 %v3490, %v3491
    %v3493 = vsub.f32 1.0, %v3492
    %v3494 = vmul.f32 %v3491, %v3493
    %v3495 = vadd.f32 %v3491, %v3494
    %vm3496 = vweird.f32 %v3490
    %vm3497 = vweird.f32 %v3491
    %vm3498 = vmor %vm3496, %vm3497
    %v3499 = vsel %vm3498, %v3491, %v3495
    %v3500 = vand.u32 2147483647, %v3490
    %vm3501 = vcmp.eq.f32.partialorder %v3500, 8.507059e+37
    %v3502 = vand.u32 %v3490, 2147483648
    %v3503 = vor.u32 1.1754944e-38, %v3502
    %v3504 = vsel %vm3501, %v3503, %v3499
    %v3505 = vmul.f32 1.0, %v3504
    %v3506 = vtanh.pop %v3426
    %v3507 = vxor.u32 %v3466, 2147483648
    %v3508 = vmul.f32 %v3507, 1.442695
    %v3509 = vpow.pop %v3508
    %v3510 = vadd.f32 %v3509, 1.0
    %v3511 = vrcp.pop %v3510
    %v3512 = vmul.f32 %v3510, %v3511
    %v3513 = vsub.f32 1.0, %v3512
    %v3514 = vmul.f32 %v3511, %v3513
    %v3515 = vadd.f32 %v3511, %v3514
    %vm3516 = vweird.f32 %v3510
    %vm3517 = vweird.f32 %v3511
    %vm3518 = vmor %vm3516, %vm3517
    %v3519 = vsel %vm3518, %v3511, %v3515
    %v3520 = vand.u32 2147483647, %v3510
    %vm3521 = vcmp.eq.f32.partialorder %v3520, 8.507059e+37
    %v3522 = vand.u32 %v3510, 2147483648
    %v3523 = vor.u32 1.1754944e-38, %v3522
    %v3524 = vsel %vm3521, %v3523, %v3519
    %v3525 = vmul.f32 1.0, %v3524
    %v3526 = vmul.f32 %v3505, %v3136
    %v3527 = vmul.f32 %v3486, %v3506
    %v3528 = vadd.f32 %v3526, %v3527
    %v3529 = vtanh.pop %v3528
    %v3530 = vmul.f32 %v3525, %v3529
    %v3531 = vld [vmem:[%s6] sm:$0x1]
    %v3533 = vperm.slane %v3531, 0
    %v3535 = vmul.f32 %v3530, %v3533
    %vm3536 = vcmask 1041408
    %v3537 = vsel %vm3536, %v3535, 0.0
    %3538 = vadd.xlane.f32.xlu0 %v3537
    %v3539 = vpop.xlane.xlu0 %3538
    %v3540 = vld [vmem:[#allocation2] sm:$0x1]
    %v3542 = vperm.slane %v3540, 0
    %v3544 = vadd.f32 %v3539, %v3542
    %vm3545 = vcmask 1024
    %3546 = vst.msk [vmem:[%s8] sm:$0x3] %vm3545, %v3544
    // Predicated region
    $region54: #{tpu_custom_call.1} parent=1 // pred_check
      _
    $region55: #{tpu_custom_call.1} parent=1 // pred_check_branch
      %3548 = sbr.rel (0) target = $region57
    $region56: #{tpu_custom_call.1} parent=1 // pred_region
      _
    $region57: #{tpu_custom_call.1} parent=1 // pred_fallthru
      _
    // Predicated region
    $region58: #{tpu_custom_call.1} parent=1 // pred_check
      _
    $region59: #{tpu_custom_call.1} parent=1 // pred_check_branch
      %3550 = sbr.rel (0) target = $region61
    $region60: #{tpu_custom_call.1} parent=1 // pred_region
      _
    $region61: #{tpu_custom_call.1} parent=1 // pred_fallthru
      _
    %3551 = vsyncpa [#allocation4], 1
    %3552 = vsyncpa [#allocation6], 1
    %3553 = vsyncpa [#allocation9], 1

</llo_original>
